<compile_context>
chip_gen: v5e
topology: v5e:2x2
jax: 0.10.0
libtpu: 0.0.40
codegen_flags: <defaults>
</compile_context>

<pallas_src>
import numpy as np

import jax
import jax.numpy as jnp
from jax import lax
from jax.experimental import pallas as pl
from jax.experimental.pallas import tpu as pltpu


def _make_kernel(Wp):
    """Kernel factory; Wp = padded image width (static)."""

    def kernel(x_ref, m_ref, w1_ref, b1_ref, w2_ref, b2_ref, o_ref):
        # x_ref : (1, Pa, C) f32   padded pixel rows of one image (Pa = 8-aligned Hp*Wp)
        # m_ref : (Pa, 1)    f32   1.0 at interior pixels, 0.0 at halo/alignment rows
        # w*_ref: (9*C, C)   bf16  raw 3x3 weights, tap-major (ky*3+kx blocks of C rows)
        # b*_ref: (1, C)     f32
        # o_ref : (1, Pa, C) f32
        xf = x_ref[0]                       # (Pa, C) f32
        Pa = xf.shape[0]

        def taps(a):
            # Gather the 3x3 neighborhood of every padded pixel row with XLU sublane
            # rolls (f32 -> proven lowering), hierarchically:
            #   u: lane-concat of the dx = -1, 0, +1 shifts        -> (Pa, 3C)
            #   t: lane-concat of u shifted by dy = -1, 0, +1 rows -> (Pa, 9C)
            # Roll wrap / cross-image leakage only ever lands in halo/alignment rows,
            # which are masked (conv1) or sliced away in the wrapper (conv2).
            u = jnp.concatenate(
                [pltpu.roll(a, 1, axis=0), a, pltpu.roll(a, Pa - 1, axis=0)],
                axis=1)
            t = jnp.concatenate(
                [pltpu.roll(u, Wp, axis=0), u, pltpu.roll(u, Pa - Wp, axis=0)],
                axis=1)
            return t.astype(jnp.bfloat16)   # single cast -> bf16 MXU LHS

        # ---- conv1: ONE fused MXU matmul over all 9 taps, f32 accumulate.
        a1 = jnp.dot(taps(xf), w1_ref[...], preferred_element_type=jnp.float32)
        # Bias + ReLU, then zero halo/alignment rows: y is exactly conv2's padded input.
        y = jnp.maximum(a1 + b1_ref[...], 0.0) * m_ref[...]

        # ---- conv2: second fused matmul, + bias + f32 residual (the f32 input tile).
        a2 = jnp.dot(taps(y), w2_ref[...], preferred_element_type=jnp.float32)
        o_ref[0] = a2 + b2_ref[...] + xf

    return kernel


def pack_enhancement_block_params(w1, b1, w2, b2):
    """Host-side packing: HWIO (3,3,Cin,Cout) -> tap-major (9*Cin, Cout) bf16; biases (1,C) f32."""

    def pack_w(w):
        w = np.asarray(w, np.float32)
        kh, kw, ci, co = w.shape
        assert kh == 3 and kw == 3
        return jnp.asarray(w.reshape(kh * kw * ci, co), jnp.bfloat16)

    def pack_b(b):
        return jnp.asarray(np.asarray(b, np.float32).reshape(1, -1))

    return pack_w(w1), pack_b(b1), pack_w(w2), pack_b(b2)


@jax.jit
def enhancement_block_nhwc(x_nhwc, w1p, b1p, w2p, b2p):
    """x_nhwc: (N, H, W, C) f32; packed params from pack_enhancement_block_params."""
    N, H, W, C = x_nhwc.shape
    Hp, Wp = H + 2, W + 2
    P = Hp * Wp
    Pa = -(-P // 8) * 8                     # sublane-aligned padded-pixel row count

    # Zero halo pad + flatten pixels onto rows (the reshape is free / metadata only).
    xpad = jnp.pad(x_nhwc, ((0, 0), (1, 1), (1, 1), (0, 0)))
    xrows = xpad.reshape(N, P, C)
    if Pa != P:
        xrows = jnp.pad(xrows, ((0, 0), (0, Pa - P), (0, 0)))

    # Host-constant interior mask (1 at real pixels, 0 at halo / alignment rows).
    q = np.arange(Pa)
    interior = ((q < P) & (q // Wp >= 1) & (q // Wp <= H)
                & (q % Wp >= 1) & (q % Wp <= W))
    mask = jnp.asarray(interior.astype(np.float32).reshape(Pa, 1))

    grid_spec = pltpu.PrefetchScalarGridSpec(
        num_scalar_prefetch=0,
        grid=(N,),                                              # one image per step
        in_specs=[
            pl.BlockSpec((1, Pa, C), lambda n: (n, 0, 0)),      # padded pixel rows
            pl.BlockSpec((Pa, 1), lambda n: (0, 0)),            # interior mask
            pl.BlockSpec((9 * C, C), lambda n: (0, 0)),         # conv1 weights (raw)
            pl.BlockSpec((1, C), lambda n: (0, 0)),             # conv1 bias
            pl.BlockSpec((9 * C, C), lambda n: (0, 0)),         # conv2 weights (raw)
            pl.BlockSpec((1, C), lambda n: (0, 0)),             # conv2 bias
        ],
        out_specs=pl.BlockSpec((1, Pa, C), lambda n: (n, 0, 0)),
    )

    out_rows = pl.pallas_call(
        _make_kernel(Wp),
        out_shape=jax.ShapeDtypeStruct((N, Pa, C), jnp.float32),
        grid_spec=grid_spec,
        compiler_params=pltpu.CompilerParams(
            dimension_semantics=("parallel",)),   # batch images independent
    )(xrows, mask, w1p, b1p, w2p, b2p)

    # Strip halo/alignment rows back to NHWC (cheap XLA slice; fuses downstream).
    return out_rows[:, :P, :].reshape(N, Hp, Wp, C)[:, 1:1 + H, 1:1 + W, :]


@jax.jit
def enhancement_block_nchw(x_nchw, w1p, b1p, w2p, b2p):
    """PyTorch-convention entry point: NCHW in, NCHW out."""
    x_nhwc = jnp.transpose(x_nchw, (0, 2, 3, 1))
    y_nhwc = enhancement_block_nhwc(x_nhwc, w1p, b1p, w2p, b2p)
    return jnp.transpose(y_nhwc, (0, 3, 1, 2))


def _reference_nhwc(x_nhwc, w1, b1, w2, b2):
    """Pure-JAX f32 reference (lax conv) for correctness checking."""
    dn = lax.conv_dimension_numbers(x_nhwc.shape, w1.shape, ("NHWC", "HWIO", "NHWC"))
    y = lax.conv_general_dilated(x_nhwc, w1, (1, 1), "SAME",
                                 dimension_numbers=dn) + b1
    y = jnp.maximum(y, 0.0)
    y = lax.conv_general_dilated(y, w2, (1, 1), "SAME",
                                 dimension_numbers=dn) + b2
    return y + x_nhwc


if __name__ == "__main__":
    num_filters = 32     # matches nn.Conv2d(num_filters, num_filters, 3, padding=1)
    N, C, H, W = 2, num_filters, 16, 16

    key = jax.random.PRNGKey(0)
    k_x, k_w1, k_b1, k_w2, k_b2 = jax.random.split(key, 5)

    # Deterministic synthetic parameters (kaiming-ish scale), HWIO layout.
    fan_in = C * 3 * 3
    scale = 1.0 / np.sqrt(fan_in)
    w1 = jax.random.uniform(k_w1, (3, 3, C, C), jnp.float32, -scale, scale)
    b1 = jax.random.uniform(k_b1, (C,), jnp.float32, -scale, scale)
    w2 = jax.random.uniform(k_w2, (3, 3, C, C), jnp.float32, -scale, scale)
    b2 = jax.random.uniform(k_b2, (C,), jnp.float32, -scale, scale)

    # Input in PyTorch NCHW convention.
    x_nchw = jax.random.normal(k_x, (N, C, H, W), jnp.float32)

    params = pack_enhancement_block_params(w1, b1, w2, b2)
    out = jax.block_until_ready(enhancement_block_nchw(x_nchw, *params))

    # Correctness vs pure-JAX f32 reference.  bf16 MXU operands are intentional, so
    # use a ~1e-2-level tolerance (same precision profile as the previous version).
    x_nhwc = jnp.transpose(x_nchw, (0, 2, 3, 1))
    ref = jax.block_until_ready(_reference_nhwc(x_nhwc, w1, b1, w2, b2))
    ref_nchw = jnp.transpose(ref, (0, 3, 1, 2))
    np.testing.assert_allclose(np.asarray(out), np.asarray(ref_nchw),
                               rtol=2e-2, atol=2e-2)

    print("KERNEL_OK")
</pallas_src>

<mosaic_0001>
module attributes {stable_mosaic.version = 11 : i64} {
  func.func @kernel(%arg0: i32, %arg1: memref<1x328x32xf32, #tpu.memory_space<vmem>>, %arg2: memref<328x1xf32, #tpu.memory_space<vmem>>, %arg3: memref<288x32xbf16, #tpu.memory_space<vmem>>, %arg4: memref<1x32xf32, #tpu.memory_space<vmem>>, %arg5: memref<288x32xbf16, #tpu.memory_space<vmem>>, %arg6: memref<1x32xf32, #tpu.memory_space<vmem>>, %arg7: memref<1x328x32xf32, #tpu.memory_space<vmem>>) attributes {dimension_semantics = [#tpu.dimension_semantics<parallel>], iteration_bounds = array<i64: 2>, scalar_prefetch = 0 : i64, scratch_operands = 0 : i64, tpu.core_type = #tpu.core_type<tc>, window_params = [{transform_indices = @transform_0, window_bounds = array<i64: 1, 328, 32>}, {pipeline_mode = #tpu.pipeline_mode<synchronous>, transform_indices = @transform_1, window_bounds = array<i64: 328, 1>}, {pipeline_mode = #tpu.pipeline_mode<synchronous>, transform_indices = @transform_2, window_bounds = array<i64: 288, 32>}, {pipeline_mode = #tpu.pipeline_mode<synchronous>, transform_indices = @transform_3, window_bounds = array<i64: 1, 32>}, {pipeline_mode = #tpu.pipeline_mode<synchronous>, transform_indices = @transform_4, window_bounds = array<i64: 288, 32>}, {pipeline_mode = #tpu.pipeline_mode<synchronous>, transform_indices = @transform_5, window_bounds = array<i64: 1, 32>}, {transform_indices = @transform_6, window_bounds = array<i64: 1, 328, 32>}]} {
    %c0 = arith.constant 0 : index
    %c0_0 = arith.constant 0 : index
    %c0_1 = arith.constant 0 : index
    %0 = vector.load %arg1[%c0, %c0_0, %c0_1] : memref<1x328x32xf32, #tpu.memory_space<vmem>>, vector<1x328x32xf32>
    %1 = vector.shape_cast %0 : vector<1x328x32xf32> to vector<328x32xf32>
    %c1_i32 = arith.constant 1 : i32
    %2 = tpu.dynamic_rotate %1 by %c1_i32 dim 0 : vector<328x32xf32>, i32 -> vector<328x32xf32>
    %c327_i32 = arith.constant 327 : i32
    %3 = tpu.dynamic_rotate %1 by %c327_i32 dim 0 : vector<328x32xf32>, i32 -> vector<328x32xf32>
    %4 = tpu.concatenate %2, %1, %3 in 1 : vector<328x32xf32>, vector<328x32xf32>, vector<328x32xf32> -> vector<328x96xf32>
    %c18_i32 = arith.constant 18 : i32
    %5 = tpu.dynamic_rotate %4 by %c18_i32 dim 0 : vector<328x96xf32>, i32 -> vector<328x96xf32>
    %c310_i32 = arith.constant 310 : i32
    %6 = tpu.dynamic_rotate %4 by %c310_i32 dim 0 : vector<328x96xf32>, i32 -> vector<328x96xf32>
    %7 = tpu.concatenate %5, %4, %6 in 1 : vector<328x96xf32>, vector<328x96xf32>, vector<328x96xf32> -> vector<328x288xf32>
    %8 = arith.truncf %7 : vector<328x288xf32> to vector<328x288xbf16>
    %c0_2 = arith.constant 0 : index
    %c0_3 = arith.constant 0 : index
    %9 = vector.load %arg3[%c0_2, %c0_3] : memref<288x32xbf16, #tpu.memory_space<vmem>>, vector<288x32xbf16>
    %cst = arith.constant dense<0.000000e+00> : vector<328x32xf32>
    %10 = tpu.matmul %8, %9, %cst {dimension_numbers = #tpu.dot_dimension_numbers<[1], [0], [0], [1], [0, 0, 1, 1], [], []>} : vector<328x288xbf16>, vector<288x32xbf16>, vector<328x32xf32> -> vector<328x32xf32>
    %c0_4 = arith.constant 0 : index
    %c0_5 = arith.constant 0 : index
    %11 = vector.load %arg4[%c0_4, %c0_5] : memref<1x32xf32, #tpu.memory_space<vmem>>, vector<1x32xf32>
    %12 = vector.broadcast %11 : vector<1x32xf32> to vector<328x32xf32>
    %13 = arith.addf %10, %12 : vector<328x32xf32>
    %cst_6 = arith.constant 0.000000e+00 : f32
    %14 = vector.broadcast %cst_6 : f32 to vector<328x32xf32>
    %15 = arith.maximumf %13, %14 : vector<328x32xf32>
    %c0_7 = arith.constant 0 : index
    %c0_8 = arith.constant 0 : index
    %16 = vector.load %arg2[%c0_7, %c0_8] : memref<328x1xf32, #tpu.memory_space<vmem>>, vector<328x1xf32>
    %17 = vector.broadcast %16 : vector<328x1xf32> to vector<328x32xf32>
    %18 = arith.mulf %15, %17 : vector<328x32xf32>
    %c1_i32_9 = arith.constant 1 : i32
    %19 = tpu.dynamic_rotate %18 by %c1_i32_9 dim 0 : vector<328x32xf32>, i32 -> vector<328x32xf32>
    %c327_i32_10 = arith.constant 327 : i32
    %20 = tpu.dynamic_rotate %18 by %c327_i32_10 dim 0 : vector<328x32xf32>, i32 -> vector<328x32xf32>
    %21 = tpu.concatenate %19, %18, %20 in 1 : vector<328x32xf32>, vector<328x32xf32>, vector<328x32xf32> -> vector<328x96xf32>
    %c18_i32_11 = arith.constant 18 : i32
    %22 = tpu.dynamic_rotate %21 by %c18_i32_11 dim 0 : vector<328x96xf32>, i32 -> vector<328x96xf32>
    %c310_i32_12 = arith.constant 310 : i32
    %23 = tpu.dynamic_rotate %21 by %c310_i32_12 dim 0 : vector<328x96xf32>, i32 -> vector<328x96xf32>
    %24 = tpu.concatenate %22, %21, %23 in 1 : vector<328x96xf32>, vector<328x96xf32>, vector<328x96xf32> -> vector<328x288xf32>
    %25 = arith.truncf %24 : vector<328x288xf32> to vector<328x288xbf16>
    %c0_13 = arith.constant 0 : index
    %c0_14 = arith.constant 0 : index
    %26 = vector.load %arg5[%c0_13, %c0_14] : memref<288x32xbf16, #tpu.memory_space<vmem>>, vector<288x32xbf16>
    %cst_15 = arith.constant dense<0.000000e+00> : vector<328x32xf32>
    %27 = tpu.matmul %25, %26, %cst_15 {dimension_numbers = #tpu.dot_dimension_numbers<[1], [0], [0], [1], [0, 0, 1, 1], [], []>} : vector<328x288xbf16>, vector<288x32xbf16>, vector<328x32xf32> -> vector<328x32xf32>
    %c0_16 = arith.constant 0 : index
    %c0_17 = arith.constant 0 : index
    %28 = vector.load %arg6[%c0_16, %c0_17] : memref<1x32xf32, #tpu.memory_space<vmem>>, vector<1x32xf32>
    %29 = vector.broadcast %28 : vector<1x32xf32> to vector<328x32xf32>
    %30 = arith.addf %27, %29 : vector<328x32xf32>
    %31 = arith.addf %30, %1 : vector<328x32xf32>
    %c0_18 = arith.constant 0 : index
    %c0_19 = arith.constant 0 : index
    %c0_20 = arith.constant 0 : index
    %32 = vector.load %arg7[%c0_18, %c0_19, %c0_20] : memref<1x328x32xf32, #tpu.memory_space<vmem>>, vector<1x328x32xf32>
    %33 = vector.shape_cast %32 : vector<1x328x32xf32> to vector<328x32xf32>
    %34 = vector.shape_cast %31 : vector<328x32xf32> to vector<1x328x32xf32>
    tpu.vector_store %arg7[%c0_18, %c0_19, %c0_20], %34 {strides = array<i32>} : memref<1x328x32xf32, #tpu.memory_space<vmem>>, vector<1x328x32xf32>,
    return
  }
  func.func @transform_0(%arg0: i32) -> (i32, i32, i32) {
    %c0_i32 = arith.constant 0 : i32
    %c0_i32_0 = arith.constant 0 : i32
    %c0_i32_1 = arith.constant 0 : i32
    return %arg0, %c0_i32, %c0_i32_0 : i32, i32, i32
  }
  func.func @transform_1(%arg0: i32) -> (i32, i32) {
    %c0_i32 = arith.constant 0 : i32
    %c0_i32_0 = arith.constant 0 : i32
    %c0_i32_1 = arith.constant 0 : i32
    return %c0_i32, %c0_i32_0 : i32, i32
  }
  func.func @transform_2(%arg0: i32) -> (i32, i32) {
    %c0_i32 = arith.constant 0 : i32
    %c0_i32_0 = arith.constant 0 : i32
    %c0_i32_1 = arith.constant 0 : i32
    return %c0_i32, %c0_i32_0 : i32, i32
  }
  func.func @transform_3(%arg0: i32) -> (i32, i32) {
    %c0_i32 = arith.constant 0 : i32
    %c0_i32_0 = arith.constant 0 : i32
    %c0_i32_1 = arith.constant 0 : i32
    return %c0_i32, %c0_i32_0 : i32, i32
  }
  func.func @transform_4(%arg0: i32) -> (i32, i32) {
    %c0_i32 = arith.constant 0 : i32
    %c0_i32_0 = arith.constant 0 : i32
    %c0_i32_1 = arith.constant 0 : i32
    return %c0_i32, %c0_i32_0 : i32, i32
  }
  func.func @transform_5(%arg0: i32) -> (i32, i32) {
    %c0_i32 = arith.constant 0 : i32
    %c0_i32_0 = arith.constant 0 : i32
    %c0_i32_1 = arith.constant 0 : i32
    return %c0_i32, %c0_i32_0 : i32, i32
  }
  func.func @transform_6(%arg0: i32) -> (i32, i32, i32) {
    %c0_i32 = arith.constant 0 : i32
    %c0_i32_0 = arith.constant 0 : i32
    %c0_i32_1 = arith.constant 0 : i32
    return %arg0, %c0_i32, %c0_i32_0 : i32, i32, i32
  }
}

</mosaic_0001>

<llo_original>
// kernel: enhancement_block_nhwc.1
$region0: #{enhancement_block_nhwc.1}
  #allocation0 [shape = 'u32[]', space=smem, size = 0x4, offset = 0x4, fixed_abs, tag = 'smem constant byte address 0x4 - core index']
  #allocation1 [shape = 'u32[72,128]{1,0:T(1,128)}', space=vmem, size = 0x9000, scoped, tag = 'internal scratch']
  %s0 = inlined_call_operand.vmem [shape: f32[2,328,32], index: 0, kind: input, shape index: {}]
  %s1 = inlined_call_operand.vmem [shape: f32[328,1], index: 1, kind: input, shape index: {}]
  %s2 = inlined_call_operand.vmem [shape: bf16[288,32], index: 2, kind: input, shape index: {}]
  %s3 = inlined_call_operand.vmem [shape: f32[1,32], index: 3, kind: input, shape index: {}]
  %s4 = inlined_call_operand.vmem [shape: bf16[288,32], index: 4, kind: input, shape index: {}]
  %s5 = inlined_call_operand.vmem [shape: f32[1,32], index: 5, kind: input, shape index: {}]
  %s6 = inlined_call_operand.vmem [shape: f32[2,328,32], index: 6, kind: output, shape index: {}]
  %s7 = sld [smem:[#allocation0]]
  $region57: #{enhancement_block_nhwc.1} parent=0
    _
  %s9 = ssub.s32 1, %s7
  %s10 = scalar_select 0, %s9, %s7
  loop: start=0, step=1, limit=4
  $region2: #{enhancement_block_nhwc.1} parent=0 // loop_pre_header
    _
  $region3: #{enhancement_block_nhwc.1} parent=0 // loop_header
    %s12 = sphi 0, %s16
    %p13 = scmp.ge.s32.totalorder %s12, 4
    %s22 = sphi 0, %s24
    %s25 = sphi 0, %s22
    %s26 = sphi 0, %s25
    %s42 = sphi 0, %s26
    %s46 = sphi 0, %s46
    %s48 = sphi 0, %s46
    %s49 = sphi 0, %s48
    %s63 = sphi 0, %s49
    %s67 = sphi 0, %s67
    %s69 = sphi 0, %s67
    %s70 = sphi 0, %s69
    %s84 = sphi 0, %s70
    %s88 = sphi 0, %s88
    %s90 = sphi 0, %s88
    %s91 = sphi 0, %s90
    %s105 = sphi 0, %s91
    %s109 = sphi 0, %s109
    %s111 = sphi 0, %s109
    %s112 = sphi 0, %s111
    %s126 = sphi 0, %s112
    %s130 = sphi 0, %s130
    %s132 = sphi 0, %s130
    %s133 = sphi 0, %s132
    %s147 = sphi 0, %s133
    %s153 = sphi 0, %s155
    %s156 = sphi 0, %s153
    %s157 = sphi 0, %s156
    %s173 = sphi 0, %s157
  $region4: #{enhancement_block_nhwc.1} parent=0 // loop_header_branch
    %15 = sbr.rel (%p13) target = $region8
  $region5: #{enhancement_block_nhwc.1} parent=0 // loop_body
    %s17 = ssub.s32 %s12, 1
    %s18 = ssub.s32 %s12, 2
    %s19 = sadd.s32 %s12, 1
    %s20 = ssub.s32 %s12, %s19
    %p21 = scmp.eq.s32.totalorder %s20, 0
    %s23 = sadd.s32 %s22, 1
    %s24 = scalar_select %p21, %s22, %s23
    %p27 = pneg %p21
    %p28 = scmp.eq.s32.totalorder %s12, 1
    %p29 = por %p27, %p28
    %p30 = scmp.ne.s32.totalorder %s22, %s25
    %p31 = scmp.eq.s32.totalorder %s12, 0
    %p32 = por %p30, %p31
    %p33 = scmp.ne.s32.totalorder %s22, %s25
    %p34 = scmp.eq.s32.totalorder %s17, 1
    %p35 = por %p33, %p34
    %p36 = scmp.ne.s32.totalorder %s25, %s26
    %p37 = scmp.eq.s32.totalorder %s17, 0
    %p38 = por %p36, %p37
    %p39 = scmp.ne.s32.totalorder %s25, %s26
    %p40 = scmp.eq.s32.totalorder %s18, 1
    %p41 = por %p39, %p40
    %p43 = scmp.ne.s32.totalorder %s26, %s42
    %p44 = scmp.eq.s32.totalorder %s18, 0
    %p45 = por %p43, %p44
    %s47 = sadd.s32 %s46, 1
    %p50 = scmp.eq.s32.totalorder %s12, 1
    %p51 = scmp.ne.s32.totalorder %s46, %s48
    %p52 = scmp.eq.s32.totalorder %s12, 0
    %p53 = por %p51, %p52
    %p54 = scmp.ne.s32.totalorder %s46, %s48
    %p55 = scmp.eq.s32.totalorder %s17, 1
    %p56 = por %p54, %p55
    %p57 = scmp.ne.s32.totalorder %s48, %s49
    %p58 = scmp.eq.s32.totalorder %s17, 0
    %p59 = por %p57, %p58
    %p60 = scmp.ne.s32.totalorder %s48, %s49
    %p61 = scmp.eq.s32.totalorder %s18, 1
    %p62 = por %p60, %p61
    %p64 = scmp.ne.s32.totalorder %s49, %s63
    %p65 = scmp.eq.s32.totalorder %s18, 0
    %p66 = por %p64, %p65
    %s68 = sadd.s32 %s67, 1
    %p71 = scmp.eq.s32.totalorder %s12, 1
    %p72 = scmp.ne.s32.totalorder %s67, %s69
    %p73 = scmp.eq.s32.totalorder %s12, 0
    %p74 = por %p72, %p73
    %p75 = scmp.ne.s32.totalorder %s67, %s69
    %p76 = scmp.eq.s32.totalorder %s17, 1
    %p77 = por %p75, %p76
    %p78 = scmp.ne.s32.totalorder %s69, %s70
    %p79 = scmp.eq.s32.totalorder %s17, 0
    %p80 = por %p78, %p79
    %p81 = scmp.ne.s32.totalorder %s69, %s70
    %p82 = scmp.eq.s32.totalorder %s18, 1
    %p83 = por %p81, %p82
    %p85 = scmp.ne.s32.totalorder %s70, %s84
    %p86 = scmp.eq.s32.totalorder %s18, 0
    %p87 = por %p85, %p86
    %s89 = sadd.s32 %s88, 1
    %p92 = scmp.eq.s32.totalorder %s12, 1
    %p93 = scmp.ne.s32.totalorder %s88, %s90
    %p94 = scmp.eq.s32.totalorder %s12, 0
    %p95 = por %p93, %p94
    %p96 = scmp.ne.s32.totalorder %s88, %s90
    %p97 = scmp.eq.s32.totalorder %s17, 1
    %p98 = por %p96, %p97
    %p99 = scmp.ne.s32.totalorder %s90, %s91
    %p100 = scmp.eq.s32.totalorder %s17, 0
    %p101 = por %p99, %p100
    %p102 = scmp.ne.s32.totalorder %s90, %s91
    %p103 = scmp.eq.s32.totalorder %s18, 1
    %p104 = por %p102, %p103
    %p106 = scmp.ne.s32.totalorder %s91, %s105
    %p107 = scmp.eq.s32.totalorder %s18, 0
    %p108 = por %p106, %p107
    %s110 = sadd.s32 %s109, 1
    %p113 = scmp.eq.s32.totalorder %s12, 1
    %p114 = scmp.ne.s32.totalorder %s109, %s111
    %p115 = scmp.eq.s32.totalorder %s12, 0
    %p116 = por %p114, %p115
    %p117 = scmp.ne.s32.totalorder %s109, %s111
    %p118 = scmp.eq.s32.totalorder %s17, 1
    %p119 = por %p117, %p118
    %p120 = scmp.ne.s32.totalorder %s111, %s112
    %p121 = scmp.eq.s32.totalorder %s17, 0
    %p122 = por %p120, %p121
    %p123 = scmp.ne.s32.totalorder %s111, %s112
    %p124 = scmp.eq.s32.totalorder %s18, 1
    %p125 = por %p123, %p124
    %p127 = scmp.ne.s32.totalorder %s112, %s126
    %p128 = scmp.eq.s32.totalorder %s18, 0
    %p129 = por %p127, %p128
    %s131 = sadd.s32 %s130, 1
    %p134 = scmp.eq.s32.totalorder %s12, 1
    %p135 = scmp.ne.s32.totalorder %s130, %s132
    %p136 = scmp.eq.s32.totalorder %s12, 0
    %p137 = por %p135, %p136
    %p138 = scmp.ne.s32.totalorder %s130, %s132
    %p139 = scmp.eq.s32.totalorder %s17, 1
    %p140 = por %p138, %p139
    %p141 = scmp.ne.s32.totalorder %s132, %s133
    %p142 = scmp.eq.s32.totalorder %s17, 0
    %p143 = por %p141, %p142
    %p144 = scmp.ne.s32.totalorder %s132, %s133
    %p145 = scmp.eq.s32.totalorder %s18, 1
    %p146 = por %p144, %p145
    %p148 = scmp.ne.s32.totalorder %s133, %s147
    %p149 = scmp.eq.s32.totalorder %s18, 0
    %p150 = por %p148, %p149
    %s151 = ssub.s32 %s12, %s19
    %p152 = scmp.eq.s32.totalorder %s151, 0
    %s154 = sadd.s32 %s153, 1
    %s155 = scalar_select %p152, %s153, %s154
    %p158 = pneg %p152
    %p159 = scmp.eq.s32.totalorder %s12, 1
    %p160 = por %p158, %p159
    %p161 = scmp.ne.s32.totalorder %s153, %s156
    %p162 = scmp.eq.s32.totalorder %s12, 0
    %p163 = por %p161, %p162
    %p164 = scmp.ne.s32.totalorder %s153, %s156
    %p165 = scmp.eq.s32.totalorder %s17, 1
    %p166 = por %p164, %p165
    %p167 = scmp.ne.s32.totalorder %s156, %s157
    %p168 = scmp.eq.s32.totalorder %s17, 0
    %p169 = por %p167, %p168
    %p170 = scmp.ne.s32.totalorder %s156, %s157
    %p171 = scmp.eq.s32.totalorder %s18, 1
    %p172 = por %p170, %p171
    %p174 = scmp.ne.s32.totalorder %s157, %s173
    %p175 = scmp.eq.s32.totalorder %s18, 0
    %p176 = por %p174, %p175
    %p177 = scmp.le.s32.totalorder 1, %s12
    %p178 = scmp.lt.s32.totalorder %s12, 3
    %p179 = pnand %p177, %p178
    %p180 = pneg %p179
    // Predicated region
    $region9: #{enhancement_block_nhwc.1} parent=5 // pred_check
      _
    $region10: #{enhancement_block_nhwc.1} parent=5 // pred_check_branch
      %182 = sbr.rel (%p179) target = $region12
    $region11: #{enhancement_block_nhwc.1} parent=5 // pred_region
      %s183 = ssub.s32 %s12, 1
      // Predicated region
      $region13: #{enhancement_block_nhwc.1} parent=11 // pred_check
        %p184 = pneg %p59
      $region14: #{enhancement_block_nhwc.1} parent=11 // pred_check_branch
        %186 = sbr.rel (%p184) target = $region16
      $region15: #{enhancement_block_nhwc.1} parent=11 // pred_region
        _
      $region16: #{enhancement_block_nhwc.1} parent=11 // pred_fallthru
        _
      // Predicated region
      $region17: #{enhancement_block_nhwc.1} parent=11 // pred_check
        %p187 = pneg %p80
      $region18: #{enhancement_block_nhwc.1} parent=11 // pred_check_branch
        %189 = sbr.rel (%p187) target = $region20
      $region19: #{enhancement_block_nhwc.1} parent=11 // pred_region
        _
      $region20: #{enhancement_block_nhwc.1} parent=11 // pred_fallthru
        _
      // Predicated region
      $region21: #{enhancement_block_nhwc.1} parent=11 // pred_check
        %p190 = pneg %p101
      $region22: #{enhancement_block_nhwc.1} parent=11 // pred_check_branch
        %192 = sbr.rel (%p190) target = $region24
      $region23: #{enhancement_block_nhwc.1} parent=11 // pred_region
        _
      $region24: #{enhancement_block_nhwc.1} parent=11 // pred_fallthru
        _
      // Predicated region
      $region25: #{enhancement_block_nhwc.1} parent=11 // pred_check
        %p193 = pneg %p122
      $region26: #{enhancement_block_nhwc.1} parent=11 // pred_check_branch
        %195 = sbr.rel (%p193) target = $region28
      $region27: #{enhancement_block_nhwc.1} parent=11 // pred_region
        _
      $region28: #{enhancement_block_nhwc.1} parent=11 // pred_fallthru
        _
      // Predicated region
      $region29: #{enhancement_block_nhwc.1} parent=11 // pred_check
        %p196 = pneg %p143
      $region30: #{enhancement_block_nhwc.1} parent=11 // pred_check_branch
        %198 = sbr.rel (%p196) target = $region32
      $region31: #{enhancement_block_nhwc.1} parent=11 // pred_region
        _
      $region32: #{enhancement_block_nhwc.1} parent=11 // pred_fallthru
        _
    $region12: #{enhancement_block_nhwc.1} parent=5 // pred_fallthru
      _
    %p199 = scmp.lt.s32.totalorder %s12, 2
    // Predicated region
    $region33: #{enhancement_block_nhwc.1} parent=5 // pred_check
      %p200 = pneg %p199
    $region34: #{enhancement_block_nhwc.1} parent=5 // pred_check_branch
      %202 = sbr.rel (%p200) target = $region36
    $region35: #{enhancement_block_nhwc.1} parent=5 // pred_region
      // Predicated region
      $region37: #{enhancement_block_nhwc.1} parent=35 // pred_check
        %p203 = pneg %p32
      $region38: #{enhancement_block_nhwc.1} parent=35 // pred_check_branch
        %205 = sbr.rel (%p203) target = $region40
      $region39: #{enhancement_block_nhwc.1} parent=35 // pred_region
        %p206 = scmp.lt.s32.totalorder %s12, 1
        %s207 = scalar_select %p206, %s12, 1
        %s208 = smul.addr %s207, 41
        %s209 = smul.addr %s208, 8
        %s210 = scalar_lea.vmem %s0, %s209
      $region40: #{enhancement_block_nhwc.1} parent=35 // pred_fallthru
        _
    $region36: #{enhancement_block_nhwc.1} parent=5 // pred_fallthru
      _
    %p211 = scmp.le.s32.totalorder 1, %s12
    %p212 = scmp.lt.s32.totalorder %s12, 3
    %p213 = pnand %p211, %p212
    %p214 = pneg %p213
    // Predicated region
    $region41: #{enhancement_block_nhwc.1} parent=5 // pred_check
      _
    $region42: #{enhancement_block_nhwc.1} parent=5 // pred_check_branch
      %216 = sbr.rel (%p213) target = $region44
    $region43: #{enhancement_block_nhwc.1} parent=5 // pred_region
      %s217 = ssub.s32 %s12, 1
      %p218 = scmp.lt.s32.totalorder %s17, 1
      %s219 = scalar_select %p218, %s17, 1
      %s220 = smul.addr %s219, 41
      %s221 = smul.addr %s220, 8
      %s222 = scalar_lea.vmem %s0, %s221
      %p223 = pneg %p38
      %p224 = pneg %p35
      %p225 = pneg %p59
      %p226 = pneg %p56
      %p227 = pneg %p80
      %p228 = pneg %p77
      %p229 = pneg %p101
      %p230 = pneg %p98
      %p231 = pneg %p122
      %p232 = pneg %p119
      %p233 = pneg %p143
      %p234 = pneg %p140
      %p235 = pneg %p169
      %p236 = pneg %p166
      %p237 = scmp.lt.s32.totalorder %s17, 1
      %s238 = scalar_select %p237, %s17, 1
      %s239 = smul.addr %s238, 41
      %s240 = smul.addr %s239, 8
      %s241 = scalar_lea.vmem %s6, %s240
      %p242 = scmp.lt.s32.totalorder %s17, 1
      %s243 = scalar_select %p242, %s17, 1
      %s244 = smul.addr %s243, 41
      %s245 = smul.addr %s244, 8
      %s246 = scalar_lea.vmem %s0, %s245
      %p247 = scmp.lt.s32.totalorder %s17, 1
      %s248 = scalar_select %p247, %s17, 1
      %s249 = smul.addr %s248, 41
      %s250 = smul.addr %s249, 8
      %s251 = scalar_lea.vmem %s6, %s250
      %v253 = vld [vmem:[%s246] sm:$0xff]
      %v254 = vld [vmem:[%s246 + $0x8] sm:$0xff]
      %v255 = vld [vmem:[%s246 + $0x10] sm:$0xff]
      %v256 = vld [vmem:[%s246 + $0x18] sm:$0xff]
      %v257 = vld [vmem:[%s246 + $0x20] sm:$0xff]
      %v258 = vld [vmem:[%s246 + $0x28] sm:$0xff]
      %v259 = vld [vmem:[%s246 + $0x30] sm:$0xff]
      %v260 = vld [vmem:[%s246 + $0x38] sm:$0xff]
      %v261 = vld [vmem:[%s246 + $0x40] sm:$0xff]
      %v262 = vld [vmem:[%s246 + $0x48] sm:$0xff]
      %v263 = vld [vmem:[%s246 + $0x50] sm:$0xff]
      %v264 = vld [vmem:[%s246 + $0x58] sm:$0xff]
      %v265 = vld [vmem:[%s246 + $0x60] sm:$0xff]
      %v266 = vld [vmem:[%s246 + $0x68] sm:$0xff]
      %v267 = vld [vmem:[%s246 + $0x70] sm:$0xff]
      %v268 = vld [vmem:[%s246 + $0x78] sm:$0xff]
      %v269 = vld [vmem:[%s246 + $0x80] sm:$0xff]
      %v270 = vld [vmem:[%s246 + $0x88] sm:$0xff]
      %v271 = vld [vmem:[%s246 + $0x90] sm:$0xff]
      %v272 = vld [vmem:[%s246 + $0x98] sm:$0xff]
      %v273 = vld [vmem:[%s246 + $0xa0] sm:$0xff]
      %v274 = vld [vmem:[%s246 + $0xa8] sm:$0xff]
      %v275 = vld [vmem:[%s246 + $0xb0] sm:$0xff]
      %v276 = vld [vmem:[%s246 + $0xb8] sm:$0xff]
      %v277 = vld [vmem:[%s246 + $0xc0] sm:$0xff]
      %v278 = vld [vmem:[%s246 + $0xc8] sm:$0xff]
      %v279 = vld [vmem:[%s246 + $0xd0] sm:$0xff]
      %v280 = vld [vmem:[%s246 + $0xd8] sm:$0xff]
      %v281 = vld [vmem:[%s246 + $0xe0] sm:$0xff]
      %v282 = vld [vmem:[%s246 + $0xe8] sm:$0xff]
      %v283 = vld [vmem:[%s246 + $0xf0] sm:$0xff]
      %v284 = vld [vmem:[%s246 + $0xf8] sm:$0xff]
      %v285 = vld [vmem:[%s246 + $0x100] sm:$0xff]
      %v286 = vld [vmem:[%s246 + $0x108] sm:$0xff]
      %v287 = vld [vmem:[%s246 + $0x110] sm:$0xff]
      %v288 = vld [vmem:[%s246 + $0x118] sm:$0xff]
      %v289 = vld [vmem:[%s246 + $0x120] sm:$0xff]
      %v290 = vld [vmem:[%s246 + $0x128] sm:$0xff]
      %v291 = vld [vmem:[%s246 + $0x130] sm:$0xff]
      %v292 = vld [vmem:[%s246 + $0x138] sm:$0xff]
      %v293 = vld [vmem:[%s246 + $0x140] sm:$0xff]
      %v294 = vrot.slane %v253, 7
      %v295 = vrot.slane %v254, 7
      %v296 = vrot.slane %v255, 7
      %v297 = vrot.slane %v256, 7
      %v298 = vrot.slane %v257, 7
      %v299 = vrot.slane %v258, 7
      %v300 = vrot.slane %v259, 7
      %v301 = vrot.slane %v260, 7
      %v302 = vrot.slane %v261, 7
      %v303 = vrot.slane %v262, 7
      %v304 = vrot.slane %v263, 7
      %v305 = vrot.slane %v264, 7
      %v306 = vrot.slane %v265, 7
      %v307 = vrot.slane %v266, 7
      %v308 = vrot.slane %v267, 7
      %v309 = vrot.slane %v268, 7
      %v310 = vrot.slane %v269, 7
      %v311 = vrot.slane %v270, 7
      %v312 = vrot.slane %v271, 7
      %v313 = vrot.slane %v272, 7
      %v314 = vrot.slane %v273, 7
      %v315 = vrot.slane %v274, 7
      %v316 = vrot.slane %v275, 7
      %v317 = vrot.slane %v276, 7
      %v318 = vrot.slane %v277, 7
      %v319 = vrot.slane %v278, 7
      %v320 = vrot.slane %v279, 7
      %v321 = vrot.slane %v280, 7
      %v322 = vrot.slane %v281, 7
      %v323 = vrot.slane %v282, 7
      %v324 = vrot.slane %v283, 7
      %v325 = vrot.slane %v284, 7
      %v326 = vrot.slane %v285, 7
      %v327 = vrot.slane %v286, 7
      %v328 = vrot.slane %v287, 7
      %v329 = vrot.slane %v288, 7
      %v330 = vrot.slane %v289, 7
      %v331 = vrot.slane %v290, 7
      %v332 = vrot.slane %v291, 7
      %v333 = vrot.slane %v292, 7
      %v334 = vrot.slane %v293, 7
      %v335 = vlaneseq
      %v336 = vshrl.u32 %v335, 7
      %vm337 = vcmp.lt.s32.totalorder %v336, 1
      %v338 = vsel %vm337, %v333, %v334
      %v339 = vsel %vm337, %v332, %v333
      %v340 = vsel %vm337, %v331, %v332
      %v341 = vsel %vm337, %v330, %v331
      %v342 = vsel %vm337, %v329, %v330
      %v343 = vsel %vm337, %v328, %v329
      %v344 = vsel %vm337, %v327, %v328
      %v345 = vsel %vm337, %v326, %v327
      %v346 = vsel %vm337, %v325, %v326
      %v347 = vsel %vm337, %v324, %v325
      %v348 = vsel %vm337, %v323, %v324
      %v349 = vsel %vm337, %v322, %v323
      %v350 = vsel %vm337, %v321, %v322
      %v351 = vsel %vm337, %v320, %v321
      %v352 = vsel %vm337, %v319, %v320
      %v353 = vsel %vm337, %v318, %v319
      %v354 = vsel %vm337, %v317, %v318
      %v355 = vsel %vm337, %v316, %v317
      %v356 = vsel %vm337, %v315, %v316
      %v357 = vsel %vm337, %v314, %v315
      %v358 = vsel %vm337, %v313, %v314
      %v359 = vsel %vm337, %v312, %v313
      %v360 = vsel %vm337, %v311, %v312
      %v361 = vsel %vm337, %v310, %v311
      %v362 = vsel %vm337, %v309, %v310
      %v363 = vsel %vm337, %v308, %v309
      %v364 = vsel %vm337, %v307, %v308
      %v365 = vsel %vm337, %v306, %v307
      %v366 = vsel %vm337, %v305, %v306
      %v367 = vsel %vm337, %v304, %v305
      %v368 = vsel %vm337, %v303, %v304
      %v369 = vsel %vm337, %v302, %v303
      %v370 = vsel %vm337, %v301, %v302
      %v371 = vsel %vm337, %v300, %v301
      %v372 = vsel %vm337, %v299, %v300
      %v373 = vsel %vm337, %v298, %v299
      %v374 = vsel %vm337, %v297, %v298
      %v375 = vsel %vm337, %v296, %v297
      %v376 = vsel %vm337, %v295, %v296
      %v377 = vsel %vm337, %v294, %v295
      %v378 = vsel %vm337, %v334, %v294
      %v379 = vrot.slane %v253, 1
      %v380 = vrot.slane %v254, 1
      %v381 = vrot.slane %v255, 1
      %v382 = vrot.slane %v256, 1
      %v383 = vrot.slane %v257, 1
      %v384 = vrot.slane %v258, 1
      %v385 = vrot.slane %v259, 1
      %v386 = vrot.slane %v260, 1
      %v387 = vrot.slane %v261, 1
      %v388 = vrot.slane %v262, 1
      %v389 = vrot.slane %v263, 1
      %v390 = vrot.slane %v264, 1
      %v391 = vrot.slane %v265, 1
      %v392 = vrot.slane %v266, 1
      %v393 = vrot.slane %v267, 1
      %v394 = vrot.slane %v268, 1
      %v395 = vrot.slane %v269, 1
      %v396 = vrot.slane %v270, 1
      %v397 = vrot.slane %v271, 1
      %v398 = vrot.slane %v272, 1
      %v399 = vrot.slane %v273, 1
      %v400 = vrot.slane %v274, 1
      %v401 = vrot.slane %v275, 1
      %v402 = vrot.slane %v276, 1
      %v403 = vrot.slane %v277, 1
      %v404 = vrot.slane %v278, 1
      %v405 = vrot.slane %v279, 1
      %v406 = vrot.slane %v280, 1
      %v407 = vrot.slane %v281, 1
      %v408 = vrot.slane %v282, 1
      %v409 = vrot.slane %v283, 1
      %v410 = vrot.slane %v284, 1
      %v411 = vrot.slane %v285, 1
      %v412 = vrot.slane %v286, 1
      %v413 = vrot.slane %v287, 1
      %v414 = vrot.slane %v288, 1
      %v415 = vrot.slane %v289, 1
      %v416 = vrot.slane %v290, 1
      %v417 = vrot.slane %v291, 1
      %v418 = vrot.slane %v292, 1
      %v419 = vrot.slane %v293, 1
      %vm420 = vcmp.lt.s32.totalorder %v336, 7
      %v421 = vsel %vm420, %v418, %v419
      %v422 = vsel %vm420, %v417, %v418
      %v423 = vsel %vm420, %v416, %v417
      %v424 = vsel %vm420, %v415, %v416
      %v425 = vsel %vm420, %v414, %v415
      %v426 = vsel %vm420, %v413, %v414
      %v427 = vsel %vm420, %v412, %v413
      %v428 = vsel %vm420, %v411, %v412
      %v429 = vsel %vm420, %v410, %v411
      %v430 = vsel %vm420, %v409, %v410
      %v431 = vsel %vm420, %v408, %v409
      %v432 = vsel %vm420, %v407, %v408
      %v433 = vsel %vm420, %v406, %v407
      %v434 = vsel %vm420, %v405, %v406
      %v435 = vsel %vm420, %v404, %v405
      %v436 = vsel %vm420, %v403, %v404
      %v437 = vsel %vm420, %v402, %v403
      %v438 = vsel %vm420, %v401, %v402
      %v439 = vsel %vm420, %v400, %v401
      %v440 = vsel %vm420, %v399, %v400
      %v441 = vsel %vm420, %v398, %v399
      %v442 = vsel %vm420, %v397, %v398
      %v443 = vsel %vm420, %v396, %v397
      %v444 = vsel %vm420, %v395, %v396
      %v445 = vsel %vm420, %v394, %v395
      %v446 = vsel %vm420, %v393, %v394
      %v447 = vsel %vm420, %v392, %v393
      %v448 = vsel %vm420, %v391, %v392
      %v449 = vsel %vm420, %v390, %v391
      %v450 = vsel %vm420, %v389, %v390
      %v451 = vsel %vm420, %v388, %v389
      %v452 = vsel %vm420, %v387, %v388
      %v453 = vsel %vm420, %v386, %v387
      %v454 = vsel %vm420, %v385, %v386
      %v455 = vsel %vm420, %v384, %v385
      %v456 = vsel %vm420, %v383, %v384
      %v457 = vsel %vm420, %v382, %v383
      %v458 = vsel %vm420, %v381, %v382
      %v459 = vsel %vm420, %v380, %v381
      %v460 = vsel %vm420, %v379, %v380
      %v461 = vsel %vm420, %v419, %v379
      %503 = vrot.lane.b32.xlu0 %v253, 32
      %v504 = vpop.permute.xlu0 %503
      %505 = vrot.lane.b32.xlu0 %v254, 32
      %v506 = vpop.permute.xlu0 %505
      %507 = vrot.lane.b32.xlu0 %v255, 32
      %v508 = vpop.permute.xlu0 %507
      %509 = vrot.lane.b32.xlu0 %v256, 32
      %v510 = vpop.permute.xlu0 %509
      %511 = vrot.lane.b32.xlu0 %v257, 32
      %v512 = vpop.permute.xlu0 %511
      %513 = vrot.lane.b32.xlu0 %v258, 32
      %v514 = vpop.permute.xlu0 %513
      %515 = vrot.lane.b32.xlu0 %v259, 32
      %v516 = vpop.permute.xlu0 %515
      %517 = vrot.lane.b32.xlu0 %v260, 32
      %v518 = vpop.permute.xlu0 %517
      %519 = vrot.lane.b32.xlu0 %v261, 32
      %v520 = vpop.permute.xlu0 %519
      %521 = vrot.lane.b32.xlu0 %v262, 32
      %v522 = vpop.permute.xlu0 %521
      %523 = vrot.lane.b32.xlu0 %v263, 32
      %v524 = vpop.permute.xlu0 %523
      %525 = vrot.lane.b32.xlu0 %v264, 32
      %v526 = vpop.permute.xlu0 %525
      %527 = vrot.lane.b32.xlu0 %v265, 32
      %v528 = vpop.permute.xlu0 %527
      %529 = vrot.lane.b32.xlu0 %v266, 32
      %v530 = vpop.permute.xlu0 %529
      %531 = vrot.lane.b32.xlu0 %v267, 32
      %v532 = vpop.permute.xlu0 %531
      %533 = vrot.lane.b32.xlu0 %v268, 32
      %v534 = vpop.permute.xlu0 %533
      %535 = vrot.lane.b32.xlu0 %v269, 32
      %v536 = vpop.permute.xlu0 %535
      %537 = vrot.lane.b32.xlu0 %v270, 32
      %v538 = vpop.permute.xlu0 %537
      %539 = vrot.lane.b32.xlu0 %v271, 32
      %v540 = vpop.permute.xlu0 %539
      %541 = vrot.lane.b32.xlu0 %v272, 32
      %v542 = vpop.permute.xlu0 %541
      %543 = vrot.lane.b32.xlu0 %v273, 32
      %v544 = vpop.permute.xlu0 %543
      %545 = vrot.lane.b32.xlu0 %v274, 32
      %v546 = vpop.permute.xlu0 %545
      %547 = vrot.lane.b32.xlu0 %v275, 32
      %v548 = vpop.permute.xlu0 %547
      %549 = vrot.lane.b32.xlu0 %v276, 32
      %v550 = vpop.permute.xlu0 %549
      %551 = vrot.lane.b32.xlu0 %v277, 32
      %v552 = vpop.permute.xlu0 %551
      %553 = vrot.lane.b32.xlu0 %v278, 32
      %v554 = vpop.permute.xlu0 %553
      %555 = vrot.lane.b32.xlu0 %v279, 32
      %v556 = vpop.permute.xlu0 %555
      %557 = vrot.lane.b32.xlu0 %v280, 32
      %v558 = vpop.permute.xlu0 %557
      %559 = vrot.lane.b32.xlu0 %v281, 32
      %v560 = vpop.permute.xlu0 %559
      %561 = vrot.lane.b32.xlu0 %v282, 32
      %v562 = vpop.permute.xlu0 %561
      %563 = vrot.lane.b32.xlu0 %v283, 32
      %v564 = vpop.permute.xlu0 %563
      %565 = vrot.lane.b32.xlu0 %v284, 32
      %v566 = vpop.permute.xlu0 %565
      %567 = vrot.lane.b32.xlu0 %v285, 32
      %v568 = vpop.permute.xlu0 %567
      %569 = vrot.lane.b32.xlu0 %v286, 32
      %v570 = vpop.permute.xlu0 %569
      %571 = vrot.lane.b32.xlu0 %v287, 32
      %v572 = vpop.permute.xlu0 %571
      %573 = vrot.lane.b32.xlu0 %v288, 32
      %v574 = vpop.permute.xlu0 %573
      %575 = vrot.lane.b32.xlu0 %v289, 32
      %v576 = vpop.permute.xlu0 %575
      %577 = vrot.lane.b32.xlu0 %v290, 32
      %v578 = vpop.permute.xlu0 %577
      %579 = vrot.lane.b32.xlu0 %v291, 32
      %v580 = vpop.permute.xlu0 %579
      %581 = vrot.lane.b32.xlu0 %v292, 32
      %v582 = vpop.permute.xlu0 %581
      %583 = vrot.lane.b32.xlu0 %v293, 32
      %v584 = vpop.permute.xlu0 %583
      %667 = vrot.lane.b32.xlu0 %v460, 64
      %v668 = vpop.permute.xlu0 %667
      %669 = vrot.lane.b32.xlu0 %v459, 64
      %v670 = vpop.permute.xlu0 %669
      %671 = vrot.lane.b32.xlu0 %v458, 64
      %v672 = vpop.permute.xlu0 %671
      %673 = vrot.lane.b32.xlu0 %v457, 64
      %v674 = vpop.permute.xlu0 %673
      %675 = vrot.lane.b32.xlu0 %v456, 64
      %v676 = vpop.permute.xlu0 %675
      %677 = vrot.lane.b32.xlu0 %v455, 64
      %v678 = vpop.permute.xlu0 %677
      %679 = vrot.lane.b32.xlu0 %v454, 64
      %v680 = vpop.permute.xlu0 %679
      %681 = vrot.lane.b32.xlu0 %v453, 64
      %v682 = vpop.permute.xlu0 %681
      %683 = vrot.lane.b32.xlu0 %v452, 64
      %v684 = vpop.permute.xlu0 %683
      %685 = vrot.lane.b32.xlu0 %v451, 64
      %v686 = vpop.permute.xlu0 %685
      %687 = vrot.lane.b32.xlu0 %v450, 64
      %v688 = vpop.permute.xlu0 %687
      %689 = vrot.lane.b32.xlu0 %v449, 64
      %v690 = vpop.permute.xlu0 %689
      %691 = vrot.lane.b32.xlu0 %v448, 64
      %v692 = vpop.permute.xlu0 %691
      %693 = vrot.lane.b32.xlu0 %v447, 64
      %v694 = vpop.permute.xlu0 %693
      %695 = vrot.lane.b32.xlu0 %v446, 64
      %v696 = vpop.permute.xlu0 %695
      %697 = vrot.lane.b32.xlu0 %v445, 64
      %v698 = vpop.permute.xlu0 %697
      %699 = vrot.lane.b32.xlu0 %v444, 64
      %v700 = vpop.permute.xlu0 %699
      %701 = vrot.lane.b32.xlu0 %v443, 64
      %v702 = vpop.permute.xlu0 %701
      %703 = vrot.lane.b32.xlu0 %v442, 64
      %v704 = vpop.permute.xlu0 %703
      %705 = vrot.lane.b32.xlu0 %v441, 64
      %v706 = vpop.permute.xlu0 %705
      %707 = vrot.lane.b32.xlu0 %v440, 64
      %v708 = vpop.permute.xlu0 %707
      %709 = vrot.lane.b32.xlu0 %v439, 64
      %v710 = vpop.permute.xlu0 %709
      %711 = vrot.lane.b32.xlu0 %v438, 64
      %v712 = vpop.permute.xlu0 %711
      %713 = vrot.lane.b32.xlu0 %v437, 64
      %v714 = vpop.permute.xlu0 %713
      %715 = vrot.lane.b32.xlu0 %v436, 64
      %v716 = vpop.permute.xlu0 %715
      %717 = vrot.lane.b32.xlu0 %v435, 64
      %v718 = vpop.permute.xlu0 %717
      %719 = vrot.lane.b32.xlu0 %v434, 64
      %v720 = vpop.permute.xlu0 %719
      %721 = vrot.lane.b32.xlu0 %v433, 64
      %v722 = vpop.permute.xlu0 %721
      %723 = vrot.lane.b32.xlu0 %v432, 64
      %v724 = vpop.permute.xlu0 %723
      %725 = vrot.lane.b32.xlu0 %v431, 64
      %v726 = vpop.permute.xlu0 %725
      %727 = vrot.lane.b32.xlu0 %v430, 64
      %v728 = vpop.permute.xlu0 %727
      %729 = vrot.lane.b32.xlu0 %v429, 64
      %v730 = vpop.permute.xlu0 %729
      %731 = vrot.lane.b32.xlu0 %v428, 64
      %v732 = vpop.permute.xlu0 %731
      %733 = vrot.lane.b32.xlu0 %v427, 64
      %v734 = vpop.permute.xlu0 %733
      %735 = vrot.lane.b32.xlu0 %v426, 64
      %v736 = vpop.permute.xlu0 %735
      %737 = vrot.lane.b32.xlu0 %v425, 64
      %v738 = vpop.permute.xlu0 %737
      %739 = vrot.lane.b32.xlu0 %v424, 64
      %v740 = vpop.permute.xlu0 %739
      %741 = vrot.lane.b32.xlu0 %v423, 64
      %v742 = vpop.permute.xlu0 %741
      %743 = vrot.lane.b32.xlu0 %v422, 64
      %v744 = vpop.permute.xlu0 %743
      %745 = vrot.lane.b32.xlu0 %v421, 64
      %v746 = vpop.permute.xlu0 %745
      %747 = vrot.lane.b32.xlu0 %v461, 64
      %v748 = vpop.permute.xlu0 %747
      %vm790 = vcmask 261120
      %v791 = vsel %vm790, %v378, %v504
      %v792 = vsel %vm790, %v377, %v506
      %v793 = vsel %vm790, %v376, %v508
      %v794 = vsel %vm790, %v375, %v510
      %v795 = vsel %vm790, %v374, %v512
      %v796 = vsel %vm790, %v373, %v514
      %v797 = vsel %vm790, %v372, %v516
      %v798 = vsel %vm790, %v371, %v518
      %v799 = vsel %vm790, %v370, %v520
      %v800 = vsel %vm790, %v369, %v522
      %v801 = vsel %vm790, %v368, %v524
      %v802 = vsel %vm790, %v367, %v526
      %v803 = vsel %vm790, %v366, %v528
      %v804 = vsel %vm790, %v365, %v530
      %v805 = vsel %vm790, %v364, %v532
      %v806 = vsel %vm790, %v363, %v534
      %v807 = vsel %vm790, %v362, %v536
      %v808 = vsel %vm790, %v361, %v538
      %v809 = vsel %vm790, %v360, %v540
      %v810 = vsel %vm790, %v359, %v542
      %v811 = vsel %vm790, %v358, %v544
      %v812 = vsel %vm790, %v357, %v546
      %v813 = vsel %vm790, %v356, %v548
      %v814 = vsel %vm790, %v355, %v550
      %v815 = vsel %vm790, %v354, %v552
      %v816 = vsel %vm790, %v353, %v554
      %v817 = vsel %vm790, %v352, %v556
      %v818 = vsel %vm790, %v351, %v558
      %v819 = vsel %vm790, %v350, %v560
      %v820 = vsel %vm790, %v349, %v562
      %v821 = vsel %vm790, %v348, %v564
      %v822 = vsel %vm790, %v347, %v566
      %v823 = vsel %vm790, %v346, %v568
      %v824 = vsel %vm790, %v345, %v570
      %v825 = vsel %vm790, %v344, %v572
      %v826 = vsel %vm790, %v343, %v574
      %v827 = vsel %vm790, %v342, %v576
      %v828 = vsel %vm790, %v341, %v578
      %v829 = vsel %vm790, %v340, %v580
      %v830 = vsel %vm790, %v339, %v582
      %v831 = vsel %vm790, %v338, %v584
      %vm832 = vcmask 523264
      %v833 = vsel %vm832, %v791, %v668
      %v834 = vsel %vm832, %v792, %v670
      %v835 = vsel %vm832, %v793, %v672
      %v836 = vsel %vm832, %v794, %v674
      %v837 = vsel %vm832, %v795, %v676
      %v838 = vsel %vm832, %v796, %v678
      %v839 = vsel %vm832, %v797, %v680
      %v840 = vsel %vm832, %v798, %v682
      %v841 = vsel %vm832, %v799, %v684
      %v842 = vsel %vm832, %v800, %v686
      %v843 = vsel %vm832, %v801, %v688
      %v844 = vsel %vm832, %v802, %v690
      %v845 = vsel %vm832, %v803, %v692
      %v846 = vsel %vm832, %v804, %v694
      %v847 = vsel %vm832, %v805, %v696
      %v848 = vsel %vm832, %v806, %v698
      %v849 = vsel %vm832, %v807, %v700
      %v850 = vsel %vm832, %v808, %v702
      %v851 = vsel %vm832, %v809, %v704
      %v852 = vsel %vm832, %v810, %v706
      %v853 = vsel %vm832, %v811, %v708
      %v854 = vsel %vm832, %v812, %v710
      %v855 = vsel %vm832, %v813, %v712
      %v856 = vsel %vm832, %v814, %v714
      %v857 = vsel %vm832, %v815, %v716
      %v858 = vsel %vm832, %v816, %v718
      %v859 = vsel %vm832, %v817, %v720
      %v860 = vsel %vm832, %v818, %v722
      %v861 = vsel %vm832, %v819, %v724
      %v862 = vsel %vm832, %v820, %v726
      %v863 = vsel %vm832, %v821, %v728
      %v864 = vsel %vm832, %v822, %v730
      %v865 = vsel %vm832, %v823, %v732
      %v866 = vsel %vm832, %v824, %v734
      %v867 = vsel %vm832, %v825, %v736
      %v868 = vsel %vm832, %v826, %v738
      %v869 = vsel %vm832, %v827, %v740
      %v870 = vsel %vm832, %v828, %v742
      %v871 = vsel %vm832, %v829, %v744
      %v872 = vsel %vm832, %v830, %v746
      %v873 = vsel %vm832, %v831, %v748
      %v874 = vrot.slane %v833, 6
      %v875 = vrot.slane %v834, 6
      %v876 = vrot.slane %v835, 6
      %v877 = vrot.slane %v836, 6
      %v878 = vrot.slane %v837, 6
      %v879 = vrot.slane %v838, 6
      %v880 = vrot.slane %v839, 6
      %v881 = vrot.slane %v840, 6
      %v882 = vrot.slane %v841, 6
      %v883 = vrot.slane %v842, 6
      %v884 = vrot.slane %v843, 6
      %v885 = vrot.slane %v844, 6
      %v886 = vrot.slane %v845, 6
      %v887 = vrot.slane %v846, 6
      %v888 = vrot.slane %v847, 6
      %v889 = vrot.slane %v848, 6
      %v890 = vrot.slane %v849, 6
      %v891 = vrot.slane %v850, 6
      %v892 = vrot.slane %v851, 6
      %v893 = vrot.slane %v852, 6
      %v894 = vrot.slane %v853, 6
      %v895 = vrot.slane %v854, 6
      %v896 = vrot.slane %v855, 6
      %v897 = vrot.slane %v856, 6
      %v898 = vrot.slane %v857, 6
      %v899 = vrot.slane %v858, 6
      %v900 = vrot.slane %v859, 6
      %v901 = vrot.slane %v860, 6
      %v902 = vrot.slane %v861, 6
      %v903 = vrot.slane %v862, 6
      %v904 = vrot.slane %v863, 6
      %v905 = vrot.slane %v864, 6
      %v906 = vrot.slane %v865, 6
      %v907 = vrot.slane %v866, 6
      %v908 = vrot.slane %v867, 6
      %v909 = vrot.slane %v868, 6
      %v910 = vrot.slane %v869, 6
      %v911 = vrot.slane %v870, 6
      %v912 = vrot.slane %v871, 6
      %v913 = vrot.slane %v872, 6
      %v914 = vrot.slane %v873, 6
      %vm915 = vcmp.lt.s32.totalorder %v336, 2
      %v916 = vsel %vm915, %v913, %v914
      %v917 = vsel %vm915, %v912, %v913
      %v918 = vsel %vm915, %v911, %v912
      %v919 = vsel %vm915, %v910, %v911
      %v920 = vsel %vm915, %v909, %v910
      %v921 = vsel %vm915, %v908, %v909
      %v922 = vsel %vm915, %v907, %v908
      %v923 = vsel %vm915, %v906, %v907
      %v924 = vsel %vm915, %v905, %v906
      %v925 = vsel %vm915, %v904, %v905
      %v926 = vsel %vm915, %v903, %v904
      %v927 = vsel %vm915, %v902, %v903
      %v928 = vsel %vm915, %v901, %v902
      %v929 = vsel %vm915, %v900, %v901
      %v930 = vsel %vm915, %v899, %v900
      %v931 = vsel %vm915, %v898, %v899
      %v932 = vsel %vm915, %v897, %v898
      %v933 = vsel %vm915, %v896, %v897
      %v934 = vsel %vm915, %v895, %v896
      %v935 = vsel %vm915, %v894, %v895
      %v936 = vsel %vm915, %v893, %v894
      %v937 = vsel %vm915, %v892, %v893
      %v938 = vsel %vm915, %v891, %v892
      %v939 = vsel %vm915, %v890, %v891
      %v940 = vsel %vm915, %v889, %v890
      %v941 = vsel %vm915, %v888, %v889
      %v942 = vsel %vm915, %v887, %v888
      %v943 = vsel %vm915, %v886, %v887
      %v944 = vsel %vm915, %v885, %v886
      %v945 = vsel %vm915, %v884, %v885
      %v946 = vsel %vm915, %v883, %v884
      %v947 = vsel %vm915, %v882, %v883
      %v948 = vsel %vm915, %v881, %v882
      %v949 = vsel %vm915, %v880, %v881
      %v950 = vsel %vm915, %v879, %v880
      %v951 = vsel %vm915, %v878, %v879
      %v952 = vsel %vm915, %v877, %v878
      %v953 = vsel %vm915, %v876, %v877
      %v954 = vsel %vm915, %v875, %v876
      %v955 = vsel %vm915, %v874, %v875
      %v956 = vsel %vm915, %v914, %v874
      %v957 = vrot.slane %v833, 2
      %v958 = vrot.slane %v834, 2
      %v959 = vrot.slane %v835, 2
      %v960 = vrot.slane %v836, 2
      %v961 = vrot.slane %v837, 2
      %v962 = vrot.slane %v838, 2
      %v963 = vrot.slane %v839, 2
      %v964 = vrot.slane %v840, 2
      %v965 = vrot.slane %v841, 2
      %v966 = vrot.slane %v842, 2
      %v967 = vrot.slane %v843, 2
      %v968 = vrot.slane %v844, 2
      %v969 = vrot.slane %v845, 2
      %v970 = vrot.slane %v846, 2
      %v971 = vrot.slane %v847, 2
      %v972 = vrot.slane %v848, 2
      %v973 = vrot.slane %v849, 2
      %v974 = vrot.slane %v850, 2
      %v975 = vrot.slane %v851, 2
      %v976 = vrot.slane %v852, 2
      %v977 = vrot.slane %v853, 2
      %v978 = vrot.slane %v854, 2
      %v979 = vrot.slane %v855, 2
      %v980 = vrot.slane %v856, 2
      %v981 = vrot.slane %v857, 2
      %v982 = vrot.slane %v858, 2
      %v983 = vrot.slane %v859, 2
      %v984 = vrot.slane %v860, 2
      %v985 = vrot.slane %v861, 2
      %v986 = vrot.slane %v862, 2
      %v987 = vrot.slane %v863, 2
      %v988 = vrot.slane %v864, 2
      %v989 = vrot.slane %v865, 2
      %v990 = vrot.slane %v866, 2
      %v991 = vrot.slane %v867, 2
      %v992 = vrot.slane %v868, 2
      %v993 = vrot.slane %v869, 2
      %v994 = vrot.slane %v870, 2
      %v995 = vrot.slane %v871, 2
      %v996 = vrot.slane %v872, 2
      %v997 = vrot.slane %v873, 2
      %vm998 = vcmp.lt.s32.totalorder %v336, 6
      %v999 = vsel %vm998, %v996, %v997
      %v1000 = vsel %vm998, %v995, %v996
      %v1001 = vsel %vm998, %v994, %v995
      %v1002 = vsel %vm998, %v993, %v994
      %v1003 = vsel %vm998, %v992, %v993
      %v1004 = vsel %vm998, %v991, %v992
      %v1005 = vsel %vm998, %v990, %v991
      %v1006 = vsel %vm998, %v989, %v990
      %v1007 = vsel %vm998, %v988, %v989
      %v1008 = vsel %vm998, %v987, %v988
      %v1009 = vsel %vm998, %v986, %v987
      %v1010 = vsel %vm998, %v985, %v986
      %v1011 = vsel %vm998, %v984, %v985
      %v1012 = vsel %vm998, %v983, %v984
      %v1013 = vsel %vm998, %v982, %v983
      %v1014 = vsel %vm998, %v981, %v982
      %v1015 = vsel %vm998, %v980, %v981
      %v1016 = vsel %vm998, %v979, %v980
      %v1017 = vsel %vm998, %v978, %v979
      %v1018 = vsel %vm998, %v977, %v978
      %v1019 = vsel %vm998, %v976, %v977
      %v1020 = vsel %vm998, %v975, %v976
      %v1021 = vsel %vm998, %v974, %v975
      %v1022 = vsel %vm998, %v973, %v974
      %v1023 = vsel %vm998, %v972, %v973
      %v1024 = vsel %vm998, %v971, %v972
      %v1025 = vsel %vm998, %v970, %v971
      %v1026 = vsel %vm998, %v969, %v970
      %v1027 = vsel %vm998, %v968, %v969
      %v1028 = vsel %vm998, %v967, %v968
      %v1029 = vsel %vm998, %v966, %v967
      %v1030 = vsel %vm998, %v965, %v966
      %v1031 = vsel %vm998, %v964, %v965
      %v1032 = vsel %vm998, %v963, %v964
      %v1033 = vsel %vm998, %v962, %v963
      %v1034 = vsel %vm998, %v961, %v962
      %v1035 = vsel %vm998, %v960, %v961
      %v1036 = vsel %vm998, %v959, %v960
      %v1037 = vsel %vm998, %v958, %v959
      %v1038 = vsel %vm998, %v957, %v958
      %v1039 = vsel %vm998, %v997, %v957
      %1081 = vrot.lane.b32.xlu0 %v833, 96
      %v1082 = vpop.permute.xlu0 %1081
      %1083 = vrot.lane.b32.xlu0 %v834, 96
      %v1084 = vpop.permute.xlu0 %1083
      %1085 = vrot.lane.b32.xlu0 %v835, 96
      %v1086 = vpop.permute.xlu0 %1085
      %1087 = vrot.lane.b32.xlu0 %v836, 96
      %v1088 = vpop.permute.xlu0 %1087
      %1089 = vrot.lane.b32.xlu0 %v837, 96
      %v1090 = vpop.permute.xlu0 %1089
      %1091 = vrot.lane.b32.xlu0 %v838, 96
      %v1092 = vpop.permute.xlu0 %1091
      %1093 = vrot.lane.b32.xlu0 %v839, 96
      %v1094 = vpop.permute.xlu0 %1093
      %1095 = vrot.lane.b32.xlu0 %v840, 96
      %v1096 = vpop.permute.xlu0 %1095
      %1097 = vrot.lane.b32.xlu0 %v841, 96
      %v1098 = vpop.permute.xlu0 %1097
      %1099 = vrot.lane.b32.xlu0 %v842, 96
      %v1100 = vpop.permute.xlu0 %1099
      %1101 = vrot.lane.b32.xlu0 %v843, 96
      %v1102 = vpop.permute.xlu0 %1101
      %1103 = vrot.lane.b32.xlu0 %v844, 96
      %v1104 = vpop.permute.xlu0 %1103
      %1105 = vrot.lane.b32.xlu0 %v845, 96
      %v1106 = vpop.permute.xlu0 %1105
      %1107 = vrot.lane.b32.xlu0 %v846, 96
      %v1108 = vpop.permute.xlu0 %1107
      %1109 = vrot.lane.b32.xlu0 %v847, 96
      %v1110 = vpop.permute.xlu0 %1109
      %1111 = vrot.lane.b32.xlu0 %v848, 96
      %v1112 = vpop.permute.xlu0 %1111
      %1113 = vrot.lane.b32.xlu0 %v849, 96
      %v1114 = vpop.permute.xlu0 %1113
      %1115 = vrot.lane.b32.xlu0 %v850, 96
      %v1116 = vpop.permute.xlu0 %1115
      %1117 = vrot.lane.b32.xlu0 %v851, 96
      %v1118 = vpop.permute.xlu0 %1117
      %1119 = vrot.lane.b32.xlu0 %v852, 96
      %v1120 = vpop.permute.xlu0 %1119
      %1121 = vrot.lane.b32.xlu0 %v853, 96
      %v1122 = vpop.permute.xlu0 %1121
      %1123 = vrot.lane.b32.xlu0 %v854, 96
      %v1124 = vpop.permute.xlu0 %1123
      %1125 = vrot.lane.b32.xlu0 %v855, 96
      %v1126 = vpop.permute.xlu0 %1125
      %1127 = vrot.lane.b32.xlu0 %v856, 96
      %v1128 = vpop.permute.xlu0 %1127
      %1129 = vrot.lane.b32.xlu0 %v857, 96
      %v1130 = vpop.permute.xlu0 %1129
      %1131 = vrot.lane.b32.xlu0 %v858, 96
      %v1132 = vpop.permute.xlu0 %1131
      %1133 = vrot.lane.b32.xlu0 %v859, 96
      %v1134 = vpop.permute.xlu0 %1133
      %1135 = vrot.lane.b32.xlu0 %v860, 96
      %v1136 = vpop.permute.xlu0 %1135
      %1137 = vrot.lane.b32.xlu0 %v861, 96
      %v1138 = vpop.permute.xlu0 %1137
      %1139 = vrot.lane.b32.xlu0 %v862, 96
      %v1140 = vpop.permute.xlu0 %1139
      %1141 = vrot.lane.b32.xlu0 %v863, 96
      %v1142 = vpop.permute.xlu0 %1141
      %1143 = vrot.lane.b32.xlu0 %v864, 96
      %v1144 = vpop.permute.xlu0 %1143
      %1145 = vrot.lane.b32.xlu0 %v865, 96
      %v1146 = vpop.permute.xlu0 %1145
      %1147 = vrot.lane.b32.xlu0 %v866, 96
      %v1148 = vpop.permute.xlu0 %1147
      %1149 = vrot.lane.b32.xlu0 %v867, 96
      %v1150 = vpop.permute.xlu0 %1149
      %1151 = vrot.lane.b32.xlu0 %v868, 96
      %v1152 = vpop.permute.xlu0 %1151
      %1153 = vrot.lane.b32.xlu0 %v869, 96
      %v1154 = vpop.permute.xlu0 %1153
      %1155 = vrot.lane.b32.xlu0 %v870, 96
      %v1156 = vpop.permute.xlu0 %1155
      %1157 = vrot.lane.b32.xlu0 %v871, 96
      %v1158 = vpop.permute.xlu0 %1157
      %1159 = vrot.lane.b32.xlu0 %v872, 96
      %v1160 = vpop.permute.xlu0 %1159
      %1161 = vrot.lane.b32.xlu0 %v873, 96
      %v1162 = vpop.permute.xlu0 %1161
      %1245 = vrot.lane.b32.xlu0 %v1036, 64
      %v1246 = vpop.permute.xlu0 %1245
      %1247 = vrot.lane.b32.xlu0 %v1035, 64
      %v1248 = vpop.permute.xlu0 %1247
      %1249 = vrot.lane.b32.xlu0 %v1034, 64
      %v1250 = vpop.permute.xlu0 %1249
      %1251 = vrot.lane.b32.xlu0 %v1033, 64
      %v1252 = vpop.permute.xlu0 %1251
      %1253 = vrot.lane.b32.xlu0 %v1032, 64
      %v1254 = vpop.permute.xlu0 %1253
      %1255 = vrot.lane.b32.xlu0 %v1031, 64
      %v1256 = vpop.permute.xlu0 %1255
      %1257 = vrot.lane.b32.xlu0 %v1030, 64
      %v1258 = vpop.permute.xlu0 %1257
      %1259 = vrot.lane.b32.xlu0 %v1029, 64
      %v1260 = vpop.permute.xlu0 %1259
      %1261 = vrot.lane.b32.xlu0 %v1028, 64
      %v1262 = vpop.permute.xlu0 %1261
      %1263 = vrot.lane.b32.xlu0 %v1027, 64
      %v1264 = vpop.permute.xlu0 %1263
      %1265 = vrot.lane.b32.xlu0 %v1026, 64
      %v1266 = vpop.permute.xlu0 %1265
      %1267 = vrot.lane.b32.xlu0 %v1025, 64
      %v1268 = vpop.permute.xlu0 %1267
      %1269 = vrot.lane.b32.xlu0 %v1024, 64
      %v1270 = vpop.permute.xlu0 %1269
      %1271 = vrot.lane.b32.xlu0 %v1023, 64
      %v1272 = vpop.permute.xlu0 %1271
      %1273 = vrot.lane.b32.xlu0 %v1022, 64
      %v1274 = vpop.permute.xlu0 %1273
      %1275 = vrot.lane.b32.xlu0 %v1021, 64
      %v1276 = vpop.permute.xlu0 %1275
      %1277 = vrot.lane.b32.xlu0 %v1020, 64
      %v1278 = vpop.permute.xlu0 %1277
      %1279 = vrot.lane.b32.xlu0 %v1019, 64
      %v1280 = vpop.permute.xlu0 %1279
      %1281 = vrot.lane.b32.xlu0 %v1018, 64
      %v1282 = vpop.permute.xlu0 %1281
      %1283 = vrot.lane.b32.xlu0 %v1017, 64
      %v1284 = vpop.permute.xlu0 %1283
      %1285 = vrot.lane.b32.xlu0 %v1016, 64
      %v1286 = vpop.permute.xlu0 %1285
      %1287 = vrot.lane.b32.xlu0 %v1015, 64
      %v1288 = vpop.permute.xlu0 %1287
      %1289 = vrot.lane.b32.xlu0 %v1014, 64
      %v1290 = vpop.permute.xlu0 %1289
      %1291 = vrot.lane.b32.xlu0 %v1013, 64
      %v1292 = vpop.permute.xlu0 %1291
      %1293 = vrot.lane.b32.xlu0 %v1012, 64
      %v1294 = vpop.permute.xlu0 %1293
      %1295 = vrot.lane.b32.xlu0 %v1011, 64
      %v1296 = vpop.permute.xlu0 %1295
      %1297 = vrot.lane.b32.xlu0 %v1010, 64
      %v1298 = vpop.permute.xlu0 %1297
      %1299 = vrot.lane.b32.xlu0 %v1009, 64
      %v1300 = vpop.permute.xlu0 %1299
      %1301 = vrot.lane.b32.xlu0 %v1008, 64
      %v1302 = vpop.permute.xlu0 %1301
      %1303 = vrot.lane.b32.xlu0 %v1007, 64
      %v1304 = vpop.permute.xlu0 %1303
      %1305 = vrot.lane.b32.xlu0 %v1006, 64
      %v1306 = vpop.permute.xlu0 %1305
      %1307 = vrot.lane.b32.xlu0 %v1005, 64
      %v1308 = vpop.permute.xlu0 %1307
      %1309 = vrot.lane.b32.xlu0 %v1004, 64
      %v1310 = vpop.permute.xlu0 %1309
      %1311 = vrot.lane.b32.xlu0 %v1003, 64
      %v1312 = vpop.permute.xlu0 %1311
      %1313 = vrot.lane.b32.xlu0 %v1002, 64
      %v1314 = vpop.permute.xlu0 %1313
      %1315 = vrot.lane.b32.xlu0 %v1001, 64
      %v1316 = vpop.permute.xlu0 %1315
      %1317 = vrot.lane.b32.xlu0 %v1000, 64
      %v1318 = vpop.permute.xlu0 %1317
      %1319 = vrot.lane.b32.xlu0 %v999, 64
      %v1320 = vpop.permute.xlu0 %1319
      %1321 = vrot.lane.b32.xlu0 %v1039, 64
      %v1322 = vpop.permute.xlu0 %1321
      %1323 = vrot.lane.b32.xlu0 %v1038, 64
      %v1324 = vpop.permute.xlu0 %1323
      %1325 = vrot.lane.b32.xlu0 %v1037, 64
      %v1326 = vpop.permute.xlu0 %1325
      %vm1368 = vcmask 785408
      %v1369 = vsel %vm1368, %v917, %v1082
      %v1370 = vsel %vm1368, %v916, %v1084
      %v1371 = vsel %vm1368, %v956, %v1086
      %v1372 = vsel %vm1368, %v955, %v1088
      %v1373 = vsel %vm1368, %v954, %v1090
      %v1374 = vsel %vm1368, %v953, %v1092
      %v1375 = vsel %vm1368, %v952, %v1094
      %v1376 = vsel %vm1368, %v951, %v1096
      %v1377 = vsel %vm1368, %v950, %v1098
      %v1378 = vsel %vm1368, %v949, %v1100
      %v1379 = vsel %vm1368, %v948, %v1102
      %v1380 = vsel %vm1368, %v947, %v1104
      %v1381 = vsel %vm1368, %v946, %v1106
      %v1382 = vsel %vm1368, %v945, %v1108
      %v1383 = vsel %vm1368, %v944, %v1110
      %v1384 = vsel %vm1368, %v943, %v1112
      %v1385 = vsel %vm1368, %v942, %v1114
      %v1386 = vsel %vm1368, %v941, %v1116
      %v1387 = vsel %vm1368, %v940, %v1118
      %v1388 = vsel %vm1368, %v939, %v1120
      %v1389 = vsel %vm1368, %v938, %v1122
      %v1390 = vsel %vm1368, %v937, %v1124
      %v1391 = vsel %vm1368, %v936, %v1126
      %v1392 = vsel %vm1368, %v935, %v1128
      %v1393 = vsel %vm1368, %v934, %v1130
      %v1394 = vsel %vm1368, %v933, %v1132
      %v1395 = vsel %vm1368, %v932, %v1134
      %v1396 = vsel %vm1368, %v931, %v1136
      %v1397 = vsel %vm1368, %v930, %v1138
      %v1398 = vsel %vm1368, %v929, %v1140
      %v1399 = vsel %vm1368, %v928, %v1142
      %v1400 = vsel %vm1368, %v927, %v1144
      %v1401 = vsel %vm1368, %v926, %v1146
      %v1402 = vsel %vm1368, %v925, %v1148
      %v1403 = vsel %vm1368, %v924, %v1150
      %v1404 = vsel %vm1368, %v923, %v1152
      %v1405 = vsel %vm1368, %v922, %v1154
      %v1406 = vsel %vm1368, %v921, %v1156
      %v1407 = vsel %vm1368, %v920, %v1158
      %v1408 = vsel %vm1368, %v919, %v1160
      %v1409 = vsel %vm1368, %v918, %v1162
      %v1410 = vsel %vm832, %v1082, %v1246
      %v1411 = vsel %vm832, %v1084, %v1248
      %v1412 = vsel %vm832, %v1086, %v1250
      %v1413 = vsel %vm832, %v1088, %v1252
      %v1414 = vsel %vm832, %v1090, %v1254
      %v1415 = vsel %vm832, %v1092, %v1256
      %v1416 = vsel %vm832, %v1094, %v1258
      %v1417 = vsel %vm832, %v1096, %v1260
      %v1418 = vsel %vm832, %v1098, %v1262
      %v1419 = vsel %vm832, %v1100, %v1264
      %v1420 = vsel %vm832, %v1102, %v1266
      %v1421 = vsel %vm832, %v1104, %v1268
      %v1422 = vsel %vm832, %v1106, %v1270
      %v1423 = vsel %vm832, %v1108, %v1272
      %v1424 = vsel %vm832, %v1110, %v1274
      %v1425 = vsel %vm832, %v1112, %v1276
      %v1426 = vsel %vm832, %v1114, %v1278
      %v1427 = vsel %vm832, %v1116, %v1280
      %v1428 = vsel %vm832, %v1118, %v1282
      %v1429 = vsel %vm832, %v1120, %v1284
      %v1430 = vsel %vm832, %v1122, %v1286
      %v1431 = vsel %vm832, %v1124, %v1288
      %v1432 = vsel %vm832, %v1126, %v1290
      %v1433 = vsel %vm832, %v1128, %v1292
      %v1434 = vsel %vm832, %v1130, %v1294
      %v1435 = vsel %vm832, %v1132, %v1296
      %v1436 = vsel %vm832, %v1134, %v1298
      %v1437 = vsel %vm832, %v1136, %v1300
      %v1438 = vsel %vm832, %v1138, %v1302
      %v1439 = vsel %vm832, %v1140, %v1304
      %v1440 = vsel %vm832, %v1142, %v1306
      %v1441 = vsel %vm832, %v1144, %v1308
      %v1442 = vsel %vm832, %v1146, %v1310
      %v1443 = vsel %vm832, %v1148, %v1312
      %v1444 = vsel %vm832, %v1150, %v1314
      %v1445 = vsel %vm832, %v1152, %v1316
      %v1446 = vsel %vm832, %v1154, %v1318
      %v1447 = vsel %vm832, %v1156, %v1320
      %v1448 = vsel %vm832, %v1158, %v1322
      %v1449 = vsel %vm832, %v1160, %v1324
      %v1450 = vsel %vm832, %v1162, %v1326
      %v1451 = vpack.c.bf16 %v1370, %v1369
      %v1452 = vpack.c.bf16 %v1411, %v1410
      %v1453 = vpack.c.bf16 %v1248, %v1246
      %v1454 = vpack.c.bf16 %v1372, %v1371
      %v1455 = vpack.c.bf16 %v1413, %v1412
      %v1456 = vpack.c.bf16 %v1252, %v1250
      %v1457 = vpack.c.bf16 %v1374, %v1373
      %v1458 = vpack.c.bf16 %v1415, %v1414
      %v1459 = vpack.c.bf16 %v1256, %v1254
      %v1460 = vpack.c.bf16 %v1376, %v1375
      %v1461 = vpack.c.bf16 %v1417, %v1416
      %v1462 = vpack.c.bf16 %v1260, %v1258
      %v1463 = vpack.c.bf16 %v1378, %v1377
      %v1464 = vpack.c.bf16 %v1419, %v1418
      %v1465 = vpack.c.bf16 %v1264, %v1262
      %v1466 = vpack.c.bf16 %v1380, %v1379
      %v1467 = vpack.c.bf16 %v1421, %v1420
      %v1468 = vpack.c.bf16 %v1268, %v1266
      %v1469 = vpack.c.bf16 %v1382, %v1381
      %v1470 = vpack.c.bf16 %v1423, %v1422
      %v1471 = vpack.c.bf16 %v1272, %v1270
      %v1472 = vpack.c.bf16 %v1384, %v1383
      %v1473 = vpack.c.bf16 %v1425, %v1424
      %v1474 = vpack.c.bf16 %v1276, %v1274
      %v1475 = vpack.c.bf16 %v1386, %v1385
      %v1476 = vpack.c.bf16 %v1427, %v1426
      %v1477 = vpack.c.bf16 %v1280, %v1278
      %v1478 = vpack.c.bf16 %v1388, %v1387
      %v1479 = vpack.c.bf16 %v1429, %v1428
      %v1480 = vpack.c.bf16 %v1284, %v1282
      %v1481 = vpack.c.bf16 %v1390, %v1389
      %v1482 = vpack.c.bf16 %v1431, %v1430
      %v1483 = vpack.c.bf16 %v1288, %v1286
      %v1484 = vpack.c.bf16 %v1392, %v1391
      %v1485 = vpack.c.bf16 %v1433, %v1432
      %v1486 = vpack.c.bf16 %v1292, %v1290
      %v1487 = vpack.c.bf16 %v1394, %v1393
      %v1488 = vpack.c.bf16 %v1435, %v1434
      %v1489 = vpack.c.bf16 %v1296, %v1294
      %v1490 = vpack.c.bf16 %v1396, %v1395
      %v1491 = vpack.c.bf16 %v1437, %v1436
      %v1492 = vpack.c.bf16 %v1300, %v1298
      %v1493 = vpack.c.bf16 %v1398, %v1397
      %v1494 = vpack.c.bf16 %v1439, %v1438
      %v1495 = vpack.c.bf16 %v1304, %v1302
      %v1496 = vpack.c.bf16 %v1400, %v1399
      %v1497 = vpack.c.bf16 %v1441, %v1440
      %v1498 = vpack.c.bf16 %v1308, %v1306
      %v1499 = vpack.c.bf16 %v1402, %v1401
      %v1500 = vpack.c.bf16 %v1443, %v1442
      %v1501 = vpack.c.bf16 %v1312, %v1310
      %v1502 = vpack.c.bf16 %v1404, %v1403
      %v1503 = vpack.c.bf16 %v1445, %v1444
      %v1504 = vpack.c.bf16 %v1316, %v1314
      %v1505 = vpack.c.bf16 %v1406, %v1405
      %v1506 = vpack.c.bf16 %v1447, %v1446
      %v1507 = vpack.c.bf16 %v1320, %v1318
      %v1508 = vpack.c.bf16 %v1408, %v1407
      %v1509 = vpack.c.bf16 %v1449, %v1448
      %v1510 = vpack.c.bf16 %v1324, %v1322
      %v1511 = vpack.c.bf16 %v1409, %v1409
      %v1512 = vpack.c.bf16 %v1450, %v1450
      %v1513 = vpack.c.bf16 %v1326, %v1326
      %v1514 = vld [vmem:[%s2] sm:$0xf]
      %v1515 = vld [vmem:[%s2 + $0x4] sm:$0xf]
      %v1516 = vld [vmem:[%s2 + $0x8] sm:$0xf]
      %v1517 = vld [vmem:[%s2 + $0xc] sm:$0xf]
      %v1518 = vld [vmem:[%s2 + $0x10] sm:$0xf]
      %v1519 = vld [vmem:[%s2 + $0x14] sm:$0xf]
      %v1520 = vld [vmem:[%s2 + $0x18] sm:$0xf]
      %v1521 = vld [vmem:[%s2 + $0x1c] sm:$0xf]
      %v1522 = vld [vmem:[%s2 + $0x20] sm:$0xf]
      %v1523 = vld [vmem:[%s2 + $0x24] sm:$0xf]
      %v1524 = vld [vmem:[%s2 + $0x28] sm:$0xf]
      %v1525 = vld [vmem:[%s2 + $0x2c] sm:$0xf]
      %v1526 = vld [vmem:[%s2 + $0x30] sm:$0xf]
      %v1527 = vld [vmem:[%s2 + $0x34] sm:$0xf]
      %v1528 = vld [vmem:[%s2 + $0x38] sm:$0xf]
      %v1529 = vld [vmem:[%s2 + $0x3c] sm:$0xf]
      %v1530 = vld [vmem:[%s2 + $0x40] sm:$0xf]
      %v1531 = vld [vmem:[%s2 + $0x44] sm:$0xf]
      %v1532 = vld [vmem:[%s2 + $0x48] sm:$0xf]
      %v1533 = vld [vmem:[%s2 + $0x4c] sm:$0xf]
      %v1534 = vld [vmem:[%s2 + $0x50] sm:$0xf]
      %v1535 = vld [vmem:[%s2 + $0x54] sm:$0xf]
      %v1536 = vld [vmem:[%s2 + $0x58] sm:$0xf]
      %v1537 = vld [vmem:[%s2 + $0x5c] sm:$0xf]
      %v1538 = vld [vmem:[%s2 + $0x60] sm:$0xf]
      %v1539 = vld [vmem:[%s2 + $0x64] sm:$0xf]
      %v1540 = vld [vmem:[%s2 + $0x68] sm:$0xf]
      %v1541 = vld [vmem:[%s2 + $0x6c] sm:$0xf]
      %v1542 = vld [vmem:[%s2 + $0x70] sm:$0xf]
      %v1543 = vld [vmem:[%s2 + $0x74] sm:$0xf]
      %v1544 = vld [vmem:[%s2 + $0x78] sm:$0xf]
      %v1545 = vld [vmem:[%s2 + $0x7c] sm:$0xf]
      %v1546 = vld [vmem:[%s2 + $0x80] sm:$0xf]
      %v1547 = vld [vmem:[%s2 + $0x84] sm:$0xf]
      %v1548 = vld [vmem:[%s2 + $0x88] sm:$0xf]
      %v1549 = vld [vmem:[%s2 + $0x8c] sm:$0xf]
      %v1550 = vld [vmem:[%s3] sm:$0x1]
      %v1552 = vperm.slane %v1550, 0
      %v1590 = vunpack.c.l.b16 %v1514
      %v1591 = vunpack.c.l.b16 %v1515
      %v1592 = vunpack.c.l.b16 %v1516
      %v1593 = vunpack.c.l.b16 %v1517
      %v1594 = vunpack.c.l.b16 %v1518
      %v1595 = vunpack.c.l.b16 %v1519
      %v1596 = vunpack.c.l.b16 %v1520
      %v1597 = vunpack.c.l.b16 %v1521
      %v1598 = vunpack.c.l.b16 %v1522
      %v1599 = vunpack.c.l.b16 %v1523
      %v1600 = vunpack.c.l.b16 %v1524
      %v1601 = vunpack.c.l.b16 %v1525
      %v1602 = vunpack.c.l.b16 %v1526
      %v1603 = vunpack.c.l.b16 %v1527
      %v1604 = vunpack.c.l.b16 %v1528
      %v1605 = vunpack.c.l.b16 %v1529
      %v1606 = vunpack.c.l.b16 %v1530
      %v1607 = vunpack.c.l.b16 %v1531
      %v1608 = vunpack.c.l.b16 %v1532
      %v1609 = vunpack.c.l.b16 %v1533
      %v1610 = vunpack.c.l.b16 %v1534
      %v1611 = vunpack.c.l.b16 %v1535
      %v1612 = vunpack.c.l.b16 %v1536
      %v1613 = vunpack.c.l.b16 %v1537
      %v1614 = vunpack.c.l.b16 %v1538
      %v1615 = vunpack.c.l.b16 %v1539
      %v1616 = vunpack.c.l.b16 %v1540
      %v1617 = vunpack.c.l.b16 %v1541
      %v1618 = vunpack.c.l.b16 %v1542
      %v1619 = vunpack.c.l.b16 %v1543
      %v1620 = vunpack.c.l.b16 %v1544
      %v1621 = vunpack.c.l.b16 %v1545
      %v1622 = vunpack.c.l.b16 %v1546
      %v1623 = vunpack.c.l.b16 %v1547
      %v1624 = vunpack.c.l.b16 %v1548
      %v1625 = vunpack.c.l.b16 %v1549
      %v1626 = vpack.c.b16 %v1591, %v1590
      %v1627 = vpack.c.b16 %v1593, %v1592
      %v1628 = vpack.c.b16 %v1595, %v1594
      %v1629 = vpack.c.b16 %v1597, %v1596
      %v1630 = vpack.c.b16 %v1599, %v1598
      %v1631 = vpack.c.b16 %v1601, %v1600
      %v1632 = vpack.c.b16 %v1603, %v1602
      %v1633 = vpack.c.b16 %v1605, %v1604
      %v1634 = vpack.c.b16 %v1607, %v1606
      %v1635 = vpack.c.b16 %v1609, %v1608
      %v1636 = vpack.c.b16 %v1611, %v1610
      %v1637 = vpack.c.b16 %v1613, %v1612
      %v1638 = vpack.c.b16 %v1615, %v1614
      %v1639 = vpack.c.b16 %v1617, %v1616
      %v1640 = vpack.c.b16 %v1619, %v1618
      %v1641 = vpack.c.b16 %v1621, %v1620
      %v1642 = vpack.c.b16 %v1623, %v1622
      %v1643 = vpack.c.b16 %v1625, %v1624
      %v1663 = vsel %vm790, %v1453, 0
      %v1666 = vsel %vm790, %v1456, 0
      %v1669 = vsel %vm790, %v1459, 0
      %v1672 = vsel %vm790, %v1462, 0
      %v1675 = vsel %vm790, %v1465, 0
      %v1678 = vsel %vm790, %v1468, 0
      %v1681 = vsel %vm790, %v1471, 0
      %v1684 = vsel %vm790, %v1474, 0
      %v1687 = vsel %vm790, %v1477, 0
      %v1690 = vsel %vm790, %v1480, 0
      %v1693 = vsel %vm790, %v1483, 0
      %v1696 = vsel %vm790, %v1486, 0
      %v1699 = vsel %vm790, %v1489, 0
      %v1702 = vsel %vm790, %v1492, 0
      %v1705 = vsel %vm790, %v1495, 0
      %v1708 = vsel %vm790, %v1498, 0
      %v1711 = vsel %vm790, %v1501, 0
      %v1714 = vsel %vm790, %v1504, 0
      %v1717 = vsel %vm790, %v1507, 0
      %v1720 = vsel %vm790, %v1510, 0
      %v1723 = vsel %vm790, %v1513, 0
      %1725 = vmatpush.bf16.msra.mxu0 %v1633
      %1726 = vmatpush.bf16.msra.mxu0 %v1632
      %1727 = vmatpush.bf16.msra.mxu0 %v1631
      %1728 = vmatpush.bf16.msra.mxu0 %v1630
      %1729 = vmatpush.bf16.msra.mxu0 %v1629
      %1730 = vmatpush.bf16.msra.mxu0 %v1628
      %1731 = vmatpush.bf16.msra.mxu0 %v1627
      %1732 = vmatpush.bf16.msra.mxu0 %v1626
      %1733 = vmatmul.bf16.gmra.mxu0 %v1451
      %v1734 = vpop.f32.mrf.mxu0
      %v1735 = vadd.f32 %v1552, %v1734
      %v1736 = vpop.f32.mrf.mxu0
      %v1737 = vadd.f32 %v1552, %v1736
      %1738 = vmatmul.bf16.gmra.mxu0 %v1454
      %v1739 = vpop.f32.mrf.mxu0
      %v1740 = vadd.f32 %v1552, %v1739
      %v1741 = vpop.f32.mrf.mxu0
      %v1742 = vadd.f32 %v1552, %v1741
      %1743 = vmatmul.bf16.gmra.mxu0 %v1457
      %v1744 = vpop.f32.mrf.mxu0
      %v1745 = vadd.f32 %v1552, %v1744
      %v1746 = vpop.f32.mrf.mxu0
      %v1747 = vadd.f32 %v1552, %v1746
      %1748 = vmatmul.bf16.gmra.mxu0 %v1460
      %v1749 = vpop.f32.mrf.mxu0
      %v1750 = vadd.f32 %v1552, %v1749
      %v1751 = vpop.f32.mrf.mxu0
      %v1752 = vadd.f32 %v1552, %v1751
      %1753 = vmatmul.bf16.gmra.mxu0 %v1463
      %v1754 = vpop.f32.mrf.mxu0
      %v1755 = vadd.f32 %v1552, %v1754
      %v1756 = vpop.f32.mrf.mxu0
      %v1757 = vadd.f32 %v1552, %v1756
      %1758 = vmatmul.bf16.gmra.mxu0 %v1466
      %v1759 = vpop.f32.mrf.mxu0
      %v1760 = vadd.f32 %v1552, %v1759
      %v1761 = vpop.f32.mrf.mxu0
      %v1762 = vadd.f32 %v1552, %v1761
      %1763 = vmatmul.bf16.gmra.mxu0 %v1469
      %v1764 = vpop.f32.mrf.mxu0
      %v1765 = vadd.f32 %v1552, %v1764
      %v1766 = vpop.f32.mrf.mxu0
      %v1767 = vadd.f32 %v1552, %v1766
      %1768 = vmatmul.bf16.gmra.mxu0 %v1472
      %v1769 = vpop.f32.mrf.mxu0
      %v1770 = vadd.f32 %v1552, %v1769
      %v1771 = vpop.f32.mrf.mxu0
      %v1772 = vadd.f32 %v1552, %v1771
      %1773 = vmatmul.bf16.gmra.mxu0 %v1475
      %v1774 = vpop.f32.mrf.mxu0
      %v1775 = vadd.f32 %v1552, %v1774
      %v1776 = vpop.f32.mrf.mxu0
      %v1777 = vadd.f32 %v1552, %v1776
      %1778 = vmatmul.bf16.gmra.mxu0 %v1478
      %v1779 = vpop.f32.mrf.mxu0
      %v1780 = vadd.f32 %v1552, %v1779
      %v1781 = vpop.f32.mrf.mxu0
      %v1782 = vadd.f32 %v1552, %v1781
      %1783 = vmatmul.bf16.gmra.mxu0 %v1481
      %v1784 = vpop.f32.mrf.mxu0
      %v1785 = vadd.f32 %v1552, %v1784
      %v1786 = vpop.f32.mrf.mxu0
      %v1787 = vadd.f32 %v1552, %v1786
      %1788 = vmatmul.bf16.gmra.mxu0 %v1484
      %v1789 = vpop.f32.mrf.mxu0
      %v1790 = vadd.f32 %v1552, %v1789
      %v1791 = vpop.f32.mrf.mxu0
      %v1792 = vadd.f32 %v1552, %v1791
      %1793 = vmatmul.bf16.gmra.mxu0 %v1487
      %v1794 = vpop.f32.mrf.mxu0
      %v1795 = vadd.f32 %v1552, %v1794
      %v1796 = vpop.f32.mrf.mxu0
      %v1797 = vadd.f32 %v1552, %v1796
      %1798 = vmatmul.bf16.gmra.mxu0 %v1490
      %v1799 = vpop.f32.mrf.mxu0
      %v1800 = vadd.f32 %v1552, %v1799
      %v1801 = vpop.f32.mrf.mxu0
      %v1802 = vadd.f32 %v1552, %v1801
      %1803 = vmatmul.bf16.gmra.mxu0 %v1493
      %v1804 = vpop.f32.mrf.mxu0
      %v1805 = vadd.f32 %v1552, %v1804
      %v1806 = vpop.f32.mrf.mxu0
      %v1807 = vadd.f32 %v1552, %v1806
      %1808 = vmatmul.bf16.gmra.mxu0 %v1496
      %v1809 = vpop.f32.mrf.mxu0
      %v1810 = vadd.f32 %v1552, %v1809
      %v1811 = vpop.f32.mrf.mxu0
      %v1812 = vadd.f32 %v1552, %v1811
      %1813 = vmatmul.bf16.gmra.mxu0 %v1499
      %v1814 = vpop.f32.mrf.mxu0
      %v1815 = vadd.f32 %v1552, %v1814
      %v1816 = vpop.f32.mrf.mxu0
      %v1817 = vadd.f32 %v1552, %v1816
      %1818 = vmatmul.bf16.gmra.mxu0 %v1502
      %v1819 = vpop.f32.mrf.mxu0
      %v1820 = vadd.f32 %v1552, %v1819
      %v1821 = vpop.f32.mrf.mxu0
      %v1822 = vadd.f32 %v1552, %v1821
      %1823 = vmatmul.bf16.gmra.mxu0 %v1505
      %v1824 = vpop.f32.mrf.mxu0
      %v1825 = vadd.f32 %v1552, %v1824
      %v1826 = vpop.f32.mrf.mxu0
      %v1827 = vadd.f32 %v1552, %v1826
      %1828 = vmatmul.bf16.gmra.mxu0 %v1508
      %v1829 = vpop.f32.mrf.mxu0
      %v1830 = vadd.f32 %v1552, %v1829
      %v1831 = vpop.f32.mrf.mxu0
      %v1832 = vadd.f32 %v1552, %v1831
      %1833 = vmatmul.bf16.gmra.mxu0 %v1511
      %v1834 = vpop.f32.mrf.mxu0
      %v1835 = vadd.f32 %v1552, %v1834
      %v1836 = vpop.f32.mrf.mxu0
      %1837 = vdwg.mxu0
      %1838 = vmatpush.bf16.msra.mxu0 %v1641
      %1839 = vmatpush.bf16.msra.mxu0 %v1640
      %1840 = vmatpush.bf16.msra.mxu0 %v1639
      %1841 = vmatpush.bf16.msra.mxu0 %v1638
      %1842 = vmatpush.bf16.msra.mxu0 %v1637
      %1843 = vmatpush.bf16.msra.mxu0 %v1636
      %1844 = vmatpush.bf16.msra.mxu0 %v1635
      %1845 = vmatpush.bf16.msra.mxu0 %v1634
      %1846 = vmatmul.bf16.gmra.mxu0 %v1452
      %v1847 = vpop.f32.mrf.mxu0
      %v1848 = vadd.f32 %v1735, %v1847
      %v1849 = vpop.f32.mrf.mxu0
      %v1850 = vadd.f32 %v1737, %v1849
      %1851 = vmatmul.bf16.gmra.mxu0 %v1455
      %v1852 = vpop.f32.mrf.mxu0
      %v1853 = vadd.f32 %v1740, %v1852
      %v1854 = vpop.f32.mrf.mxu0
      %v1855 = vadd.f32 %v1742, %v1854
      %1856 = vmatmul.bf16.gmra.mxu0 %v1458
      %v1857 = vpop.f32.mrf.mxu0
      %v1858 = vadd.f32 %v1745, %v1857
      %v1859 = vpop.f32.mrf.mxu0
      %v1860 = vadd.f32 %v1747, %v1859
      %1861 = vmatmul.bf16.gmra.mxu0 %v1461
      %v1862 = vpop.f32.mrf.mxu0
      %v1863 = vadd.f32 %v1750, %v1862
      %v1864 = vpop.f32.mrf.mxu0
      %v1865 = vadd.f32 %v1752, %v1864
      %1866 = vmatmul.bf16.gmra.mxu0 %v1464
      %v1867 = vpop.f32.mrf.mxu0
      %v1868 = vadd.f32 %v1755, %v1867
      %v1869 = vpop.f32.mrf.mxu0
      %v1870 = vadd.f32 %v1757, %v1869
      %1871 = vmatmul.bf16.gmra.mxu0 %v1467
      %v1872 = vpop.f32.mrf.mxu0
      %v1873 = vadd.f32 %v1760, %v1872
      %v1874 = vpop.f32.mrf.mxu0
      %v1875 = vadd.f32 %v1762, %v1874
      %1876 = vmatmul.bf16.gmra.mxu0 %v1470
      %v1877 = vpop.f32.mrf.mxu0
      %v1878 = vadd.f32 %v1765, %v1877
      %v1879 = vpop.f32.mrf.mxu0
      %v1880 = vadd.f32 %v1767, %v1879
      %1881 = vmatmul.bf16.gmra.mxu0 %v1473
      %v1882 = vpop.f32.mrf.mxu0
      %v1883 = vadd.f32 %v1770, %v1882
      %v1884 = vpop.f32.mrf.mxu0
      %v1885 = vadd.f32 %v1772, %v1884
      %1886 = vmatmul.bf16.gmra.mxu0 %v1476
      %v1887 = vpop.f32.mrf.mxu0
      %v1888 = vadd.f32 %v1775, %v1887
      %v1889 = vpop.f32.mrf.mxu0
      %v1890 = vadd.f32 %v1777, %v1889
      %1891 = vmatmul.bf16.gmra.mxu0 %v1479
      %v1892 = vpop.f32.mrf.mxu0
      %v1893 = vadd.f32 %v1780, %v1892
      %v1894 = vpop.f32.mrf.mxu0
      %v1895 = vadd.f32 %v1782, %v1894
      %1896 = vmatmul.bf16.gmra.mxu0 %v1482
      %v1897 = vpop.f32.mrf.mxu0
      %v1898 = vadd.f32 %v1785, %v1897
      %v1899 = vpop.f32.mrf.mxu0
      %v1900 = vadd.f32 %v1787, %v1899
      %1901 = vmatmul.bf16.gmra.mxu0 %v1485
      %v1902 = vpop.f32.mrf.mxu0
      %v1903 = vadd.f32 %v1790, %v1902
      %v1904 = vpop.f32.mrf.mxu0
      %v1905 = vadd.f32 %v1792, %v1904
      %1906 = vmatmul.bf16.gmra.mxu0 %v1488
      %v1907 = vpop.f32.mrf.mxu0
      %v1908 = vadd.f32 %v1795, %v1907
      %v1909 = vpop.f32.mrf.mxu0
      %v1910 = vadd.f32 %v1797, %v1909
      %1911 = vmatmul.bf16.gmra.mxu0 %v1491
      %v1912 = vpop.f32.mrf.mxu0
      %v1913 = vadd.f32 %v1800, %v1912
      %v1914 = vpop.f32.mrf.mxu0
      %v1915 = vadd.f32 %v1802, %v1914
      %1916 = vmatmul.bf16.gmra.mxu0 %v1494
      %v1917 = vpop.f32.mrf.mxu0
      %v1918 = vadd.f32 %v1805, %v1917
      %v1919 = vpop.f32.mrf.mxu0
      %v1920 = vadd.f32 %v1807, %v1919
      %1921 = vmatmul.bf16.gmra.mxu0 %v1497
      %v1922 = vpop.f32.mrf.mxu0
      %v1923 = vadd.f32 %v1810, %v1922
      %v1924 = vpop.f32.mrf.mxu0
      %v1925 = vadd.f32 %v1812, %v1924
      %1926 = vmatmul.bf16.gmra.mxu0 %v1500
      %v1927 = vpop.f32.mrf.mxu0
      %v1928 = vadd.f32 %v1815, %v1927
      %v1929 = vpop.f32.mrf.mxu0
      %v1930 = vadd.f32 %v1817, %v1929
      %1931 = vmatmul.bf16.gmra.mxu0 %v1503
      %v1932 = vpop.f32.mrf.mxu0
      %v1933 = vadd.f32 %v1820, %v1932
      %v1934 = vpop.f32.mrf.mxu0
      %v1935 = vadd.f32 %v1822, %v1934
      %1936 = vmatmul.bf16.gmra.mxu0 %v1506
      %v1937 = vpop.f32.mrf.mxu0
      %v1938 = vadd.f32 %v1825, %v1937
      %v1939 = vpop.f32.mrf.mxu0
      %v1940 = vadd.f32 %v1827, %v1939
      %1941 = vmatmul.bf16.gmra.mxu0 %v1509
      %v1942 = vpop.f32.mrf.mxu0
      %v1943 = vadd.f32 %v1830, %v1942
      %v1944 = vpop.f32.mrf.mxu0
      %v1945 = vadd.f32 %v1832, %v1944
      %1946 = vmatmul.bf16.gmra.mxu0 %v1512
      %v1947 = vpop.f32.mrf.mxu0
      %v1948 = vadd.f32 %v1835, %v1947
      %v1949 = vpop.f32.mrf.mxu0
      %1950 = vdwg.mxu0
      %1951 = vmatpush.bf16.msra.mxu0 0
      %1952 = vmatpush.bf16.msra.mxu0 0
      %1953 = vmatpush.bf16.msra.mxu0 0
      %1954 = vmatpush.bf16.msra.mxu0 0
      %1955 = vmatpush.bf16.msra.mxu0 0
      %1956 = vmatpush.bf16.msra.mxu0 0
      %1957 = vmatpush.bf16.msra.mxu0 %v1643
      %1958 = vmatpush.bf16.msra.mxu0 %v1642
      %1959 = vmatmul.bf16.gmra.mxu0 %v1663
      %v1960 = vpop.f32.mrf.mxu0
      %v1961 = vadd.f32 %v1848, %v1960
      %v1962 = vpop.f32.mrf.mxu0
      %v1963 = vadd.f32 %v1850, %v1962
      %1964 = vmatmul.bf16.gmra.mxu0 %v1666
      %v1965 = vpop.f32.mrf.mxu0
      %v1966 = vadd.f32 %v1853, %v1965
      %v1967 = vpop.f32.mrf.mxu0
      %v1968 = vadd.f32 %v1855, %v1967
      %1969 = vmatmul.bf16.gmra.mxu0 %v1669
      %v1970 = vpop.f32.mrf.mxu0
      %v1971 = vadd.f32 %v1858, %v1970
      %v1972 = vpop.f32.mrf.mxu0
      %v1973 = vadd.f32 %v1860, %v1972
      %1974 = vmatmul.bf16.gmra.mxu0 %v1672
      %v1975 = vpop.f32.mrf.mxu0
      %v1976 = vadd.f32 %v1863, %v1975
      %v1977 = vpop.f32.mrf.mxu0
      %v1978 = vadd.f32 %v1865, %v1977
      %1979 = vmatmul.bf16.gmra.mxu0 %v1675
      %v1980 = vpop.f32.mrf.mxu0
      %v1981 = vadd.f32 %v1868, %v1980
      %v1982 = vpop.f32.mrf.mxu0
      %v1983 = vadd.f32 %v1870, %v1982
      %1984 = vmatmul.bf16.gmra.mxu0 %v1678
      %v1985 = vpop.f32.mrf.mxu0
      %v1986 = vadd.f32 %v1873, %v1985
      %v1987 = vpop.f32.mrf.mxu0
      %v1988 = vadd.f32 %v1875, %v1987
      %1989 = vmatmul.bf16.gmra.mxu0 %v1681
      %v1990 = vpop.f32.mrf.mxu0
      %v1991 = vadd.f32 %v1878, %v1990
      %v1992 = vpop.f32.mrf.mxu0
      %v1993 = vadd.f32 %v1880, %v1992
      %1994 = vmatmul.bf16.gmra.mxu0 %v1684
      %v1995 = vpop.f32.mrf.mxu0
      %v1996 = vadd.f32 %v1883, %v1995
      %v1997 = vpop.f32.mrf.mxu0
      %v1998 = vadd.f32 %v1885, %v1997
      %1999 = vmatmul.bf16.gmra.mxu0 %v1687
      %v2000 = vpop.f32.mrf.mxu0
      %v2001 = vadd.f32 %v1888, %v2000
      %v2002 = vpop.f32.mrf.mxu0
      %v2003 = vadd.f32 %v1890, %v2002
      %2004 = vmatmul.bf16.gmra.mxu0 %v1690
      %v2005 = vpop.f32.mrf.mxu0
      %v2006 = vadd.f32 %v1893, %v2005
      %v2007 = vpop.f32.mrf.mxu0
      %v2008 = vadd.f32 %v1895, %v2007
      %2009 = vmatmul.bf16.gmra.mxu0 %v1693
      %v2010 = vpop.f32.mrf.mxu0
      %v2011 = vadd.f32 %v1898, %v2010
      %v2012 = vpop.f32.mrf.mxu0
      %v2013 = vadd.f32 %v1900, %v2012
      %2014 = vmatmul.bf16.gmra.mxu0 %v1696
      %v2015 = vpop.f32.mrf.mxu0
      %v2016 = vadd.f32 %v1903, %v2015
      %v2017 = vpop.f32.mrf.mxu0
      %v2018 = vadd.f32 %v1905, %v2017
      %2019 = vmatmul.bf16.gmra.mxu0 %v1699
      %v2020 = vpop.f32.mrf.mxu0
      %v2021 = vadd.f32 %v1908, %v2020
      %v2022 = vpop.f32.mrf.mxu0
      %v2023 = vadd.f32 %v1910, %v2022
      %2024 = vmatmul.bf16.gmra.mxu0 %v1702
      %v2025 = vpop.f32.mrf.mxu0
      %v2026 = vadd.f32 %v1913, %v2025
      %v2027 = vpop.f32.mrf.mxu0
      %v2028 = vadd.f32 %v1915, %v2027
      %2029 = vmatmul.bf16.gmra.mxu0 %v1705
      %v2030 = vpop.f32.mrf.mxu0
      %v2031 = vadd.f32 %v1918, %v2030
      %v2032 = vpop.f32.mrf.mxu0
      %v2033 = vadd.f32 %v1920, %v2032
      %2034 = vmatmul.bf16.gmra.mxu0 %v1708
      %v2035 = vpop.f32.mrf.mxu0
      %v2036 = vadd.f32 %v1923, %v2035
      %v2037 = vpop.f32.mrf.mxu0
      %v2038 = vadd.f32 %v1925, %v2037
      %2039 = vmatmul.bf16.gmra.mxu0 %v1711
      %v2040 = vpop.f32.mrf.mxu0
      %v2041 = vadd.f32 %v1928, %v2040
      %v2042 = vpop.f32.mrf.mxu0
      %v2043 = vadd.f32 %v1930, %v2042
      %2044 = vmatmul.bf16.gmra.mxu0 %v1714
      %v2045 = vpop.f32.mrf.mxu0
      %v2046 = vadd.f32 %v1933, %v2045
      %v2047 = vpop.f32.mrf.mxu0
      %v2048 = vadd.f32 %v1935, %v2047
      %2049 = vmatmul.bf16.gmra.mxu0 %v1717
      %v2050 = vpop.f32.mrf.mxu0
      %v2051 = vadd.f32 %v1938, %v2050
      %v2052 = vpop.f32.mrf.mxu0
      %v2053 = vadd.f32 %v1940, %v2052
      %2054 = vmatmul.bf16.gmra.mxu0 %v1720
      %v2055 = vpop.f32.mrf.mxu0
      %v2056 = vadd.f32 %v1943, %v2055
      %v2057 = vpop.f32.mrf.mxu0
      %v2058 = vadd.f32 %v1945, %v2057
      %2059 = vmatmul.bf16.gmra.mxu0 %v1723
      %v2060 = vpop.f32.mrf.mxu0
      %v2061 = vadd.f32 %v1948, %v2060
      %v2062 = vpop.f32.mrf.mxu0
      %2063 = vdwg.mxu0
      %v2064 = vmax.f32 %v1961, 0.0
      %v2065 = vmax.f32 %v1963, 0.0
      %v2066 = vmax.f32 %v1966, 0.0
      %v2067 = vmax.f32 %v1968, 0.0
      %v2068 = vmax.f32 %v1971, 0.0
      %v2069 = vmax.f32 %v1973, 0.0
      %v2070 = vmax.f32 %v1976, 0.0
      %v2071 = vmax.f32 %v1978, 0.0
      %v2072 = vmax.f32 %v1981, 0.0
      %v2073 = vmax.f32 %v1983, 0.0
      %v2074 = vmax.f32 %v1986, 0.0
      %v2075 = vmax.f32 %v1988, 0.0
      %v2076 = vmax.f32 %v1991, 0.0
      %v2077 = vmax.f32 %v1993, 0.0
      %v2078 = vmax.f32 %v1996, 0.0
      %v2079 = vmax.f32 %v1998, 0.0
      %v2080 = vmax.f32 %v2001, 0.0
      %v2081 = vmax.f32 %v2003, 0.0
      %v2082 = vmax.f32 %v2006, 0.0
      %v2083 = vmax.f32 %v2008, 0.0
      %v2084 = vmax.f32 %v2011, 0.0
      %v2085 = vmax.f32 %v2013, 0.0
      %v2086 = vmax.f32 %v2016, 0.0
      %v2087 = vmax.f32 %v2018, 0.0
      %v2088 = vmax.f32 %v2021, 0.0
      %v2089 = vmax.f32 %v2023, 0.0
      %v2090 = vmax.f32 %v2026, 0.0
      %v2091 = vmax.f32 %v2028, 0.0
      %v2092 = vmax.f32 %v2031, 0.0
      %v2093 = vmax.f32 %v2033, 0.0
      %v2094 = vmax.f32 %v2036, 0.0
      %v2095 = vmax.f32 %v2038, 0.0
      %v2096 = vmax.f32 %v2041, 0.0
      %v2097 = vmax.f32 %v2043, 0.0
      %v2098 = vmax.f32 %v2046, 0.0
      %v2099 = vmax.f32 %v2048, 0.0
      %v2100 = vmax.f32 %v2051, 0.0
      %v2101 = vmax.f32 %v2053, 0.0
      %v2102 = vmax.f32 %v2056, 0.0
      %v2103 = vmax.f32 %v2058, 0.0
      %v2104 = vmax.f32 %v2061, 0.0
      %v2105 = vld [vmem:[%s1] sm:$0xff]
      %v2106 = vld [vmem:[%s1 + $0x8] sm:$0xff]
      %v2107 = vld [vmem:[%s1 + $0x10] sm:$0xff]
      %v2108 = vld [vmem:[%s1 + $0x18] sm:$0xff]
      %v2109 = vld [vmem:[%s1 + $0x20] sm:$0xff]
      %v2110 = vld [vmem:[%s1 + $0x28] sm:$0xff]
      %v2111 = vld [vmem:[%s1 + $0x30] sm:$0xff]
      %v2112 = vld [vmem:[%s1 + $0x38] sm:$0xff]
      %v2113 = vld [vmem:[%s1 + $0x40] sm:$0xff]
      %v2114 = vld [vmem:[%s1 + $0x48] sm:$0xff]
      %v2115 = vld [vmem:[%s1 + $0x50] sm:$0xff]
      %v2116 = vld [vmem:[%s1 + $0x58] sm:$0xff]
      %v2117 = vld [vmem:[%s1 + $0x60] sm:$0xff]
      %v2118 = vld [vmem:[%s1 + $0x68] sm:$0xff]
      %v2119 = vld [vmem:[%s1 + $0x70] sm:$0xff]
      %v2120 = vld [vmem:[%s1 + $0x78] sm:$0xff]
      %v2121 = vld [vmem:[%s1 + $0x80] sm:$0xff]
      %v2122 = vld [vmem:[%s1 + $0x88] sm:$0xff]
      %v2123 = vld [vmem:[%s1 + $0x90] sm:$0xff]
      %v2124 = vld [vmem:[%s1 + $0x98] sm:$0xff]
      %v2125 = vld [vmem:[%s1 + $0xa0] sm:$0xff]
      %v2126 = vld [vmem:[%s1 + $0xa8] sm:$0xff]
      %v2127 = vld [vmem:[%s1 + $0xb0] sm:$0xff]
      %v2128 = vld [vmem:[%s1 + $0xb8] sm:$0xff]
      %v2129 = vld [vmem:[%s1 + $0xc0] sm:$0xff]
      %v2130 = vld [vmem:[%s1 + $0xc8] sm:$0xff]
      %v2131 = vld [vmem:[%s1 + $0xd0] sm:$0xff]
      %v2132 = vld [vmem:[%s1 + $0xd8] sm:$0xff]
      %v2133 = vld [vmem:[%s1 + $0xe0] sm:$0xff]
      %v2134 = vld [vmem:[%s1 + $0xe8] sm:$0xff]
      %v2135 = vld [vmem:[%s1 + $0xf0] sm:$0xff]
      %v2136 = vld [vmem:[%s1 + $0xf8] sm:$0xff]
      %v2137 = vld [vmem:[%s1 + $0x100] sm:$0xff]
      %v2138 = vld [vmem:[%s1 + $0x108] sm:$0xff]
      %v2139 = vld [vmem:[%s1 + $0x110] sm:$0xff]
      %v2140 = vld [vmem:[%s1 + $0x118] sm:$0xff]
      %v2141 = vld [vmem:[%s1 + $0x120] sm:$0xff]
      %v2142 = vld [vmem:[%s1 + $0x128] sm:$0xff]
      %v2143 = vld [vmem:[%s1 + $0x130] sm:$0xff]
      %v2144 = vld [vmem:[%s1 + $0x138] sm:$0xff]
      %v2145 = vld [vmem:[%s1 + $0x140] sm:$0xff]
      %2147 = vset.pattern.permute.xlu0 0
      %2148 = vperm.xlu0 %2147, %v2105
      %v2149 = vpop.permute.xlu0 %2148
      %2152 = vset.pattern.permute.xlu0 0
      %2153 = vperm.xlu0 %2152, %v2106
      %v2154 = vpop.permute.xlu0 %2153
      %2157 = vset.pattern.permute.xlu0 0
      %2158 = vperm.xlu0 %2157, %v2107
      %v2159 = vpop.permute.xlu0 %2158
      %2162 = vset.pattern.permute.xlu0 0
      %2163 = vperm.xlu0 %2162, %v2108
      %v2164 = vpop.permute.xlu0 %2163
      %2167 = vset.pattern.permute.xlu0 0
      %2168 = vperm.xlu0 %2167, %v2109
      %v2169 = vpop.permute.xlu0 %2168
      %2172 = vset.pattern.permute.xlu0 0
      %2173 = vperm.xlu0 %2172, %v2110
      %v2174 = vpop.permute.xlu0 %2173
      %2177 = vset.pattern.permute.xlu0 0
      %2178 = vperm.xlu0 %2177, %v2111
      %v2179 = vpop.permute.xlu0 %2178
      %2182 = vset.pattern.permute.xlu0 0
      %2183 = vperm.xlu0 %2182, %v2112
      %v2184 = vpop.permute.xlu0 %2183
      %2187 = vset.pattern.permute.xlu0 0
      %2188 = vperm.xlu0 %2187, %v2113
      %v2189 = vpop.permute.xlu0 %2188
      %2192 = vset.pattern.permute.xlu0 0
      %2193 = vperm.xlu0 %2192, %v2114
      %v2194 = vpop.permute.xlu0 %2193
      %2197 = vset.pattern.permute.xlu0 0
      %2198 = vperm.xlu0 %2197, %v2115
      %v2199 = vpop.permute.xlu0 %2198
      %2202 = vset.pattern.permute.xlu0 0
      %2203 = vperm.xlu0 %2202, %v2116
      %v2204 = vpop.permute.xlu0 %2203
      %2207 = vset.pattern.permute.xlu0 0
      %2208 = vperm.xlu0 %2207, %v2117
      %v2209 = vpop.permute.xlu0 %2208
      %2212 = vset.pattern.permute.xlu0 0
      %2213 = vperm.xlu0 %2212, %v2118
      %v2214 = vpop.permute.xlu0 %2213
      %2217 = vset.pattern.permute.xlu0 0
      %2218 = vperm.xlu0 %2217, %v2119
      %v2219 = vpop.permute.xlu0 %2218
      %2222 = vset.pattern.permute.xlu0 0
      %2223 = vperm.xlu0 %2222, %v2120
      %v2224 = vpop.permute.xlu0 %2223
      %2227 = vset.pattern.permute.xlu0 0
      %2228 = vperm.xlu0 %2227, %v2121
      %v2229 = vpop.permute.xlu0 %2228
      %2232 = vset.pattern.permute.xlu0 0
      %2233 = vperm.xlu0 %2232, %v2122
      %v2234 = vpop.permute.xlu0 %2233
      %2237 = vset.pattern.permute.xlu0 0
      %2238 = vperm.xlu0 %2237, %v2123
      %v2239 = vpop.permute.xlu0 %2238
      %2242 = vset.pattern.permute.xlu0 0
      %2243 = vperm.xlu0 %2242, %v2124
      %v2244 = vpop.permute.xlu0 %2243
      %2247 = vset.pattern.permute.xlu0 0
      %2248 = vperm.xlu0 %2247, %v2125
      %v2249 = vpop.permute.xlu0 %2248
      %2252 = vset.pattern.permute.xlu0 0
      %2253 = vperm.xlu0 %2252, %v2126
      %v2254 = vpop.permute.xlu0 %2253
      %2257 = vset.pattern.permute.xlu0 0
      %2258 = vperm.xlu0 %2257, %v2127
      %v2259 = vpop.permute.xlu0 %2258
      %2262 = vset.pattern.permute.xlu0 0
      %2263 = vperm.xlu0 %2262, %v2128
      %v2264 = vpop.permute.xlu0 %2263
      %2267 = vset.pattern.permute.xlu0 0
      %2268 = vperm.xlu0 %2267, %v2129
      %v2269 = vpop.permute.xlu0 %2268
      %2272 = vset.pattern.permute.xlu0 0
      %2273 = vperm.xlu0 %2272, %v2130
      %v2274 = vpop.permute.xlu0 %2273
      %2277 = vset.pattern.permute.xlu0 0
      %2278 = vperm.xlu0 %2277, %v2131
      %v2279 = vpop.permute.xlu0 %2278
      %2282 = vset.pattern.permute.xlu0 0
      %2283 = vperm.xlu0 %2282, %v2132
      %v2284 = vpop.permute.xlu0 %2283
      %2287 = vset.pattern.permute.xlu0 0
      %2288 = vperm.xlu0 %2287, %v2133
      %v2289 = vpop.permute.xlu0 %2288
      %2292 = vset.pattern.permute.xlu0 0
      %2293 = vperm.xlu0 %2292, %v2134
      %v2294 = vpop.permute.xlu0 %2293
      %2297 = vset.pattern.permute.xlu0 0
      %2298 = vperm.xlu0 %2297, %v2135
      %v2299 = vpop.permute.xlu0 %2298
      %2302 = vset.pattern.permute.xlu0 0
      %2303 = vperm.xlu0 %2302, %v2136
      %v2304 = vpop.permute.xlu0 %2303
      %2307 = vset.pattern.permute.xlu0 0
      %2308 = vperm.xlu0 %2307, %v2137
      %v2309 = vpop.permute.xlu0 %2308
      %2312 = vset.pattern.permute.xlu0 0
      %2313 = vperm.xlu0 %2312, %v2138
      %v2314 = vpop.permute.xlu0 %2313
      %2317 = vset.pattern.permute.xlu0 0
      %2318 = vperm.xlu0 %2317, %v2139
      %v2319 = vpop.permute.xlu0 %2318
      %2322 = vset.pattern.permute.xlu0 0
      %2323 = vperm.xlu0 %2322, %v2140
      %v2324 = vpop.permute.xlu0 %2323
      %2327 = vset.pattern.permute.xlu0 0
      %2328 = vperm.xlu0 %2327, %v2141
      %v2329 = vpop.permute.xlu0 %2328
      %2332 = vset.pattern.permute.xlu0 0
      %2333 = vperm.xlu0 %2332, %v2142
      %v2334 = vpop.permute.xlu0 %2333
      %2337 = vset.pattern.permute.xlu0 0
      %2338 = vperm.xlu0 %2337, %v2143
      %v2339 = vpop.permute.xlu0 %2338
      %2342 = vset.pattern.permute.xlu0 0
      %2343 = vperm.xlu0 %2342, %v2144
      %v2344 = vpop.permute.xlu0 %2343
      %2347 = vset.pattern.permute.xlu0 0
      %2348 = vperm.xlu0 %2347, %v2145
      %v2349 = vpop.permute.xlu0 %2348
      %v2351 = vmul.f32 %v2064, %v2149
      %v2352 = vmul.f32 %v2065, %v2154
      %v2353 = vmul.f32 %v2066, %v2159
      %v2354 = vmul.f32 %v2067, %v2164
      %v2355 = vmul.f32 %v2068, %v2169
      %v2356 = vmul.f32 %v2069, %v2174
      %v2357 = vmul.f32 %v2070, %v2179
      %v2358 = vmul.f32 %v2071, %v2184
      %v2359 = vmul.f32 %v2072, %v2189
      %v2360 = vmul.f32 %v2073, %v2194
      %v2361 = vmul.f32 %v2074, %v2199
      %v2362 = vmul.f32 %v2075, %v2204
      %v2363 = vmul.f32 %v2076, %v2209
      %v2364 = vmul.f32 %v2077, %v2214
      %v2365 = vmul.f32 %v2078, %v2219
      %v2366 = vmul.f32 %v2079, %v2224
      %v2367 = vmul.f32 %v2080, %v2229
      %v2368 = vmul.f32 %v2081, %v2234
      %v2369 = vmul.f32 %v2082, %v2239
      %v2370 = vmul.f32 %v2083, %v2244
      %v2371 = vmul.f32 %v2084, %v2249
      %v2372 = vmul.f32 %v2085, %v2254
      %v2373 = vmul.f32 %v2086, %v2259
      %v2374 = vmul.f32 %v2087, %v2264
      %v2375 = vmul.f32 %v2088, %v2269
      %v2376 = vmul.f32 %v2089, %v2274
      %v2377 = vmul.f32 %v2090, %v2279
      %v2378 = vmul.f32 %v2091, %v2284
      %v2379 = vmul.f32 %v2092, %v2289
      %v2380 = vmul.f32 %v2093, %v2294
      %v2381 = vmul.f32 %v2094, %v2299
      %v2382 = vmul.f32 %v2095, %v2304
      %v2383 = vmul.f32 %v2096, %v2309
      %v2384 = vmul.f32 %v2097, %v2314
      %v2385 = vmul.f32 %v2098, %v2319
      %v2386 = vmul.f32 %v2099, %v2324
      %v2387 = vmul.f32 %v2100, %v2329
      %v2388 = vmul.f32 %v2101, %v2334
      %v2389 = vmul.f32 %v2102, %v2339
      %v2390 = vmul.f32 %v2103, %v2344
      %v2391 = vmul.f32 %v2104, %v2349
      %v2392 = vrot.slane %v2351, 7
      %v2393 = vrot.slane %v2352, 7
      %v2394 = vrot.slane %v2353, 7
      %v2395 = vrot.slane %v2354, 7
      %v2396 = vrot.slane %v2355, 7
      %v2397 = vrot.slane %v2356, 7
      %v2398 = vrot.slane %v2357, 7
      %v2399 = vrot.slane %v2358, 7
      %v2400 = vrot.slane %v2359, 7
      %v2401 = vrot.slane %v2360, 7
      %v2402 = vrot.slane %v2361, 7
      %v2403 = vrot.slane %v2362, 7
      %v2404 = vrot.slane %v2363, 7
      %v2405 = vrot.slane %v2364, 7
      %v2406 = vrot.slane %v2365, 7
      %v2407 = vrot.slane %v2366, 7
      %v2408 = vrot.slane %v2367, 7
      %v2409 = vrot.slane %v2368, 7
      %v2410 = vrot.slane %v2369, 7
      %v2411 = vrot.slane %v2370, 7
      %v2412 = vrot.slane %v2371, 7
      %v2413 = vrot.slane %v2372, 7
      %v2414 = vrot.slane %v2373, 7
      %v2415 = vrot.slane %v2374, 7
      %v2416 = vrot.slane %v2375, 7
      %v2417 = vrot.slane %v2376, 7
      %v2418 = vrot.slane %v2377, 7
      %v2419 = vrot.slane %v2378, 7
      %v2420 = vrot.slane %v2379, 7
      %v2421 = vrot.slane %v2380, 7
      %v2422 = vrot.slane %v2381, 7
      %v2423 = vrot.slane %v2382, 7
      %v2424 = vrot.slane %v2383, 7
      %v2425 = vrot.slane %v2384, 7
      %v2426 = vrot.slane %v2385, 7
      %v2427 = vrot.slane %v2386, 7
      %v2428 = vrot.slane %v2387, 7
      %v2429 = vrot.slane %v2388, 7
      %v2430 = vrot.slane %v2389, 7
      %v2431 = vrot.slane %v2390, 7
      %v2432 = vrot.slane %v2391, 7
      %v2433 = vsel %vm337, %v2431, %v2432
      %v2434 = vsel %vm337, %v2430, %v2431
      %v2435 = vsel %vm337, %v2429, %v2430
      %v2436 = vsel %vm337, %v2428, %v2429
      %v2437 = vsel %vm337, %v2427, %v2428
      %v2438 = vsel %vm337, %v2426, %v2427
      %v2439 = vsel %vm337, %v2425, %v2426
      %v2440 = vsel %vm337, %v2424, %v2425
      %v2441 = vsel %vm337, %v2423, %v2424
      %v2442 = vsel %vm337, %v2422, %v2423
      %v2443 = vsel %vm337, %v2421, %v2422
      %v2444 = vsel %vm337, %v2420, %v2421
      %v2445 = vsel %vm337, %v2419, %v2420
      %v2446 = vsel %vm337, %v2418, %v2419
      %v2447 = vsel %vm337, %v2417, %v2418
      %v2448 = vsel %vm337, %v2416, %v2417
      %v2449 = vsel %vm337, %v2415, %v2416
      %v2450 = vsel %vm337, %v2414, %v2415
      %v2451 = vsel %vm337, %v2413, %v2414
      %v2452 = vsel %vm337, %v2412, %v2413
      %v2453 = vsel %vm337, %v2411, %v2412
      %v2454 = vsel %vm337, %v2410, %v2411
      %v2455 = vsel %vm337, %v2409, %v2410
      %v2456 = vsel %vm337, %v2408, %v2409
      %v2457 = vsel %vm337, %v2407, %v2408
      %v2458 = vsel %vm337, %v2406, %v2407
      %v2459 = vsel %vm337, %v2405, %v2406
      %v2460 = vsel %vm337, %v2404, %v2405
      %v2461 = vsel %vm337, %v2403, %v2404
      %v2462 = vsel %vm337, %v2402, %v2403
      %v2463 = vsel %vm337, %v2401, %v2402
      %v2464 = vsel %vm337, %v2400, %v2401
      %v2465 = vsel %vm337, %v2399, %v2400
      %v2466 = vsel %vm337, %v2398, %v2399
      %v2467 = vsel %vm337, %v2397, %v2398
      %v2468 = vsel %vm337, %v2396, %v2397
      %v2469 = vsel %vm337, %v2395, %v2396
      %v2470 = vsel %vm337, %v2394, %v2395
      %v2471 = vsel %vm337, %v2393, %v2394
      %v2472 = vsel %vm337, %v2392, %v2393
      %v2473 = vsel %vm337, %v2432, %v2392
      %v2474 = vrot.slane %v2351, 1
      %v2475 = vrot.slane %v2352, 1
      %v2476 = vrot.slane %v2353, 1
      %v2477 = vrot.slane %v2354, 1
      %v2478 = vrot.slane %v2355, 1
      %v2479 = vrot.slane %v2356, 1
      %v2480 = vrot.slane %v2357, 1
      %v2481 = vrot.slane %v2358, 1
      %v2482 = vrot.slane %v2359, 1
      %v2483 = vrot.slane %v2360, 1
      %v2484 = vrot.slane %v2361, 1
      %v2485 = vrot.slane %v2362, 1
      %v2486 = vrot.slane %v2363, 1
      %v2487 = vrot.slane %v2364, 1
      %v2488 = vrot.slane %v2365, 1
      %v2489 = vrot.slane %v2366, 1
      %v2490 = vrot.slane %v2367, 1
      %v2491 = vrot.slane %v2368, 1
      %v2492 = vrot.slane %v2369, 1
      %v2493 = vrot.slane %v2370, 1
      %v2494 = vrot.slane %v2371, 1
      %v2495 = vrot.slane %v2372, 1
      %v2496 = vrot.slane %v2373, 1
      %v2497 = vrot.slane %v2374, 1
      %v2498 = vrot.slane %v2375, 1
      %v2499 = vrot.slane %v2376, 1
      %v2500 = vrot.slane %v2377, 1
      %v2501 = vrot.slane %v2378, 1
      %v2502 = vrot.slane %v2379, 1
      %v2503 = vrot.slane %v2380, 1
      %v2504 = vrot.slane %v2381, 1
      %v2505 = vrot.slane %v2382, 1
      %v2506 = vrot.slane %v2383, 1
      %v2507 = vrot.slane %v2384, 1
      %v2508 = vrot.slane %v2385, 1
      %v2509 = vrot.slane %v2386, 1
      %v2510 = vrot.slane %v2387, 1
      %v2511 = vrot.slane %v2388, 1
      %v2512 = vrot.slane %v2389, 1
      %v2513 = vrot.slane %v2390, 1
      %v2514 = vrot.slane %v2391, 1
      %v2515 = vsel %vm420, %v2513, %v2514
      %v2516 = vsel %vm420, %v2512, %v2513
      %v2517 = vsel %vm420, %v2511, %v2512
      %v2518 = vsel %vm420, %v2510, %v2511
      %v2519 = vsel %vm420, %v2509, %v2510
      %v2520 = vsel %vm420, %v2508, %v2509
      %v2521 = vsel %vm420, %v2507, %v2508
      %v2522 = vsel %vm420, %v2506, %v2507
      %v2523 = vsel %vm420, %v2505, %v2506
      %v2524 = vsel %vm420, %v2504, %v2505
      %v2525 = vsel %vm420, %v2503, %v2504
      %v2526 = vsel %vm420, %v2502, %v2503
      %v2527 = vsel %vm420, %v2501, %v2502
      %v2528 = vsel %vm420, %v2500, %v2501
      %v2529 = vsel %vm420, %v2499, %v2500
      %v2530 = vsel %vm420, %v2498, %v2499
      %v2531 = vsel %vm420, %v2497, %v2498
      %v2532 = vsel %vm420, %v2496, %v2497
      %v2533 = vsel %vm420, %v2495, %v2496
      %v2534 = vsel %vm420, %v2494, %v2495
      %v2535 = vsel %vm420, %v2493, %v2494
      %v2536 = vsel %vm420, %v2492, %v2493
      %v2537 = vsel %vm420, %v2491, %v2492
      %v2538 = vsel %vm420, %v2490, %v2491
      %v2539 = vsel %vm420, %v2489, %v2490
      %v2540 = vsel %vm420, %v2488, %v2489
      %v2541 = vsel %vm420, %v2487, %v2488
      %v2542 = vsel %vm420, %v2486, %v2487
      %v2543 = vsel %vm420, %v2485, %v2486
      %v2544 = vsel %vm420, %v2484, %v2485
      %v2545 = vsel %vm420, %v2483, %v2484
      %v2546 = vsel %vm420, %v2482, %v2483
      %v2547 = vsel %vm420, %v2481, %v2482
      %v2548 = vsel %vm420, %v2480, %v2481
      %v2549 = vsel %vm420, %v2479, %v2480
      %v2550 = vsel %vm420, %v2478, %v2479
      %v2551 = vsel %vm420, %v2477, %v2478
      %v2552 = vsel %vm420, %v2476, %v2477
      %v2553 = vsel %vm420, %v2475, %v2476
      %v2554 = vsel %vm420, %v2474, %v2475
      %v2555 = vsel %vm420, %v2514, %v2474
      %2597 = vrot.lane.b32.xlu0 %v2351, 32
      %v2598 = vpop.permute.xlu0 %2597
      %2599 = vrot.lane.b32.xlu0 %v2352, 32
      %v2600 = vpop.permute.xlu0 %2599
      %2601 = vrot.lane.b32.xlu0 %v2353, 32
      %v2602 = vpop.permute.xlu0 %2601
      %2603 = vrot.lane.b32.xlu0 %v2354, 32
      %v2604 = vpop.permute.xlu0 %2603
      %2605 = vrot.lane.b32.xlu0 %v2355, 32
      %v2606 = vpop.permute.xlu0 %2605
      %2607 = vrot.lane.b32.xlu0 %v2356, 32
      %v2608 = vpop.permute.xlu0 %2607
      %2609 = vrot.lane.b32.xlu0 %v2357, 32
      %v2610 = vpop.permute.xlu0 %2609
      %2611 = vrot.lane.b32.xlu0 %v2358, 32
      %v2612 = vpop.permute.xlu0 %2611
      %2613 = vrot.lane.b32.xlu0 %v2359, 32
      %v2614 = vpop.permute.xlu0 %2613
      %2615 = vrot.lane.b32.xlu0 %v2360, 32
      %v2616 = vpop.permute.xlu0 %2615
      %2617 = vrot.lane.b32.xlu0 %v2361, 32
      %v2618 = vpop.permute.xlu0 %2617
      %2619 = vrot.lane.b32.xlu0 %v2362, 32
      %v2620 = vpop.permute.xlu0 %2619
      %2621 = vrot.lane.b32.xlu0 %v2363, 32
      %v2622 = vpop.permute.xlu0 %2621
      %2623 = vrot.lane.b32.xlu0 %v2364, 32
      %v2624 = vpop.permute.xlu0 %2623
      %2625 = vrot.lane.b32.xlu0 %v2365, 32
      %v2626 = vpop.permute.xlu0 %2625
      %2627 = vrot.lane.b32.xlu0 %v2366, 32
      %v2628 = vpop.permute.xlu0 %2627
      %2629 = vrot.lane.b32.xlu0 %v2367, 32
      %v2630 = vpop.permute.xlu0 %2629
      %2631 = vrot.lane.b32.xlu0 %v2368, 32
      %v2632 = vpop.permute.xlu0 %2631
      %2633 = vrot.lane.b32.xlu0 %v2369, 32
      %v2634 = vpop.permute.xlu0 %2633
      %2635 = vrot.lane.b32.xlu0 %v2370, 32
      %v2636 = vpop.permute.xlu0 %2635
      %2637 = vrot.lane.b32.xlu0 %v2371, 32
      %v2638 = vpop.permute.xlu0 %2637
      %2639 = vrot.lane.b32.xlu0 %v2372, 32
      %v2640 = vpop.permute.xlu0 %2639
      %2641 = vrot.lane.b32.xlu0 %v2373, 32
      %v2642 = vpop.permute.xlu0 %2641
      %2643 = vrot.lane.b32.xlu0 %v2374, 32
      %v2644 = vpop.permute.xlu0 %2643
      %2645 = vrot.lane.b32.xlu0 %v2375, 32
      %v2646 = vpop.permute.xlu0 %2645
      %2647 = vrot.lane.b32.xlu0 %v2376, 32
      %v2648 = vpop.permute.xlu0 %2647
      %2649 = vrot.lane.b32.xlu0 %v2377, 32
      %v2650 = vpop.permute.xlu0 %2649
      %2651 = vrot.lane.b32.xlu0 %v2378, 32
      %v2652 = vpop.permute.xlu0 %2651
      %2653 = vrot.lane.b32.xlu0 %v2379, 32
      %v2654 = vpop.permute.xlu0 %2653
      %2655 = vrot.lane.b32.xlu0 %v2380, 32
      %v2656 = vpop.permute.xlu0 %2655
      %2657 = vrot.lane.b32.xlu0 %v2381, 32
      %v2658 = vpop.permute.xlu0 %2657
      %2659 = vrot.lane.b32.xlu0 %v2382, 32
      %v2660 = vpop.permute.xlu0 %2659
      %2661 = vrot.lane.b32.xlu0 %v2383, 32
      %v2662 = vpop.permute.xlu0 %2661
      %2663 = vrot.lane.b32.xlu0 %v2384, 32
      %v2664 = vpop.permute.xlu0 %2663
      %2665 = vrot.lane.b32.xlu0 %v2385, 32
      %v2666 = vpop.permute.xlu0 %2665
      %2667 = vrot.lane.b32.xlu0 %v2386, 32
      %v2668 = vpop.permute.xlu0 %2667
      %2669 = vrot.lane.b32.xlu0 %v2387, 32
      %v2670 = vpop.permute.xlu0 %2669
      %2671 = vrot.lane.b32.xlu0 %v2388, 32
      %v2672 = vpop.permute.xlu0 %2671
      %2673 = vrot.lane.b32.xlu0 %v2389, 32
      %v2674 = vpop.permute.xlu0 %2673
      %2675 = vrot.lane.b32.xlu0 %v2390, 32
      %v2676 = vpop.permute.xlu0 %2675
      %2677 = vrot.lane.b32.xlu0 %v2391, 32
      %v2678 = vpop.permute.xlu0 %2677
      %2761 = vrot.lane.b32.xlu0 %v2554, 64
      %v2762 = vpop.permute.xlu0 %2761
      %2763 = vrot.lane.b32.xlu0 %v2553, 64
      %v2764 = vpop.permute.xlu0 %2763
      %2765 = vrot.lane.b32.xlu0 %v2552, 64
      %v2766 = vpop.permute.xlu0 %2765
      %2767 = vrot.lane.b32.xlu0 %v2551, 64
      %v2768 = vpop.permute.xlu0 %2767
      %2769 = vrot.lane.b32.xlu0 %v2550, 64
      %v2770 = vpop.permute.xlu0 %2769
      %2771 = vrot.lane.b32.xlu0 %v2549, 64
      %v2772 = vpop.permute.xlu0 %2771
      %2773 = vrot.lane.b32.xlu0 %v2548, 64
      %v2774 = vpop.permute.xlu0 %2773
      %2775 = vrot.lane.b32.xlu0 %v2547, 64
      %v2776 = vpop.permute.xlu0 %2775
      %2777 = vrot.lane.b32.xlu0 %v2546, 64
      %v2778 = vpop.permute.xlu0 %2777
      %2779 = vrot.lane.b32.xlu0 %v2545, 64
      %v2780 = vpop.permute.xlu0 %2779
      %2781 = vrot.lane.b32.xlu0 %v2544, 64
      %v2782 = vpop.permute.xlu0 %2781
      %2783 = vrot.lane.b32.xlu0 %v2543, 64
      %v2784 = vpop.permute.xlu0 %2783
      %2785 = vrot.lane.b32.xlu0 %v2542, 64
      %v2786 = vpop.permute.xlu0 %2785
      %2787 = vrot.lane.b32.xlu0 %v2541, 64
      %v2788 = vpop.permute.xlu0 %2787
      %2789 = vrot.lane.b32.xlu0 %v2540, 64
      %v2790 = vpop.permute.xlu0 %2789
      %2791 = vrot.lane.b32.xlu0 %v2539, 64
      %v2792 = vpop.permute.xlu0 %2791
      %2793 = vrot.lane.b32.xlu0 %v2538, 64
      %v2794 = vpop.permute.xlu0 %2793
      %2795 = vrot.lane.b32.xlu0 %v2537, 64
      %v2796 = vpop.permute.xlu0 %2795
      %2797 = vrot.lane.b32.xlu0 %v2536, 64
      %v2798 = vpop.permute.xlu0 %2797
      %2799 = vrot.lane.b32.xlu0 %v2535, 64
      %v2800 = vpop.permute.xlu0 %2799
      %2801 = vrot.lane.b32.xlu0 %v2534, 64
      %v2802 = vpop.permute.xlu0 %2801
      %2803 = vrot.lane.b32.xlu0 %v2533, 64
      %v2804 = vpop.permute.xlu0 %2803
      %2805 = vrot.lane.b32.xlu0 %v2532, 64
      %v2806 = vpop.permute.xlu0 %2805
      %2807 = vrot.lane.b32.xlu0 %v2531, 64
      %v2808 = vpop.permute.xlu0 %2807
      %2809 = vrot.lane.b32.xlu0 %v2530, 64
      %v2810 = vpop.permute.xlu0 %2809
      %2811 = vrot.lane.b32.xlu0 %v2529, 64
      %v2812 = vpop.permute.xlu0 %2811
      %2813 = vrot.lane.b32.xlu0 %v2528, 64
      %v2814 = vpop.permute.xlu0 %2813
      %2815 = vrot.lane.b32.xlu0 %v2527, 64
      %v2816 = vpop.permute.xlu0 %2815
      %2817 = vrot.lane.b32.xlu0 %v2526, 64
      %v2818 = vpop.permute.xlu0 %2817
      %2819 = vrot.lane.b32.xlu0 %v2525, 64
      %v2820 = vpop.permute.xlu0 %2819
      %2821 = vrot.lane.b32.xlu0 %v2524, 64
      %v2822 = vpop.permute.xlu0 %2821
      %2823 = vrot.lane.b32.xlu0 %v2523, 64
      %v2824 = vpop.permute.xlu0 %2823
      %2825 = vrot.lane.b32.xlu0 %v2522, 64
      %v2826 = vpop.permute.xlu0 %2825
      %2827 = vrot.lane.b32.xlu0 %v2521, 64
      %v2828 = vpop.permute.xlu0 %2827
      %2829 = vrot.lane.b32.xlu0 %v2520, 64
      %v2830 = vpop.permute.xlu0 %2829
      %2831 = vrot.lane.b32.xlu0 %v2519, 64
      %v2832 = vpop.permute.xlu0 %2831
      %2833 = vrot.lane.b32.xlu0 %v2518, 64
      %v2834 = vpop.permute.xlu0 %2833
      %2835 = vrot.lane.b32.xlu0 %v2517, 64
      %v2836 = vpop.permute.xlu0 %2835
      %2837 = vrot.lane.b32.xlu0 %v2516, 64
      %v2838 = vpop.permute.xlu0 %2837
      %2839 = vrot.lane.b32.xlu0 %v2515, 64
      %v2840 = vpop.permute.xlu0 %2839
      %2841 = vrot.lane.b32.xlu0 %v2555, 64
      %v2842 = vpop.permute.xlu0 %2841
      %v2884 = vsel %vm790, %v2473, %v2598
      %v2885 = vsel %vm790, %v2472, %v2600
      %v2886 = vsel %vm790, %v2471, %v2602
      %v2887 = vsel %vm790, %v2470, %v2604
      %v2888 = vsel %vm790, %v2469, %v2606
      %v2889 = vsel %vm790, %v2468, %v2608
      %v2890 = vsel %vm790, %v2467, %v2610
      %v2891 = vsel %vm790, %v2466, %v2612
      %v2892 = vsel %vm790, %v2465, %v2614
      %v2893 = vsel %vm790, %v2464, %v2616
      %v2894 = vsel %vm790, %v2463, %v2618
      %v2895 = vsel %vm790, %v2462, %v2620
      %v2896 = vsel %vm790, %v2461, %v2622
      %v2897 = vsel %vm790, %v2460, %v2624
      %v2898 = vsel %vm790, %v2459, %v2626
      %v2899 = vsel %vm790, %v2458, %v2628
      %v2900 = vsel %vm790, %v2457, %v2630
      %v2901 = vsel %vm790, %v2456, %v2632
      %v2902 = vsel %vm790, %v2455, %v2634
      %v2903 = vsel %vm790, %v2454, %v2636
      %v2904 = vsel %vm790, %v2453, %v2638
      %v2905 = vsel %vm790, %v2452, %v2640
      %v2906 = vsel %vm790, %v2451, %v2642
      %v2907 = vsel %vm790, %v2450, %v2644
      %v2908 = vsel %vm790, %v2449, %v2646
      %v2909 = vsel %vm790, %v2448, %v2648
      %v2910 = vsel %vm790, %v2447, %v2650
      %v2911 = vsel %vm790, %v2446, %v2652
      %v2912 = vsel %vm790, %v2445, %v2654
      %v2913 = vsel %vm790, %v2444, %v2656
      %v2914 = vsel %vm790, %v2443, %v2658
      %v2915 = vsel %vm790, %v2442, %v2660
      %v2916 = vsel %vm790, %v2441, %v2662
      %v2917 = vsel %vm790, %v2440, %v2664
      %v2918 = vsel %vm790, %v2439, %v2666
      %v2919 = vsel %vm790, %v2438, %v2668
      %v2920 = vsel %vm790, %v2437, %v2670
      %v2921 = vsel %vm790, %v2436, %v2672
      %v2922 = vsel %vm790, %v2435, %v2674
      %v2923 = vsel %vm790, %v2434, %v2676
      %v2924 = vsel %vm790, %v2433, %v2678
      %v2925 = vsel %vm832, %v2884, %v2762
      %v2926 = vsel %vm832, %v2885, %v2764
      %v2927 = vsel %vm832, %v2886, %v2766
      %v2928 = vsel %vm832, %v2887, %v2768
      %v2929 = vsel %vm832, %v2888, %v2770
      %v2930 = vsel %vm832, %v2889, %v2772
      %v2931 = vsel %vm832, %v2890, %v2774
      %v2932 = vsel %vm832, %v2891, %v2776
      %v2933 = vsel %vm832, %v2892, %v2778
      %v2934 = vsel %vm832, %v2893, %v2780
      %v2935 = vsel %vm832, %v2894, %v2782
      %v2936 = vsel %vm832, %v2895, %v2784
      %v2937 = vsel %vm832, %v2896, %v2786
      %v2938 = vsel %vm832, %v2897, %v2788
      %v2939 = vsel %vm832, %v2898, %v2790
      %v2940 = vsel %vm832, %v2899, %v2792
      %v2941 = vsel %vm832, %v2900, %v2794
      %v2942 = vsel %vm832, %v2901, %v2796
      %v2943 = vsel %vm832, %v2902, %v2798
      %v2944 = vsel %vm832, %v2903, %v2800
      %v2945 = vsel %vm832, %v2904, %v2802
      %v2946 = vsel %vm832, %v2905, %v2804
      %v2947 = vsel %vm832, %v2906, %v2806
      %v2948 = vsel %vm832, %v2907, %v2808
      %v2949 = vsel %vm832, %v2908, %v2810
      %v2950 = vsel %vm832, %v2909, %v2812
      %v2951 = vsel %vm832, %v2910, %v2814
      %v2952 = vsel %vm832, %v2911, %v2816
      %v2953 = vsel %vm832, %v2912, %v2818
      %v2954 = vsel %vm832, %v2913, %v2820
      %v2955 = vsel %vm832, %v2914, %v2822
      %v2956 = vsel %vm832, %v2915, %v2824
      %v2957 = vsel %vm832, %v2916, %v2826
      %v2958 = vsel %vm832, %v2917, %v2828
      %v2959 = vsel %vm832, %v2918, %v2830
      %v2960 = vsel %vm832, %v2919, %v2832
      %v2961 = vsel %vm832, %v2920, %v2834
      %v2962 = vsel %vm832, %v2921, %v2836
      %v2963 = vsel %vm832, %v2922, %v2838
      %v2964 = vsel %vm832, %v2923, %v2840
      %v2965 = vsel %vm832, %v2924, %v2842
      %v2966 = vrot.slane %v2925, 6
      %v2967 = vrot.slane %v2926, 6
      %v2968 = vrot.slane %v2927, 6
      %v2969 = vrot.slane %v2928, 6
      %v2970 = vrot.slane %v2929, 6
      %v2971 = vrot.slane %v2930, 6
      %v2972 = vrot.slane %v2931, 6
      %v2973 = vrot.slane %v2932, 6
      %v2974 = vrot.slane %v2933, 6
      %v2975 = vrot.slane %v2934, 6
      %v2976 = vrot.slane %v2935, 6
      %v2977 = vrot.slane %v2936, 6
      %v2978 = vrot.slane %v2937, 6
      %v2979 = vrot.slane %v2938, 6
      %v2980 = vrot.slane %v2939, 6
      %v2981 = vrot.slane %v2940, 6
      %v2982 = vrot.slane %v2941, 6
      %v2983 = vrot.slane %v2942, 6
      %v2984 = vrot.slane %v2943, 6
      %v2985 = vrot.slane %v2944, 6
      %v2986 = vrot.slane %v2945, 6
      %v2987 = vrot.slane %v2946, 6
      %v2988 = vrot.slane %v2947, 6
      %v2989 = vrot.slane %v2948, 6
      %v2990 = vrot.slane %v2949, 6
      %v2991 = vrot.slane %v2950, 6
      %v2992 = vrot.slane %v2951, 6
      %v2993 = vrot.slane %v2952, 6
      %v2994 = vrot.slane %v2953, 6
      %v2995 = vrot.slane %v2954, 6
      %v2996 = vrot.slane %v2955, 6
      %v2997 = vrot.slane %v2956, 6
      %v2998 = vrot.slane %v2957, 6
      %v2999 = vrot.slane %v2958, 6
      %v3000 = vrot.slane %v2959, 6
      %v3001 = vrot.slane %v2960, 6
      %v3002 = vrot.slane %v2961, 6
      %v3003 = vrot.slane %v2962, 6
      %v3004 = vrot.slane %v2963, 6
      %v3005 = vrot.slane %v2964, 6
      %v3006 = vrot.slane %v2965, 6
      %v3007 = vsel %vm915, %v3005, %v3006
      %v3008 = vsel %vm915, %v3004, %v3005
      %v3009 = vsel %vm915, %v3003, %v3004
      %v3010 = vsel %vm915, %v3002, %v3003
      %v3011 = vsel %vm915, %v3001, %v3002
      %v3012 = vsel %vm915, %v3000, %v3001
      %v3013 = vsel %vm915, %v2999, %v3000
      %v3014 = vsel %vm915, %v2998, %v2999
      %v3015 = vsel %vm915, %v2997, %v2998
      %v3016 = vsel %vm915, %v2996, %v2997
      %v3017 = vsel %vm915, %v2995, %v2996
      %v3018 = vsel %vm915, %v2994, %v2995
      %v3019 = vsel %vm915, %v2993, %v2994
      %v3020 = vsel %vm915, %v2992, %v2993
      %v3021 = vsel %vm915, %v2991, %v2992
      %v3022 = vsel %vm915, %v2990, %v2991
      %v3023 = vsel %vm915, %v2989, %v2990
      %v3024 = vsel %vm915, %v2988, %v2989
      %v3025 = vsel %vm915, %v2987, %v2988
      %v3026 = vsel %vm915, %v2986, %v2987
      %v3027 = vsel %vm915, %v2985, %v2986
      %v3028 = vsel %vm915, %v2984, %v2985
      %v3029 = vsel %vm915, %v2983, %v2984
      %v3030 = vsel %vm915, %v2982, %v2983
      %v3031 = vsel %vm915, %v2981, %v2982
      %v3032 = vsel %vm915, %v2980, %v2981
      %v3033 = vsel %vm915, %v2979, %v2980
      %v3034 = vsel %vm915, %v2978, %v2979
      %v3035 = vsel %vm915, %v2977, %v2978
      %v3036 = vsel %vm915, %v2976, %v2977
      %v3037 = vsel %vm915, %v2975, %v2976
      %v3038 = vsel %vm915, %v2974, %v2975
      %v3039 = vsel %vm915, %v2973, %v2974
      %v3040 = vsel %vm915, %v2972, %v2973
      %v3041 = vsel %vm915, %v2971, %v2972
      %v3042 = vsel %vm915, %v2970, %v2971
      %v3043 = vsel %vm915, %v2969, %v2970
      %v3044 = vsel %vm915, %v2968, %v2969
      %v3045 = vsel %vm915, %v2967, %v2968
      %v3046 = vsel %vm915, %v2966, %v2967
      %v3047 = vsel %vm915, %v3006, %v2966
      %v3048 = vrot.slane %v2925, 2
      %v3049 = vrot.slane %v2926, 2
      %v3050 = vrot.slane %v2927, 2
      %v3051 = vrot.slane %v2928, 2
      %v3052 = vrot.slane %v2929, 2
      %v3053 = vrot.slane %v2930, 2
      %v3054 = vrot.slane %v2931, 2
      %v3055 = vrot.slane %v2932, 2
      %v3056 = vrot.slane %v2933, 2
      %v3057 = vrot.slane %v2934, 2
      %v3058 = vrot.slane %v2935, 2
      %v3059 = vrot.slane %v2936, 2
      %v3060 = vrot.slane %v2937, 2
      %v3061 = vrot.slane %v2938, 2
      %v3062 = vrot.slane %v2939, 2
      %v3063 = vrot.slane %v2940, 2
      %v3064 = vrot.slane %v2941, 2
      %v3065 = vrot.slane %v2942, 2
      %v3066 = vrot.slane %v2943, 2
      %v3067 = vrot.slane %v2944, 2
      %v3068 = vrot.slane %v2945, 2
      %v3069 = vrot.slane %v2946, 2
      %v3070 = vrot.slane %v2947, 2
      %v3071 = vrot.slane %v2948, 2
      %v3072 = vrot.slane %v2949, 2
      %v3073 = vrot.slane %v2950, 2
      %v3074 = vrot.slane %v2951, 2
      %v3075 = vrot.slane %v2952, 2
      %v3076 = vrot.slane %v2953, 2
      %v3077 = vrot.slane %v2954, 2
      %v3078 = vrot.slane %v2955, 2
      %v3079 = vrot.slane %v2956, 2
      %v3080 = vrot.slane %v2957, 2
      %v3081 = vrot.slane %v2958, 2
      %v3082 = vrot.slane %v2959, 2
      %v3083 = vrot.slane %v2960, 2
      %v3084 = vrot.slane %v2961, 2
      %v3085 = vrot.slane %v2962, 2
      %v3086 = vrot.slane %v2963, 2
      %v3087 = vrot.slane %v2964, 2
      %v3088 = vrot.slane %v2965, 2
      %v3089 = vsel %vm998, %v3087, %v3088
      %v3090 = vsel %vm998, %v3086, %v3087
      %v3091 = vsel %vm998, %v3085, %v3086
      %v3092 = vsel %vm998, %v3084, %v3085
      %v3093 = vsel %vm998, %v3083, %v3084
      %v3094 = vsel %vm998, %v3082, %v3083
      %v3095 = vsel %vm998, %v3081, %v3082
      %v3096 = vsel %vm998, %v3080, %v3081
      %v3097 = vsel %vm998, %v3079, %v3080
      %v3098 = vsel %vm998, %v3078, %v3079
      %v3099 = vsel %vm998, %v3077, %v3078
      %v3100 = vsel %vm998, %v3076, %v3077
      %v3101 = vsel %vm998, %v3075, %v3076
      %v3102 = vsel %vm998, %v3074, %v3075
      %v3103 = vsel %vm998, %v3073, %v3074
      %v3104 = vsel %vm998, %v3072, %v3073
      %v3105 = vsel %vm998, %v3071, %v3072
      %v3106 = vsel %vm998, %v3070, %v3071
      %v3107 = vsel %vm998, %v3069, %v3070
      %v3108 = vsel %vm998, %v3068, %v3069
      %v3109 = vsel %vm998, %v3067, %v3068
      %v3110 = vsel %vm998, %v3066, %v3067
      %v3111 = vsel %vm998, %v3065, %v3066
      %v3112 = vsel %vm998, %v3064, %v3065
      %v3113 = vsel %vm998, %v3063, %v3064
      %v3114 = vsel %vm998, %v3062, %v3063
      %v3115 = vsel %vm998, %v3061, %v3062
      %v3116 = vsel %vm998, %v3060, %v3061
      %v3117 = vsel %vm998, %v3059, %v3060
      %v3118 = vsel %vm998, %v3058, %v3059
      %v3119 = vsel %vm998, %v3057, %v3058
      %v3120 = vsel %vm998, %v3056, %v3057
      %v3121 = vsel %vm998, %v3055, %v3056
      %v3122 = vsel %vm998, %v3054, %v3055
      %v3123 = vsel %vm998, %v3053, %v3054
      %v3124 = vsel %vm998, %v3052, %v3053
      %v3125 = vsel %vm998, %v3051, %v3052
      %v3126 = vsel %vm998, %v3050, %v3051
      %v3127 = vsel %vm998, %v3049, %v3050
      %v3128 = vsel %vm998, %v3048, %v3049
      %v3129 = vsel %vm998, %v3088, %v3048
      %3171 = vrot.lane.b32.xlu0 %v2925, 96
      %v3172 = vpop.permute.xlu0 %3171
      %3173 = vrot.lane.b32.xlu0 %v2926, 96
      %v3174 = vpop.permute.xlu0 %3173
      %3175 = vrot.lane.b32.xlu0 %v2927, 96
      %v3176 = vpop.permute.xlu0 %3175
      %3177 = vrot.lane.b32.xlu0 %v2928, 96
      %v3178 = vpop.permute.xlu0 %3177
      %3179 = vrot.lane.b32.xlu0 %v2929, 96
      %v3180 = vpop.permute.xlu0 %3179
      %3181 = vrot.lane.b32.xlu0 %v2930, 96
      %v3182 = vpop.permute.xlu0 %3181
      %3183 = vrot.lane.b32.xlu0 %v2931, 96
      %v3184 = vpop.permute.xlu0 %3183
      %3185 = vrot.lane.b32.xlu0 %v2932, 96
      %v3186 = vpop.permute.xlu0 %3185
      %3187 = vrot.lane.b32.xlu0 %v2933, 96
      %v3188 = vpop.permute.xlu0 %3187
      %3189 = vrot.lane.b32.xlu0 %v2934, 96
      %v3190 = vpop.permute.xlu0 %3189
      %3191 = vrot.lane.b32.xlu0 %v2935, 96
      %v3192 = vpop.permute.xlu0 %3191
      %3193 = vrot.lane.b32.xlu0 %v2936, 96
      %v3194 = vpop.permute.xlu0 %3193
      %3195 = vrot.lane.b32.xlu0 %v2937, 96
      %v3196 = vpop.permute.xlu0 %3195
      %3197 = vrot.lane.b32.xlu0 %v2938, 96
      %v3198 = vpop.permute.xlu0 %3197
      %3199 = vrot.lane.b32.xlu0 %v2939, 96
      %v3200 = vpop.permute.xlu0 %3199
      %3201 = vrot.lane.b32.xlu0 %v2940, 96
      %v3202 = vpop.permute.xlu0 %3201
      %3203 = vrot.lane.b32.xlu0 %v2941, 96
      %v3204 = vpop.permute.xlu0 %3203
      %3205 = vrot.lane.b32.xlu0 %v2942, 96
      %v3206 = vpop.permute.xlu0 %3205
      %3207 = vrot.lane.b32.xlu0 %v2943, 96
      %v3208 = vpop.permute.xlu0 %3207
      %3209 = vrot.lane.b32.xlu0 %v2944, 96
      %v3210 = vpop.permute.xlu0 %3209
      %3211 = vrot.lane.b32.xlu0 %v2945, 96
      %v3212 = vpop.permute.xlu0 %3211
      %3213 = vrot.lane.b32.xlu0 %v2946, 96
      %v3214 = vpop.permute.xlu0 %3213
      %3215 = vrot.lane.b32.xlu0 %v2947, 96
      %v3216 = vpop.permute.xlu0 %3215
      %3217 = vrot.lane.b32.xlu0 %v2948, 96
      %v3218 = vpop.permute.xlu0 %3217
      %3219 = vrot.lane.b32.xlu0 %v2949, 96
      %v3220 = vpop.permute.xlu0 %3219
      %3221 = vrot.lane.b32.xlu0 %v2950, 96
      %v3222 = vpop.permute.xlu0 %3221
      %3223 = vrot.lane.b32.xlu0 %v2951, 96
      %v3224 = vpop.permute.xlu0 %3223
      %3225 = vrot.lane.b32.xlu0 %v2952, 96
      %v3226 = vpop.permute.xlu0 %3225
      %3227 = vrot.lane.b32.xlu0 %v2953, 96
      %v3228 = vpop.permute.xlu0 %3227
      %3229 = vrot.lane.b32.xlu0 %v2954, 96
      %v3230 = vpop.permute.xlu0 %3229
      %3231 = vrot.lane.b32.xlu0 %v2955, 96
      %v3232 = vpop.permute.xlu0 %3231
      %3233 = vrot.lane.b32.xlu0 %v2956, 96
      %v3234 = vpop.permute.xlu0 %3233
      %3235 = vrot.lane.b32.xlu0 %v2957, 96
      %v3236 = vpop.permute.xlu0 %3235
      %3237 = vrot.lane.b32.xlu0 %v2958, 96
      %v3238 = vpop.permute.xlu0 %3237
      %3239 = vrot.lane.b32.xlu0 %v2959, 96
      %v3240 = vpop.permute.xlu0 %3239
      %3241 = vrot.lane.b32.xlu0 %v2960, 96
      %v3242 = vpop.permute.xlu0 %3241
      %3243 = vrot.lane.b32.xlu0 %v2961, 96
      %v3244 = vpop.permute.xlu0 %3243
      %3245 = vrot.lane.b32.xlu0 %v2962, 96
      %v3246 = vpop.permute.xlu0 %3245
      %3247 = vrot.lane.b32.xlu0 %v2963, 96
      %v3248 = vpop.permute.xlu0 %3247
      %3249 = vrot.lane.b32.xlu0 %v2964, 96
      %v3250 = vpop.permute.xlu0 %3249
      %3251 = vrot.lane.b32.xlu0 %v2965, 96
      %v3252 = vpop.permute.xlu0 %3251
      %3335 = vrot.lane.b32.xlu0 %v3126, 64
      %v3336 = vpop.permute.xlu0 %3335
      %3337 = vrot.lane.b32.xlu0 %v3125, 64
      %v3338 = vpop.permute.xlu0 %3337
      %3339 = vrot.lane.b32.xlu0 %v3124, 64
      %v3340 = vpop.permute.xlu0 %3339
      %3341 = vrot.lane.b32.xlu0 %v3123, 64
      %v3342 = vpop.permute.xlu0 %3341
      %3343 = vrot.lane.b32.xlu0 %v3122, 64
      %v3344 = vpop.permute.xlu0 %3343
      %3345 = vrot.lane.b32.xlu0 %v3121, 64
      %v3346 = vpop.permute.xlu0 %3345
      %3347 = vrot.lane.b32.xlu0 %v3120, 64
      %v3348 = vpop.permute.xlu0 %3347
      %3349 = vrot.lane.b32.xlu0 %v3119, 64
      %v3350 = vpop.permute.xlu0 %3349
      %3351 = vrot.lane.b32.xlu0 %v3118, 64
      %v3352 = vpop.permute.xlu0 %3351
      %3353 = vrot.lane.b32.xlu0 %v3117, 64
      %v3354 = vpop.permute.xlu0 %3353
      %3355 = vrot.lane.b32.xlu0 %v3116, 64
      %v3356 = vpop.permute.xlu0 %3355
      %3357 = vrot.lane.b32.xlu0 %v3115, 64
      %v3358 = vpop.permute.xlu0 %3357
      %3359 = vrot.lane.b32.xlu0 %v3114, 64
      %v3360 = vpop.permute.xlu0 %3359
      %3361 = vrot.lane.b32.xlu0 %v3113, 64
      %v3362 = vpop.permute.xlu0 %3361
      %3363 = vrot.lane.b32.xlu0 %v3112, 64
      %v3364 = vpop.permute.xlu0 %3363
      %3365 = vrot.lane.b32.xlu0 %v3111, 64
      %v3366 = vpop.permute.xlu0 %3365
      %3367 = vrot.lane.b32.xlu0 %v3110, 64
      %v3368 = vpop.permute.xlu0 %3367
      %3369 = vrot.lane.b32.xlu0 %v3109, 64
      %v3370 = vpop.permute.xlu0 %3369
      %3371 = vrot.lane.b32.xlu0 %v3108, 64
      %v3372 = vpop.permute.xlu0 %3371
      %3373 = vrot.lane.b32.xlu0 %v3107, 64
      %v3374 = vpop.permute.xlu0 %3373
      %3375 = vrot.lane.b32.xlu0 %v3106, 64
      %v3376 = vpop.permute.xlu0 %3375
      %3377 = vrot.lane.b32.xlu0 %v3105, 64
      %v3378 = vpop.permute.xlu0 %3377
      %3379 = vrot.lane.b32.xlu0 %v3104, 64
      %v3380 = vpop.permute.xlu0 %3379
      %3381 = vrot.lane.b32.xlu0 %v3103, 64
      %v3382 = vpop.permute.xlu0 %3381
      %3383 = vrot.lane.b32.xlu0 %v3102, 64
      %v3384 = vpop.permute.xlu0 %3383
      %3385 = vrot.lane.b32.xlu0 %v3101, 64
      %v3386 = vpop.permute.xlu0 %3385
      %3387 = vrot.lane.b32.xlu0 %v3100, 64
      %v3388 = vpop.permute.xlu0 %3387
      %3389 = vrot.lane.b32.xlu0 %v3099, 64
      %v3390 = vpop.permute.xlu0 %3389
      %3391 = vrot.lane.b32.xlu0 %v3098, 64
      %v3392 = vpop.permute.xlu0 %3391
      %3393 = vrot.lane.b32.xlu0 %v3097, 64
      %v3394 = vpop.permute.xlu0 %3393
      %3395 = vrot.lane.b32.xlu0 %v3096, 64
      %v3396 = vpop.permute.xlu0 %3395
      %3397 = vrot.lane.b32.xlu0 %v3095, 64
      %v3398 = vpop.permute.xlu0 %3397
      %3399 = vrot.lane.b32.xlu0 %v3094, 64
      %v3400 = vpop.permute.xlu0 %3399
      %3401 = vrot.lane.b32.xlu0 %v3093, 64
      %v3402 = vpop.permute.xlu0 %3401
      %3403 = vrot.lane.b32.xlu0 %v3092, 64
      %v3404 = vpop.permute.xlu0 %3403
      %3405 = vrot.lane.b32.xlu0 %v3091, 64
      %v3406 = vpop.permute.xlu0 %3405
      %3407 = vrot.lane.b32.xlu0 %v3090, 64
      %v3408 = vpop.permute.xlu0 %3407
      %3409 = vrot.lane.b32.xlu0 %v3089, 64
      %v3410 = vpop.permute.xlu0 %3409
      %3411 = vrot.lane.b32.xlu0 %v3129, 64
      %v3412 = vpop.permute.xlu0 %3411
      %3413 = vrot.lane.b32.xlu0 %v3128, 64
      %v3414 = vpop.permute.xlu0 %3413
      %3415 = vrot.lane.b32.xlu0 %v3127, 64
      %v3416 = vpop.permute.xlu0 %3415
      %v3458 = vsel %vm1368, %v3008, %v3172
      %v3459 = vsel %vm1368, %v3007, %v3174
      %v3460 = vsel %vm1368, %v3047, %v3176
      %v3461 = vsel %vm1368, %v3046, %v3178
      %v3462 = vsel %vm1368, %v3045, %v3180
      %v3463 = vsel %vm1368, %v3044, %v3182
      %v3464 = vsel %vm1368, %v3043, %v3184
      %v3465 = vsel %vm1368, %v3042, %v3186
      %v3466 = vsel %vm1368, %v3041, %v3188
      %v3467 = vsel %vm1368, %v3040, %v3190
      %v3468 = vsel %vm1368, %v3039, %v3192
      %v3469 = vsel %vm1368, %v3038, %v3194
      %v3470 = vsel %vm1368, %v3037, %v3196
      %v3471 = vsel %vm1368, %v3036, %v3198
      %v3472 = vsel %vm1368, %v3035, %v3200
      %v3473 = vsel %vm1368, %v3034, %v3202
      %v3474 = vsel %vm1368, %v3033, %v3204
      %v3475 = vsel %vm1368, %v3032, %v3206
      %v3476 = vsel %vm1368, %v3031, %v3208
      %v3477 = vsel %vm1368, %v3030, %v3210
      %v3478 = vsel %vm1368, %v3029, %v3212
      %v3479 = vsel %vm1368, %v3028, %v3214
      %v3480 = vsel %vm1368, %v3027, %v3216
      %v3481 = vsel %vm1368, %v3026, %v3218
      %v3482 = vsel %vm1368, %v3025, %v3220
      %v3483 = vsel %vm1368, %v3024, %v3222
      %v3484 = vsel %vm1368, %v3023, %v3224
      %v3485 = vsel %vm1368, %v3022, %v3226
      %v3486 = vsel %vm1368, %v3021, %v3228
      %v3487 = vsel %vm1368, %v3020, %v3230
      %v3488 = vsel %vm1368, %v3019, %v3232
      %v3489 = vsel %vm1368, %v3018, %v3234
      %v3490 = vsel %vm1368, %v3017, %v3236
      %v3491 = vsel %vm1368, %v3016, %v3238
      %v3492 = vsel %vm1368, %v3015, %v3240
      %v3493 = vsel %vm1368, %v3014, %v3242
      %v3494 = vsel %vm1368, %v3013, %v3244
      %v3495 = vsel %vm1368, %v3012, %v3246
      %v3496 = vsel %vm1368, %v3011, %v3248
      %v3497 = vsel %vm1368, %v3010, %v3250
      %v3498 = vsel %vm1368, %v3009, %v3252
      %v3499 = vsel %vm832, %v3172, %v3336
      %v3500 = vsel %vm832, %v3174, %v3338
      %v3501 = vsel %vm832, %v3176, %v3340
      %v3502 = vsel %vm832, %v3178, %v3342
      %v3503 = vsel %vm832, %v3180, %v3344
      %v3504 = vsel %vm832, %v3182, %v3346
      %v3505 = vsel %vm832, %v3184, %v3348
      %v3506 = vsel %vm832, %v3186, %v3350
      %v3507 = vsel %vm832, %v3188, %v3352
      %v3508 = vsel %vm832, %v3190, %v3354
      %v3509 = vsel %vm832, %v3192, %v3356
      %v3510 = vsel %vm832, %v3194, %v3358
      %v3511 = vsel %vm832, %v3196, %v3360
      %v3512 = vsel %vm832, %v3198, %v3362
      %v3513 = vsel %vm832, %v3200, %v3364
      %v3514 = vsel %vm832, %v3202, %v3366
      %v3515 = vsel %vm832, %v3204, %v3368
      %v3516 = vsel %vm832, %v3206, %v3370
      %v3517 = vsel %vm832, %v3208, %v3372
      %v3518 = vsel %vm832, %v3210, %v3374
      %v3519 = vsel %vm832, %v3212, %v3376
      %v3520 = vsel %vm832, %v3214, %v3378
      %v3521 = vsel %vm832, %v3216, %v3380
      %v3522 = vsel %vm832, %v3218, %v3382
      %v3523 = vsel %vm832, %v3220, %v3384
      %v3524 = vsel %vm832, %v3222, %v3386
      %v3525 = vsel %vm832, %v3224, %v3388
      %v3526 = vsel %vm832, %v3226, %v3390
      %v3527 = vsel %vm832, %v3228, %v3392
      %v3528 = vsel %vm832, %v3230, %v3394
      %v3529 = vsel %vm832, %v3232, %v3396
      %v3530 = vsel %vm832, %v3234, %v3398
      %v3531 = vsel %vm832, %v3236, %v3400
      %v3532 = vsel %vm832, %v3238, %v3402
      %v3533 = vsel %vm832, %v3240, %v3404
      %v3534 = vsel %vm832, %v3242, %v3406
      %v3535 = vsel %vm832, %v3244, %v3408
      %v3536 = vsel %vm832, %v3246, %v3410
      %v3537 = vsel %vm832, %v3248, %v3412
      %v3538 = vsel %vm832, %v3250, %v3414
      %v3539 = vsel %vm832, %v3252, %v3416
      %v3540 = vpack.c.bf16 %v3459, %v3458
      %v3541 = vpack.c.bf16 %v3500, %v3499
      %v3542 = vpack.c.bf16 %v3338, %v3336
      %v3543 = vpack.c.bf16 %v3461, %v3460
      %v3544 = vpack.c.bf16 %v3502, %v3501
      %v3545 = vpack.c.bf16 %v3342, %v3340
      %v3546 = vpack.c.bf16 %v3463, %v3462
      %v3547 = vpack.c.bf16 %v3504, %v3503
      %v3548 = vpack.c.bf16 %v3346, %v3344
      %v3549 = vpack.c.bf16 %v3465, %v3464
      %v3550 = vpack.c.bf16 %v3506, %v3505
      %v3551 = vpack.c.bf16 %v3350, %v3348
      %v3552 = vpack.c.bf16 %v3467, %v3466
      %v3553 = vpack.c.bf16 %v3508, %v3507
      %v3554 = vpack.c.bf16 %v3354, %v3352
      %v3555 = vpack.c.bf16 %v3469, %v3468
      %v3556 = vpack.c.bf16 %v3510, %v3509
      %v3557 = vpack.c.bf16 %v3358, %v3356
      %v3558 = vpack.c.bf16 %v3471, %v3470
      %v3559 = vpack.c.bf16 %v3512, %v3511
      %v3560 = vpack.c.bf16 %v3362, %v3360
      %v3561 = vpack.c.bf16 %v3473, %v3472
      %v3562 = vpack.c.bf16 %v3514, %v3513
      %v3563 = vpack.c.bf16 %v3366, %v3364
      %v3564 = vpack.c.bf16 %v3475, %v3474
      %v3565 = vpack.c.bf16 %v3516, %v3515
      %v3566 = vpack.c.bf16 %v3370, %v3368
      %v3567 = vpack.c.bf16 %v3477, %v3476
      %v3568 = vpack.c.bf16 %v3518, %v3517
      %v3569 = vpack.c.bf16 %v3374, %v3372
      %v3570 = vpack.c.bf16 %v3479, %v3478
      %v3571 = vpack.c.bf16 %v3520, %v3519
      %v3572 = vpack.c.bf16 %v3378, %v3376
      %v3573 = vpack.c.bf16 %v3481, %v3480
      %v3574 = vpack.c.bf16 %v3522, %v3521
      %v3575 = vpack.c.bf16 %v3382, %v3380
      %v3576 = vpack.c.bf16 %v3483, %v3482
      %v3577 = vpack.c.bf16 %v3524, %v3523
      %v3578 = vpack.c.bf16 %v3386, %v3384
      %v3579 = vpack.c.bf16 %v3485, %v3484
      %v3580 = vpack.c.bf16 %v3526, %v3525
      %v3581 = vpack.c.bf16 %v3390, %v3388
      %v3582 = vpack.c.bf16 %v3487, %v3486
      %v3583 = vpack.c.bf16 %v3528, %v3527
      %v3584 = vpack.c.bf16 %v3394, %v3392
      %v3585 = vpack.c.bf16 %v3489, %v3488
      %v3586 = vpack.c.bf16 %v3530, %v3529
      %v3587 = vpack.c.bf16 %v3398, %v3396
      %v3588 = vpack.c.bf16 %v3491, %v3490
      %v3589 = vpack.c.bf16 %v3532, %v3531
      %v3590 = vpack.c.bf16 %v3402, %v3400
      %v3591 = vpack.c.bf16 %v3493, %v3492
      %v3592 = vpack.c.bf16 %v3534, %v3533
      %v3593 = vpack.c.bf16 %v3406, %v3404
      %v3594 = vpack.c.bf16 %v3495, %v3494
      %v3595 = vpack.c.bf16 %v3536, %v3535
      %v3596 = vpack.c.bf16 %v3410, %v3408
      %v3597 = vpack.c.bf16 %v3497, %v3496
      %v3598 = vpack.c.bf16 %v3538, %v3537
      %v3599 = vpack.c.bf16 %v3414, %v3412
      %v3600 = vpack.c.bf16 %v3498, %v3498
      %v3601 = vpack.c.bf16 %v3539, %v3539
      %v3602 = vpack.c.bf16 %v3416, %v3416
      %v3603 = vld [vmem:[%s4] sm:$0xf]
      %v3604 = vld [vmem:[%s4 + $0x4] sm:$0xf]
      %v3605 = vld [vmem:[%s4 + $0x8] sm:$0xf]
      %v3606 = vld [vmem:[%s4 + $0xc] sm:$0xf]
      %v3607 = vld [vmem:[%s4 + $0x10] sm:$0xf]
      %v3608 = vld [vmem:[%s4 + $0x14] sm:$0xf]
      %v3609 = vld [vmem:[%s4 + $0x18] sm:$0xf]
      %v3610 = vld [vmem:[%s4 + $0x1c] sm:$0xf]
      %v3611 = vld [vmem:[%s4 + $0x20] sm:$0xf]
      %v3612 = vld [vmem:[%s4 + $0x24] sm:$0xf]
      %v3613 = vld [vmem:[%s4 + $0x28] sm:$0xf]
      %v3614 = vld [vmem:[%s4 + $0x2c] sm:$0xf]
      %v3615 = vld [vmem:[%s4 + $0x30] sm:$0xf]
      %v3616 = vld [vmem:[%s4 + $0x34] sm:$0xf]
      %v3617 = vld [vmem:[%s4 + $0x38] sm:$0xf]
      %v3618 = vld [vmem:[%s4 + $0x3c] sm:$0xf]
      %v3619 = vld [vmem:[%s4 + $0x40] sm:$0xf]
      %v3620 = vld [vmem:[%s4 + $0x44] sm:$0xf]
      %v3621 = vld [vmem:[%s4 + $0x48] sm:$0xf]
      %v3622 = vld [vmem:[%s4 + $0x4c] sm:$0xf]
      %v3623 = vld [vmem:[%s4 + $0x50] sm:$0xf]
      %v3624 = vld [vmem:[%s4 + $0x54] sm:$0xf]
      %v3625 = vld [vmem:[%s4 + $0x58] sm:$0xf]
      %v3626 = vld [vmem:[%s4 + $0x5c] sm:$0xf]
      %v3627 = vld [vmem:[%s4 + $0x60] sm:$0xf]
      %v3628 = vld [vmem:[%s4 + $0x64] sm:$0xf]
      %v3629 = vld [vmem:[%s4 + $0x68] sm:$0xf]
      %v3630 = vld [vmem:[%s4 + $0x6c] sm:$0xf]
      %v3631 = vld [vmem:[%s4 + $0x70] sm:$0xf]
      %v3632 = vld [vmem:[%s4 + $0x74] sm:$0xf]
      %v3633 = vld [vmem:[%s4 + $0x78] sm:$0xf]
      %v3634 = vld [vmem:[%s4 + $0x7c] sm:$0xf]
      %v3635 = vld [vmem:[%s4 + $0x80] sm:$0xf]
      %v3636 = vld [vmem:[%s4 + $0x84] sm:$0xf]
      %v3637 = vld [vmem:[%s4 + $0x88] sm:$0xf]
      %v3638 = vld [vmem:[%s4 + $0x8c] sm:$0xf]
      %v3639 = vld [vmem:[%s5] sm:$0x1]
      %v3641 = vperm.slane %v3639, 0
      %v3679 = vunpack.c.l.b16 %v3603
      %v3680 = vunpack.c.l.b16 %v3604
      %v3681 = vunpack.c.l.b16 %v3605
      %v3682 = vunpack.c.l.b16 %v3606
      %v3683 = vunpack.c.l.b16 %v3607
      %v3684 = vunpack.c.l.b16 %v3608
      %v3685 = vunpack.c.l.b16 %v3609
      %v3686 = vunpack.c.l.b16 %v3610
      %v3687 = vunpack.c.l.b16 %v3611
      %v3688 = vunpack.c.l.b16 %v3612
      %v3689 = vunpack.c.l.b16 %v3613
      %v3690 = vunpack.c.l.b16 %v3614
      %v3691 = vunpack.c.l.b16 %v3615
      %v3692 = vunpack.c.l.b16 %v3616
      %v3693 = vunpack.c.l.b16 %v3617
      %v3694 = vunpack.c.l.b16 %v3618
      %v3695 = vunpack.c.l.b16 %v3619
      %v3696 = vunpack.c.l.b16 %v3620
      %v3697 = vunpack.c.l.b16 %v3621
      %v3698 = vunpack.c.l.b16 %v3622
      %v3699 = vunpack.c.l.b16 %v3623
      %v3700 = vunpack.c.l.b16 %v3624
      %v3701 = vunpack.c.l.b16 %v3625
      %v3702 = vunpack.c.l.b16 %v3626
      %v3703 = vunpack.c.l.b16 %v3627
      %v3704 = vunpack.c.l.b16 %v3628
      %v3705 = vunpack.c.l.b16 %v3629
      %v3706 = vunpack.c.l.b16 %v3630
      %v3707 = vunpack.c.l.b16 %v3631
      %v3708 = vunpack.c.l.b16 %v3632
      %v3709 = vunpack.c.l.b16 %v3633
      %v3710 = vunpack.c.l.b16 %v3634
      %v3711 = vunpack.c.l.b16 %v3635
      %v3712 = vunpack.c.l.b16 %v3636
      %v3713 = vunpack.c.l.b16 %v3637
      %v3714 = vunpack.c.l.b16 %v3638
      %v3715 = vpack.c.b16 %v3680, %v3679
      %v3716 = vpack.c.b16 %v3682, %v3681
      %v3717 = vpack.c.b16 %v3684, %v3683
      %v3718 = vpack.c.b16 %v3686, %v3685
      %v3719 = vpack.c.b16 %v3688, %v3687
      %v3720 = vpack.c.b16 %v3690, %v3689
      %v3721 = vpack.c.b16 %v3692, %v3691
      %v3722 = vpack.c.b16 %v3694, %v3693
      %v3723 = vpack.c.b16 %v3696, %v3695
      %v3724 = vpack.c.b16 %v3698, %v3697
      %v3725 = vpack.c.b16 %v3700, %v3699
      %v3726 = vpack.c.b16 %v3702, %v3701
      %v3727 = vpack.c.b16 %v3704, %v3703
      %v3728 = vpack.c.b16 %v3706, %v3705
      %v3729 = vpack.c.b16 %v3708, %v3707
      %v3730 = vpack.c.b16 %v3710, %v3709
      %v3731 = vpack.c.b16 %v3712, %v3711
      %v3732 = vpack.c.b16 %v3714, %v3713
      %v3752 = vsel %vm790, %v3542, 0
      %v3755 = vsel %vm790, %v3545, 0
      %v3758 = vsel %vm790, %v3548, 0
      %v3761 = vsel %vm790, %v3551, 0
      %v3764 = vsel %vm790, %v3554, 0
      %v3767 = vsel %vm790, %v3557, 0
      %v3770 = vsel %vm790, %v3560, 0
      %v3773 = vsel %vm790, %v3563, 0
      %v3776 = vsel %vm790, %v3566, 0
      %v3779 = vsel %vm790, %v3569, 0
      %v3782 = vsel %vm790, %v3572, 0
      %v3785 = vsel %vm790, %v3575, 0
      %v3788 = vsel %vm790, %v3578, 0
      %v3791 = vsel %vm790, %v3581, 0
      %v3794 = vsel %vm790, %v3584, 0
      %v3797 = vsel %vm790, %v3587, 0
      %v3800 = vsel %vm790, %v3590, 0
      %v3803 = vsel %vm790, %v3593, 0
      %v3806 = vsel %vm790, %v3596, 0
      %v3809 = vsel %vm790, %v3599, 0
      %v3812 = vsel %vm790, %v3602, 0
      %3814 = vmatpush.bf16.msra.mxu0 %v3722
      %3815 = vmatpush.bf16.msra.mxu0 %v3721
      %3816 = vmatpush.bf16.msra.mxu0 %v3720
      %3817 = vmatpush.bf16.msra.mxu0 %v3719
      %3818 = vmatpush.bf16.msra.mxu0 %v3718
      %3819 = vmatpush.bf16.msra.mxu0 %v3717
      %3820 = vmatpush.bf16.msra.mxu0 %v3716
      %3821 = vmatpush.bf16.msra.mxu0 %v3715
      %3822 = vmatmul.bf16.gmra.mxu0 %v3540
      %v3823 = vpop.f32.mrf.mxu0
      %v3824 = vadd.f32 %v3641, %v3823
      %v3825 = vpop.f32.mrf.mxu0
      %v3826 = vadd.f32 %v3641, %v3825
      %3827 = vmatmul.bf16.gmra.mxu0 %v3543
      %v3828 = vpop.f32.mrf.mxu0
      %v3829 = vadd.f32 %v3641, %v3828
      %v3830 = vpop.f32.mrf.mxu0
      %v3831 = vadd.f32 %v3641, %v3830
      %3832 = vmatmul.bf16.gmra.mxu0 %v3546
      %v3833 = vpop.f32.mrf.mxu0
      %v3834 = vadd.f32 %v3641, %v3833
      %v3835 = vpop.f32.mrf.mxu0
      %v3836 = vadd.f32 %v3641, %v3835
      %3837 = vmatmul.bf16.gmra.mxu0 %v3549
      %v3838 = vpop.f32.mrf.mxu0
      %v3839 = vadd.f32 %v3641, %v3838
      %v3840 = vpop.f32.mrf.mxu0
      %v3841 = vadd.f32 %v3641, %v3840
      %3842 = vmatmul.bf16.gmra.mxu0 %v3552
      %v3843 = vpop.f32.mrf.mxu0
      %v3844 = vadd.f32 %v3641, %v3843
      %v3845 = vpop.f32.mrf.mxu0
      %v3846 = vadd.f32 %v3641, %v3845
      %3847 = vmatmul.bf16.gmra.mxu0 %v3555
      %v3848 = vpop.f32.mrf.mxu0
      %v3849 = vadd.f32 %v3641, %v3848
      %v3850 = vpop.f32.mrf.mxu0
      %v3851 = vadd.f32 %v3641, %v3850
      %3852 = vmatmul.bf16.gmra.mxu0 %v3558
      %v3853 = vpop.f32.mrf.mxu0
      %v3854 = vadd.f32 %v3641, %v3853
      %v3855 = vpop.f32.mrf.mxu0
      %v3856 = vadd.f32 %v3641, %v3855
      %3857 = vmatmul.bf16.gmra.mxu0 %v3561
      %v3858 = vpop.f32.mrf.mxu0
      %v3859 = vadd.f32 %v3641, %v3858
      %v3860 = vpop.f32.mrf.mxu0
      %v3861 = vadd.f32 %v3641, %v3860
      %3862 = vmatmul.bf16.gmra.mxu0 %v3564
      %v3863 = vpop.f32.mrf.mxu0
      %v3864 = vadd.f32 %v3641, %v3863
      %v3865 = vpop.f32.mrf.mxu0
      %v3866 = vadd.f32 %v3641, %v3865
      %3867 = vmatmul.bf16.gmra.mxu0 %v3567
      %v3868 = vpop.f32.mrf.mxu0
      %v3869 = vadd.f32 %v3641, %v3868
      %v3870 = vpop.f32.mrf.mxu0
      %v3871 = vadd.f32 %v3641, %v3870
      %3872 = vmatmul.bf16.gmra.mxu0 %v3570
      %v3873 = vpop.f32.mrf.mxu0
      %v3874 = vadd.f32 %v3641, %v3873
      %v3875 = vpop.f32.mrf.mxu0
      %v3876 = vadd.f32 %v3641, %v3875
      %3877 = vmatmul.bf16.gmra.mxu0 %v3573
      %v3878 = vpop.f32.mrf.mxu0
      %v3879 = vadd.f32 %v3641, %v3878
      %v3880 = vpop.f32.mrf.mxu0
      %v3881 = vadd.f32 %v3641, %v3880
      %3882 = vmatmul.bf16.gmra.mxu0 %v3576
      %v3883 = vpop.f32.mrf.mxu0
      %v3884 = vadd.f32 %v3641, %v3883
      %v3885 = vpop.f32.mrf.mxu0
      %v3886 = vadd.f32 %v3641, %v3885
      %3887 = vmatmul.bf16.gmra.mxu0 %v3579
      %v3888 = vpop.f32.mrf.mxu0
      %v3889 = vadd.f32 %v3641, %v3888
      %v3890 = vpop.f32.mrf.mxu0
      %v3891 = vadd.f32 %v3641, %v3890
      %3892 = vmatmul.bf16.gmra.mxu0 %v3582
      %v3893 = vpop.f32.mrf.mxu0
      %v3894 = vadd.f32 %v3641, %v3893
      %v3895 = vpop.f32.mrf.mxu0
      %v3896 = vadd.f32 %v3641, %v3895
      %3897 = vmatmul.bf16.gmra.mxu0 %v3585
      %v3898 = vpop.f32.mrf.mxu0
      %v3899 = vadd.f32 %v3641, %v3898
      %v3900 = vpop.f32.mrf.mxu0
      %v3901 = vadd.f32 %v3641, %v3900
      %3902 = vmatmul.bf16.gmra.mxu0 %v3588
      %v3903 = vpop.f32.mrf.mxu0
      %v3904 = vadd.f32 %v3641, %v3903
      %v3905 = vpop.f32.mrf.mxu0
      %v3906 = vadd.f32 %v3641, %v3905
      %3907 = vmatmul.bf16.gmra.mxu0 %v3591
      %v3908 = vpop.f32.mrf.mxu0
      %v3909 = vadd.f32 %v3641, %v3908
      %v3910 = vpop.f32.mrf.mxu0
      %v3911 = vadd.f32 %v3641, %v3910
      %3912 = vmatmul.bf16.gmra.mxu0 %v3594
      %v3913 = vpop.f32.mrf.mxu0
      %v3914 = vadd.f32 %v3641, %v3913
      %v3915 = vpop.f32.mrf.mxu0
      %v3916 = vadd.f32 %v3641, %v3915
      %3917 = vmatmul.bf16.gmra.mxu0 %v3597
      %v3918 = vpop.f32.mrf.mxu0
      %v3919 = vadd.f32 %v3641, %v3918
      %v3920 = vpop.f32.mrf.mxu0
      %v3921 = vadd.f32 %v3641, %v3920
      %3922 = vmatmul.bf16.gmra.mxu0 %v3600
      %v3923 = vpop.f32.mrf.mxu0
      %v3924 = vadd.f32 %v3641, %v3923
      %v3925 = vpop.f32.mrf.mxu0
      %3926 = vdwg.mxu0
      %3927 = vmatpush.bf16.msra.mxu0 %v3730
      %3928 = vmatpush.bf16.msra.mxu0 %v3729
      %3929 = vmatpush.bf16.msra.mxu0 %v3728
      %3930 = vmatpush.bf16.msra.mxu0 %v3727
      %3931 = vmatpush.bf16.msra.mxu0 %v3726
      %3932 = vmatpush.bf16.msra.mxu0 %v3725
      %3933 = vmatpush.bf16.msra.mxu0 %v3724
      %3934 = vmatpush.bf16.msra.mxu0 %v3723
      %3935 = vmatmul.bf16.gmra.mxu0 %v3541
      %v3936 = vpop.f32.mrf.mxu0
      %v3937 = vadd.f32 %v3824, %v3936
      %v3938 = vpop.f32.mrf.mxu0
      %v3939 = vadd.f32 %v3826, %v3938
      %3940 = vmatmul.bf16.gmra.mxu0 %v3544
      %v3941 = vpop.f32.mrf.mxu0
      %v3942 = vadd.f32 %v3829, %v3941
      %v3943 = vpop.f32.mrf.mxu0
      %v3944 = vadd.f32 %v3831, %v3943
      %3945 = vmatmul.bf16.gmra.mxu0 %v3547
      %v3946 = vpop.f32.mrf.mxu0
      %v3947 = vadd.f32 %v3834, %v3946
      %v3948 = vpop.f32.mrf.mxu0
      %v3949 = vadd.f32 %v3836, %v3948
      %3950 = vmatmul.bf16.gmra.mxu0 %v3550
      %v3951 = vpop.f32.mrf.mxu0
      %v3952 = vadd.f32 %v3839, %v3951
      %v3953 = vpop.f32.mrf.mxu0
      %v3954 = vadd.f32 %v3841, %v3953
      %3955 = vmatmul.bf16.gmra.mxu0 %v3553
      %v3956 = vpop.f32.mrf.mxu0
      %v3957 = vadd.f32 %v3844, %v3956
      %v3958 = vpop.f32.mrf.mxu0
      %v3959 = vadd.f32 %v3846, %v3958
      %3960 = vmatmul.bf16.gmra.mxu0 %v3556
      %v3961 = vpop.f32.mrf.mxu0
      %v3962 = vadd.f32 %v3849, %v3961
      %v3963 = vpop.f32.mrf.mxu0
      %v3964 = vadd.f32 %v3851, %v3963
      %3965 = vmatmul.bf16.gmra.mxu0 %v3559
      %v3966 = vpop.f32.mrf.mxu0
      %v3967 = vadd.f32 %v3854, %v3966
      %v3968 = vpop.f32.mrf.mxu0
      %v3969 = vadd.f32 %v3856, %v3968
      %3970 = vmatmul.bf16.gmra.mxu0 %v3562
      %v3971 = vpop.f32.mrf.mxu0
      %v3972 = vadd.f32 %v3859, %v3971
      %v3973 = vpop.f32.mrf.mxu0
      %v3974 = vadd.f32 %v3861, %v3973
      %3975 = vmatmul.bf16.gmra.mxu0 %v3565
      %v3976 = vpop.f32.mrf.mxu0
      %v3977 = vadd.f32 %v3864, %v3976
      %v3978 = vpop.f32.mrf.mxu0
      %v3979 = vadd.f32 %v3866, %v3978
      %3980 = vmatmul.bf16.gmra.mxu0 %v3568
      %v3981 = vpop.f32.mrf.mxu0
      %v3982 = vadd.f32 %v3869, %v3981
      %v3983 = vpop.f32.mrf.mxu0
      %v3984 = vadd.f32 %v3871, %v3983
      %3985 = vmatmul.bf16.gmra.mxu0 %v3571
      %v3986 = vpop.f32.mrf.mxu0
      %v3987 = vadd.f32 %v3874, %v3986
      %v3988 = vpop.f32.mrf.mxu0
      %v3989 = vadd.f32 %v3876, %v3988
      %3990 = vmatmul.bf16.gmra.mxu0 %v3574
      %v3991 = vpop.f32.mrf.mxu0
      %v3992 = vadd.f32 %v3879, %v3991
      %v3993 = vpop.f32.mrf.mxu0
      %v3994 = vadd.f32 %v3881, %v3993
      %3995 = vmatmul.bf16.gmra.mxu0 %v3577
      %v3996 = vpop.f32.mrf.mxu0
      %v3997 = vadd.f32 %v3884, %v3996
      %v3998 = vpop.f32.mrf.mxu0
      %v3999 = vadd.f32 %v3886, %v3998
      %4000 = vmatmul.bf16.gmra.mxu0 %v3580
      %v4001 = vpop.f32.mrf.mxu0
      %v4002 = vadd.f32 %v3889, %v4001
      %v4003 = vpop.f32.mrf.mxu0
      %v4004 = vadd.f32 %v3891, %v4003
      %4005 = vmatmul.bf16.gmra.mxu0 %v3583
      %v4006 = vpop.f32.mrf.mxu0
      %v4007 = vadd.f32 %v3894, %v4006
      %v4008 = vpop.f32.mrf.mxu0
      %v4009 = vadd.f32 %v3896, %v4008
      %4010 = vmatmul.bf16.gmra.mxu0 %v3586
      %v4011 = vpop.f32.mrf.mxu0
      %v4012 = vadd.f32 %v3899, %v4011
      %v4013 = vpop.f32.mrf.mxu0
      %v4014 = vadd.f32 %v3901, %v4013
      %4015 = vmatmul.bf16.gmra.mxu0 %v3589
      %v4016 = vpop.f32.mrf.mxu0
      %v4017 = vadd.f32 %v3904, %v4016
      %v4018 = vpop.f32.mrf.mxu0
      %v4019 = vadd.f32 %v3906, %v4018
      %4020 = vmatmul.bf16.gmra.mxu0 %v3592
      %v4021 = vpop.f32.mrf.mxu0
      %v4022 = vadd.f32 %v3909, %v4021
      %v4023 = vpop.f32.mrf.mxu0
      %v4024 = vadd.f32 %v3911, %v4023
      %4025 = vmatmul.bf16.gmra.mxu0 %v3595
      %v4026 = vpop.f32.mrf.mxu0
      %v4027 = vadd.f32 %v3914, %v4026
      %v4028 = vpop.f32.mrf.mxu0
      %v4029 = vadd.f32 %v3916, %v4028
      %4030 = vmatmul.bf16.gmra.mxu0 %v3598
      %v4031 = vpop.f32.mrf.mxu0
      %v4032 = vadd.f32 %v3919, %v4031
      %v4033 = vpop.f32.mrf.mxu0
      %v4034 = vadd.f32 %v3921, %v4033
      %4035 = vmatmul.bf16.gmra.mxu0 %v3601
      %v4036 = vpop.f32.mrf.mxu0
      %v4037 = vadd.f32 %v3924, %v4036
      %v4038 = vpop.f32.mrf.mxu0
      %4039 = vdwg.mxu0
      %4040 = vmatpush.bf16.msra.mxu0 0
      %4041 = vmatpush.bf16.msra.mxu0 0
      %4042 = vmatpush.bf16.msra.mxu0 0
      %4043 = vmatpush.bf16.msra.mxu0 0
      %4044 = vmatpush.bf16.msra.mxu0 0
      %4045 = vmatpush.bf16.msra.mxu0 0
      %4046 = vmatpush.bf16.msra.mxu0 %v3732
      %4047 = vmatpush.bf16.msra.mxu0 %v3731
      %4048 = vmatmul.bf16.gmra.mxu0 %v3752
      %v4049 = vpop.f32.mrf.mxu0
      %v4050 = vadd.f32 %v3937, %v4049
      %v4051 = vpop.f32.mrf.mxu0
      %v4052 = vadd.f32 %v3939, %v4051
      %4053 = vmatmul.bf16.gmra.mxu0 %v3755
      %v4054 = vpop.f32.mrf.mxu0
      %v4055 = vadd.f32 %v3942, %v4054
      %v4056 = vpop.f32.mrf.mxu0
      %v4057 = vadd.f32 %v3944, %v4056
      %4058 = vmatmul.bf16.gmra.mxu0 %v3758
      %v4059 = vpop.f32.mrf.mxu0
      %v4060 = vadd.f32 %v3947, %v4059
      %v4061 = vpop.f32.mrf.mxu0
      %v4062 = vadd.f32 %v3949, %v4061
      %4063 = vmatmul.bf16.gmra.mxu0 %v3761
      %v4064 = vpop.f32.mrf.mxu0
      %v4065 = vadd.f32 %v3952, %v4064
      %v4066 = vpop.f32.mrf.mxu0
      %v4067 = vadd.f32 %v3954, %v4066
      %4068 = vmatmul.bf16.gmra.mxu0 %v3764
      %v4069 = vpop.f32.mrf.mxu0
      %v4070 = vadd.f32 %v3957, %v4069
      %v4071 = vpop.f32.mrf.mxu0
      %v4072 = vadd.f32 %v3959, %v4071
      %4073 = vmatmul.bf16.gmra.mxu0 %v3767
      %v4074 = vpop.f32.mrf.mxu0
      %v4075 = vadd.f32 %v3962, %v4074
      %v4076 = vpop.f32.mrf.mxu0
      %v4077 = vadd.f32 %v3964, %v4076
      %4078 = vmatmul.bf16.gmra.mxu0 %v3770
      %v4079 = vpop.f32.mrf.mxu0
      %v4080 = vadd.f32 %v3967, %v4079
      %v4081 = vpop.f32.mrf.mxu0
      %v4082 = vadd.f32 %v3969, %v4081
      %4083 = vmatmul.bf16.gmra.mxu0 %v3773
      %v4084 = vpop.f32.mrf.mxu0
      %v4085 = vadd.f32 %v3972, %v4084
      %v4086 = vpop.f32.mrf.mxu0
      %v4087 = vadd.f32 %v3974, %v4086
      %4088 = vmatmul.bf16.gmra.mxu0 %v3776
      %v4089 = vpop.f32.mrf.mxu0
      %v4090 = vadd.f32 %v3977, %v4089
      %v4091 = vpop.f32.mrf.mxu0
      %v4092 = vadd.f32 %v3979, %v4091
      %4093 = vmatmul.bf16.gmra.mxu0 %v3779
      %v4094 = vpop.f32.mrf.mxu0
      %v4095 = vadd.f32 %v3982, %v4094
      %v4096 = vpop.f32.mrf.mxu0
      %v4097 = vadd.f32 %v3984, %v4096
      %4098 = vmatmul.bf16.gmra.mxu0 %v3782
      %v4099 = vpop.f32.mrf.mxu0
      %v4100 = vadd.f32 %v3987, %v4099
      %v4101 = vpop.f32.mrf.mxu0
      %v4102 = vadd.f32 %v3989, %v4101
      %4103 = vmatmul.bf16.gmra.mxu0 %v3785
      %v4104 = vpop.f32.mrf.mxu0
      %v4105 = vadd.f32 %v3992, %v4104
      %v4106 = vpop.f32.mrf.mxu0
      %v4107 = vadd.f32 %v3994, %v4106
      %4108 = vmatmul.bf16.gmra.mxu0 %v3788
      %v4109 = vpop.f32.mrf.mxu0
      %v4110 = vadd.f32 %v3997, %v4109
      %v4111 = vpop.f32.mrf.mxu0
      %v4112 = vadd.f32 %v3999, %v4111
      %4113 = vmatmul.bf16.gmra.mxu0 %v3791
      %v4114 = vpop.f32.mrf.mxu0
      %v4115 = vadd.f32 %v4002, %v4114
      %v4116 = vpop.f32.mrf.mxu0
      %v4117 = vadd.f32 %v4004, %v4116
      %4118 = vmatmul.bf16.gmra.mxu0 %v3794
      %v4119 = vpop.f32.mrf.mxu0
      %v4120 = vadd.f32 %v4007, %v4119
      %v4121 = vpop.f32.mrf.mxu0
      %v4122 = vadd.f32 %v4009, %v4121
      %4123 = vmatmul.bf16.gmra.mxu0 %v3797
      %v4124 = vpop.f32.mrf.mxu0
      %v4125 = vadd.f32 %v4012, %v4124
      %v4126 = vpop.f32.mrf.mxu0
      %v4127 = vadd.f32 %v4014, %v4126
      %4128 = vmatmul.bf16.gmra.mxu0 %v3800
      %v4129 = vpop.f32.mrf.mxu0
      %v4130 = vadd.f32 %v4017, %v4129
      %v4131 = vpop.f32.mrf.mxu0
      %v4132 = vadd.f32 %v4019, %v4131
      %4133 = vmatmul.bf16.gmra.mxu0 %v3803
      %v4134 = vpop.f32.mrf.mxu0
      %v4135 = vadd.f32 %v4022, %v4134
      %v4136 = vpop.f32.mrf.mxu0
      %v4137 = vadd.f32 %v4024, %v4136
      %4138 = vmatmul.bf16.gmra.mxu0 %v3806
      %v4139 = vpop.f32.mrf.mxu0
      %v4140 = vadd.f32 %v4027, %v4139
      %v4141 = vpop.f32.mrf.mxu0
      %v4142 = vadd.f32 %v4029, %v4141
      %4143 = vmatmul.bf16.gmra.mxu0 %v3809
      %v4144 = vpop.f32.mrf.mxu0
      %v4145 = vadd.f32 %v4032, %v4144
      %v4146 = vpop.f32.mrf.mxu0
      %v4147 = vadd.f32 %v4034, %v4146
      %4148 = vmatmul.bf16.gmra.mxu0 %v3812
      %v4149 = vpop.f32.mrf.mxu0
      %v4150 = vadd.f32 %v4037, %v4149
      %v4151 = vpop.f32.mrf.mxu0
      %4152 = vdwg.mxu0
      %v4153 = vadd.f32 %v4050, %v253
      %v4154 = vadd.f32 %v4052, %v254
      %v4155 = vadd.f32 %v4055, %v255
      %v4156 = vadd.f32 %v4057, %v256
      %v4157 = vadd.f32 %v4060, %v257
      %v4158 = vadd.f32 %v4062, %v258
      %v4159 = vadd.f32 %v4065, %v259
      %v4160 = vadd.f32 %v4067, %v260
      %v4161 = vadd.f32 %v4070, %v261
      %v4162 = vadd.f32 %v4072, %v262
      %v4163 = vadd.f32 %v4075, %v263
      %v4164 = vadd.f32 %v4077, %v264
      %v4165 = vadd.f32 %v4080, %v265
      %v4166 = vadd.f32 %v4082, %v266
      %v4167 = vadd.f32 %v4085, %v267
      %v4168 = vadd.f32 %v4087, %v268
      %v4169 = vadd.f32 %v4090, %v269
      %v4170 = vadd.f32 %v4092, %v270
      %v4171 = vadd.f32 %v4095, %v271
      %v4172 = vadd.f32 %v4097, %v272
      %v4173 = vadd.f32 %v4100, %v273
      %v4174 = vadd.f32 %v4102, %v274
      %v4175 = vadd.f32 %v4105, %v275
      %v4176 = vadd.f32 %v4107, %v276
      %v4177 = vadd.f32 %v4110, %v277
      %v4178 = vadd.f32 %v4112, %v278
      %v4179 = vadd.f32 %v4115, %v279
      %v4180 = vadd.f32 %v4117, %v280
      %v4181 = vadd.f32 %v4120, %v281
      %v4182 = vadd.f32 %v4122, %v282
      %v4183 = vadd.f32 %v4125, %v283
      %v4184 = vadd.f32 %v4127, %v284
      %v4185 = vadd.f32 %v4130, %v285
      %v4186 = vadd.f32 %v4132, %v286
      %v4187 = vadd.f32 %v4135, %v287
      %v4188 = vadd.f32 %v4137, %v288
      %v4189 = vadd.f32 %v4140, %v289
      %v4190 = vadd.f32 %v4142, %v290
      %v4191 = vadd.f32 %v4145, %v291
      %v4192 = vadd.f32 %v4147, %v292
      %v4193 = vadd.f32 %v4150, %v293
      %4194 = vst.msk [vmem:[%s251] sm:$0xff] %vm790, %v4153
      %4195 = vst.msk [vmem:[%s251 + $0x8] sm:$0xff] %vm790, %v4154
      %4196 = vst.msk [vmem:[%s251 + $0x10] sm:$0xff] %vm790, %v4155
      %4197 = vst.msk [vmem:[%s251 + $0x18] sm:$0xff] %vm790, %v4156
      %4198 = vst.msk [vmem:[%s251 + $0x20] sm:$0xff] %vm790, %v4157
      %4199 = vst.msk [vmem:[%s251 + $0x28] sm:$0xff] %vm790, %v4158
      %4200 = vst.msk [vmem:[%s251 + $0x30] sm:$0xff] %vm790, %v4159
      %4201 = vst.msk [vmem:[%s251 + $0x38] sm:$0xff] %vm790, %v4160
      %4202 = vst.msk [vmem:[%s251 + $0x40] sm:$0xff] %vm790, %v4161
      %4203 = vst.msk [vmem:[%s251 + $0x48] sm:$0xff] %vm790, %v4162
      %4204 = vst.msk [vmem:[%s251 + $0x50] sm:$0xff] %vm790, %v4163
      %4205 = vst.msk [vmem:[%s251 + $0x58] sm:$0xff] %vm790, %v4164
      %4206 = vst.msk [vmem:[%s251 + $0x60] sm:$0xff] %vm790, %v4165
      %4207 = vst.msk [vmem:[%s251 + $0x68] sm:$0xff] %vm790, %v4166
      %4208 = vst.msk [vmem:[%s251 + $0x70] sm:$0xff] %vm790, %v4167
      %4209 = vst.msk [vmem:[%s251 + $0x78] sm:$0xff] %vm790, %v4168
      %4210 = vst.msk [vmem:[%s251 + $0x80] sm:$0xff] %vm790, %v4169
      %4211 = vst.msk [vmem:[%s251 + $0x88] sm:$0xff] %vm790, %v4170
      %4212 = vst.msk [vmem:[%s251 + $0x90] sm:$0xff] %vm790, %v4171
      %4213 = vst.msk [vmem:[%s251 + $0x98] sm:$0xff] %vm790, %v4172
      %4214 = vst.msk [vmem:[%s251 + $0xa0] sm:$0xff] %vm790, %v4173
      %4215 = vst.msk [vmem:[%s251 + $0xa8] sm:$0xff] %vm790, %v4174
      %4216 = vst.msk [vmem:[%s251 + $0xb0] sm:$0xff] %vm790, %v4175
      %4217 = vst.msk [vmem:[%s251 + $0xb8] sm:$0xff] %vm790, %v4176
      %4218 = vst.msk [vmem:[%s251 + $0xc0] sm:$0xff] %vm790, %v4177
      %4219 = vst.msk [vmem:[%s251 + $0xc8] sm:$0xff] %vm790, %v4178
      %4220 = vst.msk [vmem:[%s251 + $0xd0] sm:$0xff] %vm790, %v4179
      %4221 = vst.msk [vmem:[%s251 + $0xd8] sm:$0xff] %vm790, %v4180
      %4222 = vst.msk [vmem:[%s251 + $0xe0] sm:$0xff] %vm790, %v4181
      %4223 = vst.msk [vmem:[%s251 + $0xe8] sm:$0xff] %vm790, %v4182
      %4224 = vst.msk [vmem:[%s251 + $0xf0] sm:$0xff] %vm790, %v4183
      %4225 = vst.msk [vmem:[%s251 + $0xf8] sm:$0xff] %vm790, %v4184
      %4226 = vst.msk [vmem:[%s251 + $0x100] sm:$0xff] %vm790, %v4185
      %4227 = vst.msk [vmem:[%s251 + $0x108] sm:$0xff] %vm790, %v4186
      %4228 = vst.msk [vmem:[%s251 + $0x110] sm:$0xff] %vm790, %v4187
      %4229 = vst.msk [vmem:[%s251 + $0x118] sm:$0xff] %vm790, %v4188
      %4230 = vst.msk [vmem:[%s251 + $0x120] sm:$0xff] %vm790, %v4189
      %4231 = vst.msk [vmem:[%s251 + $0x128] sm:$0xff] %vm790, %v4190
      %4232 = vst.msk [vmem:[%s251 + $0x130] sm:$0xff] %vm790, %v4191
      %4233 = vst.msk [vmem:[%s251 + $0x138] sm:$0xff] %vm790, %v4192
      %4234 = vst.msk [vmem:[%s251 + $0x140] sm:$0xff] %vm790, %v4193
      %p4235 = scmp.lt.s32.totalorder %s17, 1
      %s4236 = scalar_select %p4235, %s17, 1
      %s4237 = smul.addr %s4236, 41
      %s4238 = smul.addr %s4237, 8
      %s4239 = scalar_lea.vmem %s6, %s4238
      // Predicated region
      $region45: #{enhancement_block_nhwc.1} parent=43 // pred_check
        %p4240 = pneg %p166
      $region46: #{enhancement_block_nhwc.1} parent=43 // pred_check_branch
        %4242 = sbr.rel (%p4240) target = $region48
      $region47: #{enhancement_block_nhwc.1} parent=43 // pred_region
        _
      $region48: #{enhancement_block_nhwc.1} parent=43 // pred_fallthru
        _
    $region44: #{enhancement_block_nhwc.1} parent=5 // pred_fallthru
      _
    %p4243 = scmp.le.s32.totalorder 2, %s12
    // Predicated region
    $region49: #{enhancement_block_nhwc.1} parent=5 // pred_check
      %p4244 = pneg %p4243
    $region50: #{enhancement_block_nhwc.1} parent=5 // pred_check_branch
      %4246 = sbr.rel (%p4244) target = $region52
    $region51: #{enhancement_block_nhwc.1} parent=5 // pred_region
      %s4247 = ssub.s32 %s12, 2
      // Predicated region
      $region53: #{enhancement_block_nhwc.1} parent=51 // pred_check
        %p4248 = pneg %p172
      $region54: #{enhancement_block_nhwc.1} parent=51 // pred_check_branch
        %4250 = sbr.rel (%p4248) target = $region56
      $region55: #{enhancement_block_nhwc.1} parent=51 // pred_region
        %p4251 = scmp.lt.s32.totalorder %s18, 1
        %s4252 = scalar_select %p4251, %s18, 1
        %s4253 = smul.addr %s4252, 41
        %s4254 = smul.addr %s4253, 8
        %s4255 = scalar_lea.vmem %s6, %s4254
      $region56: #{enhancement_block_nhwc.1} parent=51 // pred_fallthru
        _
    $region52: #{enhancement_block_nhwc.1} parent=5 // pred_fallthru
      _
  $region6: #{enhancement_block_nhwc.1} parent=0 // loop_footer
    %s16 = sadd.s32 1, %s12
  $region7: #{enhancement_block_nhwc.1} parent=0 // loop_footer_branch
    %11 = sbr.rel target = $region3
  $region8: #{enhancement_block_nhwc.1} parent=0 // loop_exit
    _

</llo_original>
